<compile_context>
chip_gen: v7x
topology: tpu7x:2x2x1
jax: 0.10.0
libtpu: 0.0.40
codegen_flags: <defaults>
</compile_context>

<pallas_src>
import numpy as np
import jax
import jax.numpy as jnp
from jax.experimental import pallas as pl
from jax.experimental.pallas import tpu as pltpu

_VMEM_LIMIT_BYTES = 48 * 1024 * 1024   # > default scoped limit on v5e/v6e/v7x, < v7x 64 MiB physical
_TILE_BUDGET_BYTES = 16 * 1024 * 1024  # budget for double-buffered activation tiles per call


# ------------------------------ Pallas kernel ------------------------------ #
def _make_bn_relu_proj_kernel(num_branches):
    """out = sum_b  W_b @ relu(x_b * scale_b + shift_b)      (channels-first).

    refs layout: [x_0..x_{B-1}, scale_0.., shift_0.., w_0.., out]
      x_b     : (1, C_b, TM)  activation tile (channels on sublanes, pixels on lanes)
      scale_b : (C_b, 1)      folded BN scale  (f32)
      shift_b : (C_b, 1)      folded BN shift  (f32)
      w_b     : (Cout, C_b)   1x1-conv weight  (bf16)
      out     : (1, Cout, TM) lane-dense output tile (f32)
    """
    def kernel(*refs):
        xs      = refs[0 * num_branches: 1 * num_branches]
        scales  = refs[1 * num_branches: 2 * num_branches]
        shifts  = refs[2 * num_branches: 3 * num_branches]
        ws      = refs[3 * num_branches: 4 * num_branches]
        out_ref = refs[4 * num_branches]

        acc = jnp.zeros(out_ref.shape[1:], jnp.float32)
        for b in range(num_branches):
            x = xs[b][0].astype(jnp.float32)                           # (C_b, TM)
            h = jnp.maximum(x * scales[b][...] + shifts[b][...], 0.0)  # BN(eval)+ReLU, f32 on VPU
            w = ws[b][...]                                             # (Cout, C_b) bf16
            cin = w.shape[1]
            if cin <= 8:
                # Tiny-K projection (spp_bn, Cin=4): keep it off the MXU,
                # do it as outer-product FMAs on the VPU.
                for k in range(cin):
                    acc = acc + w[:, k:k + 1].astype(jnp.float32) * h[k:k + 1, :]
            else:
                # bf16 MXU matmul, f32 accumulation.
                acc = acc + jnp.dot(w, h.astype(jnp.bfloat16),
                                    preferred_element_type=jnp.float32)
        out_ref[0] = acc.astype(out_ref.dtype)

    return kernel


def _choose_tile(s, cin_total, cout):
    """Largest multiple-of-128 divisor of `s` whose double-buffered tiles fit the
    VMEM budget; falls back to the whole row when no such divisor exists
    (only happens for the tiny pooled grids)."""
    per_col = 4 * 2 * (cin_total + cout)           # f32 bytes per pixel column, x2 double buffering
    cap = max(128, _TILE_BUDGET_BYTES // per_col)
    t = (cap // 128) * 128
    while t >= 128:
        if s % t == 0:
            return t
        t -= 128
    return s


def bn_relu_conv1x1(xs, branch_params):
    """Fused BN(eval)+ReLU+1x1conv over the *virtual* channel-concat of `xs`.

    xs            : list of (N, C_b, S) float32 arrays (same N, S).
    branch_params : list of (scale (C_b,1) f32, shift (C_b,1) f32, w (Cout, C_b) bf16).
    Returns (N, Cout, S) float32.
    """
    n, _, s = xs[0].shape
    cout = branch_params[0][2].shape[0]
    tm = _choose_tile(s, sum(x.shape[1] for x in xs), cout)
    num_tiles = s // tm    # tm always divides s -> no padding, no out[:M] slice

    in_specs = []
    for x in xs:                       # activations, tiled over (N, pixels)
        in_specs.append(pl.BlockSpec((1, x.shape[1], tm), lambda i, t: (i, 0, t)))
    for p in branch_params:            # BN scales (full, resident)
        in_specs.append(pl.BlockSpec(p[0].shape, lambda i, t: (0, 0)))
    for p in branch_params:            # BN shifts
        in_specs.append(pl.BlockSpec(p[1].shape, lambda i, t: (0, 0)))
    for p in branch_params:            # conv weights
        in_specs.append(pl.BlockSpec(p[2].shape, lambda i, t: (0, 0)))

    args = (list(xs)
            + [p[0] for p in branch_params]
            + [p[1] for p in branch_params]
            + [p[2] for p in branch_params])

    return pl.pallas_call(
        _make_bn_relu_proj_kernel(len(xs)),
        out_shape=jax.ShapeDtypeStruct((n, cout, s), jnp.float32),
        grid=(n, num_tiles),
        in_specs=in_specs,
        out_specs=pl.BlockSpec((1, cout, tm), lambda i, t: (i, 0, t)),
        compiler_params=pltpu.CompilerParams(
            dimension_semantics=("parallel", "parallel"),
            vmem_limit_bytes=_VMEM_LIMIT_BYTES),
    )(*args)


# ------------------------- pooling / upsample glue ------------------------- #
def adaptive_pool_matrix(in_size, out_size):
    """(out_size, in_size) matrix reproducing F.adaptive_avg_pool2d window rule."""
    P = np.zeros((out_size, in_size), np.float32)
    for i in range(out_size):
        start = (i * in_size) // out_size
        end = -(-((i + 1) * in_size) // out_size)  # ceil
        P[i, start:end] = 1.0 / (end - start)
    return jnp.asarray(P)


def bilinear_upsample_matrix(out_size, in_size):
    """(out_size, in_size) matrix reproducing bilinear upsample, align_corners=False."""
    U = np.zeros((out_size, in_size), np.float32)
    scale = in_size / out_size
    for o in range(out_size):
        src = (o + 0.5) * scale - 0.5
        src = max(src, 0.0)
        i0 = min(int(np.floor(src)), in_size - 1)
        i1 = min(i0 + 1, in_size - 1)
        l1 = src - i0
        U[o, i0] += 1.0 - l1
        U[o, i1] += l1
    return jnp.asarray(U)


# --------------------------- parameter creation ---------------------------- #
def make_block_params(key, cin, cout, eps=1e-5):
    """Synthetic params for one _BNReluConv(k=1): BN eval stats folded into
    (scale, shift), conv weight stored transposed as (cout, cin) in bf16."""
    k1, k2, k3, k4, k5 = jax.random.split(key, 5)
    gamma = jax.random.uniform(k1, (cin,), jnp.float32, 0.5, 1.5)
    beta = 0.1 * jax.random.normal(k2, (cin,), jnp.float32)
    mean = 0.1 * jax.random.normal(k3, (cin,), jnp.float32)
    var = jax.random.uniform(k4, (cin,), jnp.float32, 0.5, 1.5)
    w = jax.random.normal(k5, (cout, cin), jnp.float32) / np.sqrt(cin)  # = conv.weight[:, :, 0, 0]
    scale = gamma / jnp.sqrt(var + eps)
    shift = beta - mean * scale
    return scale.reshape(cin, 1), shift.reshape(cin, 1), w.astype(jnp.bfloat16)


# ------------------------------ forward pass ------------------------------- #
def spatial_pyramid_pooling(x_nchw, params, grids=(6, 3, 2, 1), square_grid=False):
    N, C, H, W = x_nchw.shape
    HW = H * W
    ar = W / H

    x = x_nchw.reshape(N, C, HW)                        # NCHW, spatially flattened (no transpose)
    x = bn_relu_conv1x1([x], [params["bn"]])            # spp_bn  -> (N, bt, HW)
    bt = x.shape[1]
    x4d = x.reshape(N, bt, H, W)

    branches = [x]
    for i, lp in enumerate(params["levels"]):
        g = grids[i]
        if square_grid:
            gh, gw = g, g
        else:
            gh, gw = g, max(1, round(ar * g))           # same round() rule as the PyTorch module
        Ph = adaptive_pool_matrix(H, gh)
        Pw = adaptive_pool_matrix(W, gw)
        pooled = jnp.einsum("ah,bw,nchw->ncab", Ph, Pw, x4d)         # adaptive avg pool (tiny)
        lev = bn_relu_conv1x1([pooled.reshape(N, bt, gh * gw)], [lp])  # spp{i}
        cl = lev.shape[1]
        Uh = bilinear_upsample_matrix(H, gh)
        Uw = bilinear_upsample_matrix(W, gw)
        up = jnp.einsum("ha,wb,ncab->nchw", Uh, Uw, lev.reshape(N, cl, gh, gw))  # bilinear upsample
        branches.append(up.reshape(N, cl, HW))

    # spp_fuse: BN->ReLU->1x1 conv over the virtual concat of the branches,
    # computed as a sum of per-branch contributions inside ONE pallas_call so
    # the (N, 160, H, W) cat tensor is never materialized.
    f_scale, f_shift, f_w = params["fuse"]
    cs = [b.shape[1] for b in branches]
    offs = np.concatenate([[0], np.cumsum(cs)]).astype(int)
    fuse_params = [(f_scale[offs[i]:offs[i + 1]],
                    f_shift[offs[i]:offs[i + 1]],
                    f_w[:, offs[i]:offs[i + 1]]) for i in range(len(branches))]
    out = bn_relu_conv1x1(branches, fuse_params)         # (N, out_size, HW), lane-dense stores
    return out.reshape(N, f_w.shape[0], H, W)            # already NCHW


if __name__ == "__main__":
    # Small, module-consistent sizes.
    num_maps_in, bt_size, level_size, out_size = 4, 64, 32, 32
    num_levels = 3
    grids = (6, 3, 2, 1)

    key = jax.random.PRNGKey(0)
    keys = jax.random.split(key, num_levels + 3)
    final_size = bt_size + num_levels * level_size
    params = {
        "bn": make_block_params(keys[0], num_maps_in, bt_size),
        "levels": [make_block_params(keys[1 + i], bt_size, level_size)
                   for i in range(num_levels)],
        "fuse": make_block_params(keys[1 + num_levels], final_size, out_size),
    }

    x = jax.random.normal(keys[-1], (2, num_maps_in, 16, 16), jnp.float32)

    fwd = jax.jit(spatial_pyramid_pooling, static_argnames=("grids", "square_grid"))
    out = fwd(x, params, grids=grids)
    out = jax.block_until_ready(out)

    assert out.shape == (2, out_size, 16, 16), out.shape
    assert jnp.isfinite(out).all()
    print("KERNEL_OK")
</pallas_src>

<mosaic_0001>
module attributes {stable_mosaic.version = 11 : i64} {
  func.func @kernel(%arg0: i32, %arg1: i32, %arg2: memref<1x4x256xf32, #tpu.memory_space<vmem>>, %arg3: memref<4x1xf32, #tpu.memory_space<vmem>>, %arg4: memref<4x1xf32, #tpu.memory_space<vmem>>, %arg5: memref<64x4xbf16, #tpu.memory_space<vmem>>, %arg6: memref<1x64x256xf32, #tpu.memory_space<vmem>>) attributes {dimension_semantics = [#tpu.dimension_semantics<parallel>, #tpu.dimension_semantics<parallel>], iteration_bounds = array<i64: 2, 1>, scalar_prefetch = 0 : i64, scratch_operands = 0 : i64, tpu.core_type = #tpu.core_type<tc>, window_params = [{transform_indices = @transform_0, window_bounds = array<i64: 1, 4, 256>}, {pipeline_mode = #tpu.pipeline_mode<synchronous>, transform_indices = @transform_1, window_bounds = array<i64: 4, 1>}, {pipeline_mode = #tpu.pipeline_mode<synchronous>, transform_indices = @transform_2, window_bounds = array<i64: 4, 1>}, {pipeline_mode = #tpu.pipeline_mode<synchronous>, transform_indices = @transform_3, window_bounds = array<i64: 64, 4>}, {transform_indices = @transform_4, window_bounds = array<i64: 1, 64, 256>}]} {
    %cst = arith.constant 0.000000e+00 : f32
    %0 = vector.broadcast %cst : f32 to vector<64x256xf32>
    %c0 = arith.constant 0 : index
    %c0_0 = arith.constant 0 : index
    %c0_1 = arith.constant 0 : index
    %1 = vector.load %arg2[%c0, %c0_0, %c0_1] : memref<1x4x256xf32, #tpu.memory_space<vmem>>, vector<1x4x256xf32>
    %2 = vector.shape_cast %1 : vector<1x4x256xf32> to vector<4x256xf32>
    %c0_2 = arith.constant 0 : index
    %c0_3 = arith.constant 0 : index
    %3 = vector.load %arg3[%c0_2, %c0_3] : memref<4x1xf32, #tpu.memory_space<vmem>>, vector<4x1xf32>
    %4 = vector.broadcast %3 : vector<4x1xf32> to vector<4x256xf32>
    %5 = arith.mulf %2, %4 : vector<4x256xf32>
    %c0_4 = arith.constant 0 : index
    %c0_5 = arith.constant 0 : index
    %6 = vector.load %arg4[%c0_4, %c0_5] : memref<4x1xf32, #tpu.memory_space<vmem>>, vector<4x1xf32>
    %7 = vector.broadcast %6 : vector<4x1xf32> to vector<4x256xf32>
    %8 = arith.addf %5, %7 : vector<4x256xf32>
    %cst_6 = arith.constant 0.000000e+00 : f32
    %9 = vector.broadcast %cst_6 : f32 to vector<4x256xf32>
    %10 = arith.maximumf %8, %9 : vector<4x256xf32>
    %c0_7 = arith.constant 0 : index
    %c0_8 = arith.constant 0 : index
    %11 = vector.load %arg5[%c0_7, %c0_8] : memref<64x4xbf16, #tpu.memory_space<vmem>>, vector<64x4xbf16>
    %12 = vector.extract_strided_slice %11 {offsets = [0, 0], sizes = [64, 1], strides = [1, 1]} : vector<64x4xbf16> to vector<64x1xbf16>
    %13 = arith.extf %12 : vector<64x1xbf16> to vector<64x1xf32>
    %14 = vector.extract_strided_slice %10 {offsets = [0, 0], sizes = [1, 256], strides = [1, 1]} : vector<4x256xf32> to vector<1x256xf32>
    %15 = vector.broadcast %13 : vector<64x1xf32> to vector<64x256xf32>
    %16 = vector.broadcast %14 : vector<1x256xf32> to vector<64x256xf32>
    %17 = arith.mulf %15, %16 : vector<64x256xf32>
    %18 = arith.addf %0, %17 : vector<64x256xf32>
    %19 = vector.extract_strided_slice %11 {offsets = [0, 1], sizes = [64, 1], strides = [1, 1]} : vector<64x4xbf16> to vector<64x1xbf16>
    %20 = arith.extf %19 : vector<64x1xbf16> to vector<64x1xf32>
    %21 = vector.extract_strided_slice %10 {offsets = [1, 0], sizes = [1, 256], strides = [1, 1]} : vector<4x256xf32> to vector<1x256xf32>
    %22 = vector.broadcast %20 : vector<64x1xf32> to vector<64x256xf32>
    %23 = vector.broadcast %21 : vector<1x256xf32> to vector<64x256xf32>
    %24 = arith.mulf %22, %23 : vector<64x256xf32>
    %25 = arith.addf %18, %24 : vector<64x256xf32>
    %26 = vector.extract_strided_slice %11 {offsets = [0, 2], sizes = [64, 1], strides = [1, 1]} : vector<64x4xbf16> to vector<64x1xbf16>
    %27 = arith.extf %26 : vector<64x1xbf16> to vector<64x1xf32>
    %28 = vector.extract_strided_slice %10 {offsets = [2, 0], sizes = [1, 256], strides = [1, 1]} : vector<4x256xf32> to vector<1x256xf32>
    %29 = vector.broadcast %27 : vector<64x1xf32> to vector<64x256xf32>
    %30 = vector.broadcast %28 : vector<1x256xf32> to vector<64x256xf32>
    %31 = arith.mulf %29, %30 : vector<64x256xf32>
    %32 = arith.addf %25, %31 : vector<64x256xf32>
    %33 = vector.extract_strided_slice %11 {offsets = [0, 3], sizes = [64, 1], strides = [1, 1]} : vector<64x4xbf16> to vector<64x1xbf16>
    %34 = arith.extf %33 : vector<64x1xbf16> to vector<64x1xf32>
    %35 = vector.extract_strided_slice %10 {offsets = [3, 0], sizes = [1, 256], strides = [1, 1]} : vector<4x256xf32> to vector<1x256xf32>
    %36 = vector.broadcast %34 : vector<64x1xf32> to vector<64x256xf32>
    %37 = vector.broadcast %35 : vector<1x256xf32> to vector<64x256xf32>
    %38 = arith.mulf %36, %37 : vector<64x256xf32>
    %39 = arith.addf %32, %38 : vector<64x256xf32>
    %c0_9 = arith.constant 0 : index
    %c0_10 = arith.constant 0 : index
    %c0_11 = arith.constant 0 : index
    %40 = vector.load %arg6[%c0_9, %c0_10, %c0_11] : memref<1x64x256xf32, #tpu.memory_space<vmem>>, vector<1x64x256xf32>
    %41 = vector.shape_cast %40 : vector<1x64x256xf32> to vector<64x256xf32>
    %42 = vector.shape_cast %39 : vector<64x256xf32> to vector<1x64x256xf32>
    tpu.vector_store %arg6[%c0_9, %c0_10, %c0_11], %42 {strides = array<i32>} : memref<1x64x256xf32, #tpu.memory_space<vmem>>, vector<1x64x256xf32>,
    return
  }
  func.func @transform_0(%arg0: i32, %arg1: i32) -> (i32, i32, i32) {
    %c0_i32 = arith.constant 0 : i32
    %c0_i32_0 = arith.constant 0 : i32
    return %arg0, %c0_i32, %arg1 : i32, i32, i32
  }
  func.func @transform_1(%arg0: i32, %arg1: i32) -> (i32, i32) {
    %c0_i32 = arith.constant 0 : i32
    %c0_i32_0 = arith.constant 0 : i32
    %c0_i32_1 = arith.constant 0 : i32
    return %c0_i32, %c0_i32_0 : i32, i32
  }
  func.func @transform_2(%arg0: i32, %arg1: i32) -> (i32, i32) {
    %c0_i32 = arith.constant 0 : i32
    %c0_i32_0 = arith.constant 0 : i32
    %c0_i32_1 = arith.constant 0 : i32
    return %c0_i32, %c0_i32_0 : i32, i32
  }
  func.func @transform_3(%arg0: i32, %arg1: i32) -> (i32, i32) {
    %c0_i32 = arith.constant 0 : i32
    %c0_i32_0 = arith.constant 0 : i32
    %c0_i32_1 = arith.constant 0 : i32
    return %c0_i32, %c0_i32_0 : i32, i32
  }
  func.func @transform_4(%arg0: i32, %arg1: i32) -> (i32, i32, i32) {
    %c0_i32 = arith.constant 0 : i32
    %c0_i32_0 = arith.constant 0 : i32
    return %arg0, %c0_i32, %arg1 : i32, i32, i32
  }
}

module attributes {stable_mosaic.version = 11 : i64} {
  func.func @kernel(%arg0: i32, %arg1: i32, %arg2: memref<1x64x36xf32, #tpu.memory_space<vmem>>, %arg3: memref<64x1xf32, #tpu.memory_space<vmem>>, %arg4: memref<64x1xf32, #tpu.memory_space<vmem>>, %arg5: memref<32x64xbf16, #tpu.memory_space<vmem>>, %arg6: memref<1x32x36xf32, #tpu.memory_space<vmem>>) attributes {dimension_semantics = [#tpu.dimension_semantics<parallel>, #tpu.dimension_semantics<parallel>], iteration_bounds = array<i64: 2, 1>, scalar_prefetch = 0 : i64, scratch_operands = 0 : i64, tpu.core_type = #tpu.core_type<tc>, window_params = [{transform_indices = @transform_0, window_bounds = array<i64: 1, 64, 36>}, {pipeline_mode = #tpu.pipeline_mode<synchronous>, transform_indices = @transform_1, window_bounds = array<i64: 64, 1>}, {pipeline_mode = #tpu.pipeline_mode<synchronous>, transform_indices = @transform_2, window_bounds = array<i64: 64, 1>}, {pipeline_mode = #tpu.pipeline_mode<synchronous>, transform_indices = @transform_3, window_bounds = array<i64: 32, 64>}, {transform_indices = @transform_4, window_bounds = array<i64: 1, 32, 36>}]} {
    %cst = arith.constant 0.000000e+00 : f32
    %0 = vector.broadcast %cst : f32 to vector<32x36xf32>
    %c0 = arith.constant 0 : index
    %c0_0 = arith.constant 0 : index
    %c0_1 = arith.constant 0 : index
    %1 = vector.load %arg2[%c0, %c0_0, %c0_1] : memref<1x64x36xf32, #tpu.memory_space<vmem>>, vector<1x64x36xf32>
    %2 = vector.shape_cast %1 : vector<1x64x36xf32> to vector<64x36xf32>
    %c0_2 = arith.constant 0 : index
    %c0_3 = arith.constant 0 : index
    %3 = vector.load %arg3[%c0_2, %c0_3] : memref<64x1xf32, #tpu.memory_space<vmem>>, vector<64x1xf32>
    %4 = vector.broadcast %3 : vector<64x1xf32> to vector<64x36xf32>
    %5 = arith.mulf %2, %4 : vector<64x36xf32>
    %c0_4 = arith.constant 0 : index
    %c0_5 = arith.constant 0 : index
    %6 = vector.load %arg4[%c0_4, %c0_5] : memref<64x1xf32, #tpu.memory_space<vmem>>, vector<64x1xf32>
    %7 = vector.broadcast %6 : vector<64x1xf32> to vector<64x36xf32>
    %8 = arith.addf %5, %7 : vector<64x36xf32>
    %cst_6 = arith.constant 0.000000e+00 : f32
    %9 = vector.broadcast %cst_6 : f32 to vector<64x36xf32>
    %10 = arith.maximumf %8, %9 : vector<64x36xf32>
    %c0_7 = arith.constant 0 : index
    %c0_8 = arith.constant 0 : index
    %11 = vector.load %arg5[%c0_7, %c0_8] : memref<32x64xbf16, #tpu.memory_space<vmem>>, vector<32x64xbf16>
    %12 = arith.truncf %10 : vector<64x36xf32> to vector<64x36xbf16>
    %cst_9 = arith.constant dense<0.000000e+00> : vector<32x36xf32>
    %13 = tpu.matmul %11, %12, %cst_9 {dimension_numbers = #tpu.dot_dimension_numbers<[1], [0], [0], [1], [0, 0, 1, 1], [], []>} : vector<32x64xbf16>, vector<64x36xbf16>, vector<32x36xf32> -> vector<32x36xf32>
    %14 = arith.addf %0, %13 : vector<32x36xf32>
    %c0_10 = arith.constant 0 : index
    %c0_11 = arith.constant 0 : index
    %c0_12 = arith.constant 0 : index
    %15 = vector.load %arg6[%c0_10, %c0_11, %c0_12] : memref<1x32x36xf32, #tpu.memory_space<vmem>>, vector<1x32x36xf32>
    %16 = vector.shape_cast %15 : vector<1x32x36xf32> to vector<32x36xf32>
    %17 = vector.shape_cast %14 : vector<32x36xf32> to vector<1x32x36xf32>
    tpu.vector_store %arg6[%c0_10, %c0_11, %c0_12], %17 {strides = array<i32>} : memref<1x32x36xf32, #tpu.memory_space<vmem>>, vector<1x32x36xf32>,
    return
  }
  func.func @transform_0(%arg0: i32, %arg1: i32) -> (i32, i32, i32) {
    %c0_i32 = arith.constant 0 : i32
    %c0_i32_0 = arith.constant 0 : i32
    return %arg0, %c0_i32, %arg1 : i32, i32, i32
  }
  func.func @transform_1(%arg0: i32, %arg1: i32) -> (i32, i32) {
    %c0_i32 = arith.constant 0 : i32
    %c0_i32_0 = arith.constant 0 : i32
    %c0_i32_1 = arith.constant 0 : i32
    return %c0_i32, %c0_i32_0 : i32, i32
  }
  func.func @transform_2(%arg0: i32, %arg1: i32) -> (i32, i32) {
    %c0_i32 = arith.constant 0 : i32
    %c0_i32_0 = arith.constant 0 : i32
    %c0_i32_1 = arith.constant 0 : i32
    return %c0_i32, %c0_i32_0 : i32, i32
  }
  func.func @transform_3(%arg0: i32, %arg1: i32) -> (i32, i32) {
    %c0_i32 = arith.constant 0 : i32
    %c0_i32_0 = arith.constant 0 : i32
    %c0_i32_1 = arith.constant 0 : i32
    return %c0_i32, %c0_i32_0 : i32, i32
  }
  func.func @transform_4(%arg0: i32, %arg1: i32) -> (i32, i32, i32) {
    %c0_i32 = arith.constant 0 : i32
    %c0_i32_0 = arith.constant 0 : i32
    return %arg0, %c0_i32, %arg1 : i32, i32, i32
  }
}

module attributes {stable_mosaic.version = 11 : i64} {
  func.func @kernel(%arg0: i32, %arg1: i32, %arg2: memref<1x64x9xf32, #tpu.memory_space<vmem>>, %arg3: memref<64x1xf32, #tpu.memory_space<vmem>>, %arg4: memref<64x1xf32, #tpu.memory_space<vmem>>, %arg5: memref<32x64xbf16, #tpu.memory_space<vmem>>, %arg6: memref<1x32x9xf32, #tpu.memory_space<vmem>>) attributes {dimension_semantics = [#tpu.dimension_semantics<parallel>, #tpu.dimension_semantics<parallel>], iteration_bounds = array<i64: 2, 1>, scalar_prefetch = 0 : i64, scratch_operands = 0 : i64, tpu.core_type = #tpu.core_type<tc>, window_params = [{transform_indices = @transform_0, window_bounds = array<i64: 1, 64, 9>}, {pipeline_mode = #tpu.pipeline_mode<synchronous>, transform_indices = @transform_1, window_bounds = array<i64: 64, 1>}, {pipeline_mode = #tpu.pipeline_mode<synchronous>, transform_indices = @transform_2, window_bounds = array<i64: 64, 1>}, {pipeline_mode = #tpu.pipeline_mode<synchronous>, transform_indices = @transform_3, window_bounds = array<i64: 32, 64>}, {transform_indices = @transform_4, window_bounds = array<i64: 1, 32, 9>}]} {
    %cst = arith.constant 0.000000e+00 : f32
    %0 = vector.broadcast %cst : f32 to vector<32x9xf32>
    %c0 = arith.constant 0 : index
    %c0_0 = arith.constant 0 : index
    %c0_1 = arith.constant 0 : index
    %1 = vector.load %arg2[%c0, %c0_0, %c0_1] : memref<1x64x9xf32, #tpu.memory_space<vmem>>, vector<1x64x9xf32>
    %2 = vector.shape_cast %1 : vector<1x64x9xf32> to vector<64x9xf32>
    %c0_2 = arith.constant 0 : index
    %c0_3 = arith.constant 0 : index
    %3 = vector.load %arg3[%c0_2, %c0_3] : memref<64x1xf32, #tpu.memory_space<vmem>>, vector<64x1xf32>
    %4 = vector.broadcast %3 : vector<64x1xf32> to vector<64x9xf32>
    %5 = arith.mulf %2, %4 : vector<64x9xf32>
    %c0_4 = arith.constant 0 : index
    %c0_5 = arith.constant 0 : index
    %6 = vector.load %arg4[%c0_4, %c0_5] : memref<64x1xf32, #tpu.memory_space<vmem>>, vector<64x1xf32>
    %7 = vector.broadcast %6 : vector<64x1xf32> to vector<64x9xf32>
    %8 = arith.addf %5, %7 : vector<64x9xf32>
    %cst_6 = arith.constant 0.000000e+00 : f32
    %9 = vector.broadcast %cst_6 : f32 to vector<64x9xf32>
    %10 = arith.maximumf %8, %9 : vector<64x9xf32>
    %c0_7 = arith.constant 0 : index
    %c0_8 = arith.constant 0 : index
    %11 = vector.load %arg5[%c0_7, %c0_8] : memref<32x64xbf16, #tpu.memory_space<vmem>>, vector<32x64xbf16>
    %12 = arith.truncf %10 : vector<64x9xf32> to vector<64x9xbf16>
    %cst_9 = arith.constant dense<0.000000e+00> : vector<32x9xf32>
    %13 = tpu.matmul %11, %12, %cst_9 {dimension_numbers = #tpu.dot_dimension_numbers<[1], [0], [0], [1], [0, 0, 1, 1], [], []>} : vector<32x64xbf16>, vector<64x9xbf16>, vector<32x9xf32> -> vector<32x9xf32>
    %14 = arith.addf %0, %13 : vector<32x9xf32>
    %c0_10 = arith.constant 0 : index
    %c0_11 = arith.constant 0 : index
    %c0_12 = arith.constant 0 : index
    %15 = vector.load %arg6[%c0_10, %c0_11, %c0_12] : memref<1x32x9xf32, #tpu.memory_space<vmem>>, vector<1x32x9xf32>
    %16 = vector.shape_cast %15 : vector<1x32x9xf32> to vector<32x9xf32>
    %17 = vector.shape_cast %14 : vector<32x9xf32> to vector<1x32x9xf32>
    tpu.vector_store %arg6[%c0_10, %c0_11, %c0_12], %17 {strides = array<i32>} : memref<1x32x9xf32, #tpu.memory_space<vmem>>, vector<1x32x9xf32>,
    return
  }
  func.func @transform_0(%arg0: i32, %arg1: i32) -> (i32, i32, i32) {
    %c0_i32 = arith.constant 0 : i32
    %c0_i32_0 = arith.constant 0 : i32
    return %arg0, %c0_i32, %arg1 : i32, i32, i32
  }
  func.func @transform_1(%arg0: i32, %arg1: i32) -> (i32, i32) {
    %c0_i32 = arith.constant 0 : i32
    %c0_i32_0 = arith.constant 0 : i32
    %c0_i32_1 = arith.constant 0 : i32
    return %c0_i32, %c0_i32_0 : i32, i32
  }
  func.func @transform_2(%arg0: i32, %arg1: i32) -> (i32, i32) {
    %c0_i32 = arith.constant 0 : i32
    %c0_i32_0 = arith.constant 0 : i32
    %c0_i32_1 = arith.constant 0 : i32
    return %c0_i32, %c0_i32_0 : i32, i32
  }
  func.func @transform_3(%arg0: i32, %arg1: i32) -> (i32, i32) {
    %c0_i32 = arith.constant 0 : i32
    %c0_i32_0 = arith.constant 0 : i32
    %c0_i32_1 = arith.constant 0 : i32
    return %c0_i32, %c0_i32_0 : i32, i32
  }
  func.func @transform_4(%arg0: i32, %arg1: i32) -> (i32, i32, i32) {
    %c0_i32 = arith.constant 0 : i32
    %c0_i32_0 = arith.constant 0 : i32
    return %arg0, %c0_i32, %arg1 : i32, i32, i32
  }
}

module attributes {stable_mosaic.version = 11 : i64} {
  func.func @kernel(%arg0: i32, %arg1: i32, %arg2: memref<1x64x4xf32, #tpu.memory_space<vmem>>, %arg3: memref<64x1xf32, #tpu.memory_space<vmem>>, %arg4: memref<64x1xf32, #tpu.memory_space<vmem>>, %arg5: memref<32x64xbf16, #tpu.memory_space<vmem>>, %arg6: memref<1x32x4xf32, #tpu.memory_space<vmem>>) attributes {dimension_semantics = [#tpu.dimension_semantics<parallel>, #tpu.dimension_semantics<parallel>], iteration_bounds = array<i64: 2, 1>, scalar_prefetch = 0 : i64, scratch_operands = 0 : i64, tpu.core_type = #tpu.core_type<tc>, window_params = [{transform_indices = @transform_0, window_bounds = array<i64: 1, 64, 4>}, {pipeline_mode = #tpu.pipeline_mode<synchronous>, transform_indices = @transform_1, window_bounds = array<i64: 64, 1>}, {pipeline_mode = #tpu.pipeline_mode<synchronous>, transform_indices = @transform_2, window_bounds = array<i64: 64, 1>}, {pipeline_mode = #tpu.pipeline_mode<synchronous>, transform_indices = @transform_3, window_bounds = array<i64: 32, 64>}, {transform_indices = @transform_4, window_bounds = array<i64: 1, 32, 4>}]} {
    %cst = arith.constant 0.000000e+00 : f32
    %0 = vector.broadcast %cst : f32 to vector<32x4xf32>
    %c0 = arith.constant 0 : index
    %c0_0 = arith.constant 0 : index
    %c0_1 = arith.constant 0 : index
    %1 = vector.load %arg2[%c0, %c0_0, %c0_1] : memref<1x64x4xf32, #tpu.memory_space<vmem>>, vector<1x64x4xf32>
    %2 = vector.shape_cast %1 : vector<1x64x4xf32> to vector<64x4xf32>
    %c0_2 = arith.constant 0 : index
    %c0_3 = arith.constant 0 : index
    %3 = vector.load %arg3[%c0_2, %c0_3] : memref<64x1xf32, #tpu.memory_space<vmem>>, vector<64x1xf32>
    %4 = vector.broadcast %3 : vector<64x1xf32> to vector<64x4xf32>
    %5 = arith.mulf %2, %4 : vector<64x4xf32>
    %c0_4 = arith.constant 0 : index
    %c0_5 = arith.constant 0 : index
    %6 = vector.load %arg4[%c0_4, %c0_5] : memref<64x1xf32, #tpu.memory_space<vmem>>, vector<64x1xf32>
    %7 = vector.broadcast %6 : vector<64x1xf32> to vector<64x4xf32>
    %8 = arith.addf %5, %7 : vector<64x4xf32>
    %cst_6 = arith.constant 0.000000e+00 : f32
    %9 = vector.broadcast %cst_6 : f32 to vector<64x4xf32>
    %10 = arith.maximumf %8, %9 : vector<64x4xf32>
    %c0_7 = arith.constant 0 : index
    %c0_8 = arith.constant 0 : index
    %11 = vector.load %arg5[%c0_7, %c0_8] : memref<32x64xbf16, #tpu.memory_space<vmem>>, vector<32x64xbf16>
    %12 = arith.truncf %10 : vector<64x4xf32> to vector<64x4xbf16>
    %cst_9 = arith.constant dense<0.000000e+00> : vector<32x4xf32>
    %13 = tpu.matmul %11, %12, %cst_9 {dimension_numbers = #tpu.dot_dimension_numbers<[1], [0], [0], [1], [0, 0, 1, 1], [], []>} : vector<32x64xbf16>, vector<64x4xbf16>, vector<32x4xf32> -> vector<32x4xf32>
    %14 = arith.addf %0, %13 : vector<32x4xf32>
    %c0_10 = arith.constant 0 : index
    %c0_11 = arith.constant 0 : index
    %c0_12 = arith.constant 0 : index
    %15 = vector.load %arg6[%c0_10, %c0_11, %c0_12] : memref<1x32x4xf32, #tpu.memory_space<vmem>>, vector<1x32x4xf32>
    %16 = vector.shape_cast %15 : vector<1x32x4xf32> to vector<32x4xf32>
    %17 = vector.shape_cast %14 : vector<32x4xf32> to vector<1x32x4xf32>
    tpu.vector_store %arg6[%c0_10, %c0_11, %c0_12], %17 {strides = array<i32>} : memref<1x32x4xf32, #tpu.memory_space<vmem>>, vector<1x32x4xf32>,
    return
  }
  func.func @transform_0(%arg0: i32, %arg1: i32) -> (i32, i32, i32) {
    %c0_i32 = arith.constant 0 : i32
    %c0_i32_0 = arith.constant 0 : i32
    return %arg0, %c0_i32, %arg1 : i32, i32, i32
  }
  func.func @transform_1(%arg0: i32, %arg1: i32) -> (i32, i32) {
    %c0_i32 = arith.constant 0 : i32
    %c0_i32_0 = arith.constant 0 : i32
    %c0_i32_1 = arith.constant 0 : i32
    return %c0_i32, %c0_i32_0 : i32, i32
  }
  func.func @transform_2(%arg0: i32, %arg1: i32) -> (i32, i32) {
    %c0_i32 = arith.constant 0 : i32
    %c0_i32_0 = arith.constant 0 : i32
    %c0_i32_1 = arith.constant 0 : i32
    return %c0_i32, %c0_i32_0 : i32, i32
  }
  func.func @transform_3(%arg0: i32, %arg1: i32) -> (i32, i32) {
    %c0_i32 = arith.constant 0 : i32
    %c0_i32_0 = arith.constant 0 : i32
    %c0_i32_1 = arith.constant 0 : i32
    return %c0_i32, %c0_i32_0 : i32, i32
  }
  func.func @transform_4(%arg0: i32, %arg1: i32) -> (i32, i32, i32) {
    %c0_i32 = arith.constant 0 : i32
    %c0_i32_0 = arith.constant 0 : i32
    return %arg0, %c0_i32, %arg1 : i32, i32, i32
  }
}

module attributes {stable_mosaic.version = 11 : i64} {
  func.func @kernel(%arg0: i32, %arg1: i32, %arg2: memref<1x64x256xf32, #tpu.memory_space<vmem>>, %arg3: memref<1x32x256xf32, #tpu.memory_space<vmem>>, %arg4: memref<1x32x256xf32, #tpu.memory_space<vmem>>, %arg5: memref<1x32x256xf32, #tpu.memory_space<vmem>>, %arg6: memref<64x1xf32, #tpu.memory_space<vmem>>, %arg7: memref<32x1xf32, #tpu.memory_space<vmem>>, %arg8: memref<32x1xf32, #tpu.memory_space<vmem>>, %arg9: memref<32x1xf32, #tpu.memory_space<vmem>>, %arg10: memref<64x1xf32, #tpu.memory_space<vmem>>, %arg11: memref<32x1xf32, #tpu.memory_space<vmem>>, %arg12: memref<32x1xf32, #tpu.memory_space<vmem>>, %arg13: memref<32x1xf32, #tpu.memory_space<vmem>>, %arg14: memref<32x64xbf16, #tpu.memory_space<vmem>>, %arg15: memref<32x32xbf16, #tpu.memory_space<vmem>>, %arg16: memref<32x32xbf16, #tpu.memory_space<vmem>>, %arg17: memref<32x32xbf16, #tpu.memory_space<vmem>>, %arg18: memref<1x32x256xf32, #tpu.memory_space<vmem>>) attributes {dimension_semantics = [#tpu.dimension_semantics<parallel>, #tpu.dimension_semantics<parallel>], iteration_bounds = array<i64: 2, 1>, scalar_prefetch = 0 : i64, scratch_operands = 0 : i64, tpu.core_type = #tpu.core_type<tc>, window_params = [{transform_indices = @transform_0, window_bounds = array<i64: 1, 64, 256>}, {transform_indices = @transform_1, window_bounds = array<i64: 1, 32, 256>}, {transform_indices = @transform_2, window_bounds = array<i64: 1, 32, 256>}, {transform_indices = @transform_3, window_bounds = array<i64: 1, 32, 256>}, {pipeline_mode = #tpu.pipeline_mode<synchronous>, transform_indices = @transform_4, window_bounds = array<i64: 64, 1>}, {pipeline_mode = #tpu.pipeline_mode<synchronous>, transform_indices = @transform_5, window_bounds = array<i64: 32, 1>}, {pipeline_mode = #tpu.pipeline_mode<synchronous>, transform_indices = @transform_6, window_bounds = array<i64: 32, 1>}, {pipeline_mode = #tpu.pipeline_mode<synchronous>, transform_indices = @transform_7, window_bounds = array<i64: 32, 1>}, {pipeline_mode = #tpu.pipeline_mode<synchronous>, transform_indices = @transform_8, window_bounds = array<i64: 64, 1>}, {pipeline_mode = #tpu.pipeline_mode<synchronous>, transform_indices = @transform_9, window_bounds = array<i64: 32, 1>}, {pipeline_mode = #tpu.pipeline_mode<synchronous>, transform_indices = @transform_10, window_bounds = array<i64: 32, 1>}, {pipeline_mode = #tpu.pipeline_mode<synchronous>, transform_indices = @transform_11, window_bounds = array<i64: 32, 1>}, {pipeline_mode = #tpu.pipeline_mode<synchronous>, transform_indices = @transform_12, window_bounds = array<i64: 32, 64>}, {pipeline_mode = #tpu.pipeline_mode<synchronous>, transform_indices = @transform_13, window_bounds = array<i64: 32, 32>}, {pipeline_mode = #tpu.pipeline_mode<synchronous>, transform_indices = @transform_14, window_bounds = array<i64: 32, 32>}, {pipeline_mode = #tpu.pipeline_mode<synchronous>, transform_indices = @transform_15, window_bounds = array<i64: 32, 32>}, {transform_indices = @transform_16, window_bounds = array<i64: 1, 32, 256>}]} {
    %cst = arith.constant 0.000000e+00 : f32
    %0 = vector.broadcast %cst : f32 to vector<32x256xf32>
    %c0 = arith.constant 0 : index
    %c0_0 = arith.constant 0 : index
    %c0_1 = arith.constant 0 : index
    %1 = vector.load %arg2[%c0, %c0_0, %c0_1] : memref<1x64x256xf32, #tpu.memory_space<vmem>>, vector<1x64x256xf32>
    %2 = vector.shape_cast %1 : vector<1x64x256xf32> to vector<64x256xf32>
    %c0_2 = arith.constant 0 : index
    %c0_3 = arith.constant 0 : index
    %3 = vector.load %arg6[%c0_2, %c0_3] : memref<64x1xf32, #tpu.memory_space<vmem>>, vector<64x1xf32>
    %4 = vector.broadcast %3 : vector<64x1xf32> to vector<64x256xf32>
    %5 = arith.mulf %2, %4 : vector<64x256xf32>
    %c0_4 = arith.constant 0 : index
    %c0_5 = arith.constant 0 : index
    %6 = vector.load %arg10[%c0_4, %c0_5] : memref<64x1xf32, #tpu.memory_space<vmem>>, vector<64x1xf32>
    %7 = vector.broadcast %6 : vector<64x1xf32> to vector<64x256xf32>
    %8 = arith.addf %5, %7 : vector<64x256xf32>
    %cst_6 = arith.constant 0.000000e+00 : f32
    %9 = vector.broadcast %cst_6 : f32 to vector<64x256xf32>
    %10 = arith.maximumf %8, %9 : vector<64x256xf32>
    %c0_7 = arith.constant 0 : index
    %c0_8 = arith.constant 0 : index
    %11 = vector.load %arg14[%c0_7, %c0_8] : memref<32x64xbf16, #tpu.memory_space<vmem>>, vector<32x64xbf16>
    %12 = arith.truncf %10 : vector<64x256xf32> to vector<64x256xbf16>
    %cst_9 = arith.constant dense<0.000000e+00> : vector<32x256xf32>
    %13 = tpu.matmul %11, %12, %cst_9 {dimension_numbers = #tpu.dot_dimension_numbers<[1], [0], [0], [1], [0, 0, 1, 1], [], []>} : vector<32x64xbf16>, vector<64x256xbf16>, vector<32x256xf32> -> vector<32x256xf32>
    %14 = arith.addf %0, %13 : vector<32x256xf32>
    %c0_10 = arith.constant 0 : index
    %c0_11 = arith.constant 0 : index
    %c0_12 = arith.constant 0 : index
    %15 = vector.load %arg3[%c0_10, %c0_11, %c0_12] : memref<1x32x256xf32, #tpu.memory_space<vmem>>, vector<1x32x256xf32>
    %16 = vector.shape_cast %15 : vector<1x32x256xf32> to vector<32x256xf32>
    %c0_13 = arith.constant 0 : index
    %c0_14 = arith.constant 0 : index
    %17 = vector.load %arg7[%c0_13, %c0_14] : memref<32x1xf32, #tpu.memory_space<vmem>>, vector<32x1xf32>
    %18 = vector.broadcast %17 : vector<32x1xf32> to vector<32x256xf32>
    %19 = arith.mulf %16, %18 : vector<32x256xf32>
    %c0_15 = arith.constant 0 : index
    %c0_16 = arith.constant 0 : index
    %20 = vector.load %arg11[%c0_15, %c0_16] : memref<32x1xf32, #tpu.memory_space<vmem>>, vector<32x1xf32>
    %21 = vector.broadcast %20 : vector<32x1xf32> to vector<32x256xf32>
    %22 = arith.addf %19, %21 : vector<32x256xf32>
    %cst_17 = arith.constant 0.000000e+00 : f32
    %23 = vector.broadcast %cst_17 : f32 to vector<32x256xf32>
    %24 = arith.maximumf %22, %23 : vector<32x256xf32>
    %c0_18 = arith.constant 0 : index
    %c0_19 = arith.constant 0 : index
    %25 = vector.load %arg15[%c0_18, %c0_19] : memref<32x32xbf16, #tpu.memory_space<vmem>>, vector<32x32xbf16>
    %26 = arith.truncf %24 : vector<32x256xf32> to vector<32x256xbf16>
    %cst_20 = arith.constant dense<0.000000e+00> : vector<32x256xf32>
    %27 = tpu.matmul %25, %26, %cst_20 {dimension_numbers = #tpu.dot_dimension_numbers<[1], [0], [0], [1], [0, 0, 1, 1], [], []>} : vector<32x32xbf16>, vector<32x256xbf16>, vector<32x256xf32> -> vector<32x256xf32>
    %28 = arith.addf %14, %27 : vector<32x256xf32>
    %c0_21 = arith.constant 0 : index
    %c0_22 = arith.constant 0 : index
    %c0_23 = arith.constant 0 : index
    %29 = vector.load %arg4[%c0_21, %c0_22, %c0_23] : memref<1x32x256xf32, #tpu.memory_space<vmem>>, vector<1x32x256xf32>
    %30 = vector.shape_cast %29 : vector<1x32x256xf32> to vector<32x256xf32>
    %c0_24 = arith.constant 0 : index
    %c0_25 = arith.constant 0 : index
    %31 = vector.load %arg8[%c0_24, %c0_25] : memref<32x1xf32, #tpu.memory_space<vmem>>, vector<32x1xf32>
    %32 = vector.broadcast %31 : vector<32x1xf32> to vector<32x256xf32>
    %33 = arith.mulf %30, %32 : vector<32x256xf32>
    %c0_26 = arith.constant 0 : index
    %c0_27 = arith.constant 0 : index
    %34 = vector.load %arg12[%c0_26, %c0_27] : memref<32x1xf32, #tpu.memory_space<vmem>>, vector<32x1xf32>
    %35 = vector.broadcast %34 : vector<32x1xf32> to vector<32x256xf32>
    %36 = arith.addf %33, %35 : vector<32x256xf32>
    %cst_28 = arith.constant 0.000000e+00 : f32
    %37 = vector.broadcast %cst_28 : f32 to vector<32x256xf32>
    %38 = arith.maximumf %36, %37 : vector<32x256xf32>
    %c0_29 = arith.constant 0 : index
    %c0_30 = arith.constant 0 : index
    %39 = vector.load %arg16[%c0_29, %c0_30] : memref<32x32xbf16, #tpu.memory_space<vmem>>, vector<32x32xbf16>
    %40 = arith.truncf %38 : vector<32x256xf32> to vector<32x256xbf16>
    %cst_31 = arith.constant dense<0.000000e+00> : vector<32x256xf32>
    %41 = tpu.matmul %39, %40, %cst_31 {dimension_numbers = #tpu.dot_dimension_numbers<[1], [0], [0], [1], [0, 0, 1, 1], [], []>} : vector<32x32xbf16>, vector<32x256xbf16>, vector<32x256xf32> -> vector<32x256xf32>
    %42 = arith.addf %28, %41 : vector<32x256xf32>
    %c0_32 = arith.constant 0 : index
    %c0_33 = arith.constant 0 : index
    %c0_34 = arith.constant 0 : index
    %43 = vector.load %arg5[%c0_32, %c0_33, %c0_34] : memref<1x32x256xf32, #tpu.memory_space<vmem>>, vector<1x32x256xf32>
    %44 = vector.shape_cast %43 : vector<1x32x256xf32> to vector<32x256xf32>
    %c0_35 = arith.constant 0 : index
    %c0_36 = arith.constant 0 : index
    %45 = vector.load %arg9[%c0_35, %c0_36] : memref<32x1xf32, #tpu.memory_space<vmem>>, vector<32x1xf32>
    %46 = vector.broadcast %45 : vector<32x1xf32> to vector<32x256xf32>
    %47 = arith.mulf %44, %46 : vector<32x256xf32>
    %c0_37 = arith.constant 0 : index
    %c0_38 = arith.constant 0 : index
    %48 = vector.load %arg13[%c0_37, %c0_38] : memref<32x1xf32, #tpu.memory_space<vmem>>, vector<32x1xf32>
    %49 = vector.broadcast %48 : vector<32x1xf32> to vector<32x256xf32>
    %50 = arith.addf %47, %49 : vector<32x256xf32>
    %cst_39 = arith.constant 0.000000e+00 : f32
    %51 = vector.broadcast %cst_39 : f32 to vector<32x256xf32>
    %52 = arith.maximumf %50, %51 : vector<32x256xf32>
    %c0_40 = arith.constant 0 : index
    %c0_41 = arith.constant 0 : index
    %53 = vector.load %arg17[%c0_40, %c0_41] : memref<32x32xbf16, #tpu.memory_space<vmem>>, vector<32x32xbf16>
    %54 = arith.truncf %52 : vector<32x256xf32> to vector<32x256xbf16>
    %cst_42 = arith.constant dense<0.000000e+00> : vector<32x256xf32>
    %55 = tpu.matmul %53, %54, %cst_42 {dimension_numbers = #tpu.dot_dimension_numbers<[1], [0], [0], [1], [0, 0, 1, 1], [], []>} : vector<32x32xbf16>, vector<32x256xbf16>, vector<32x256xf32> -> vector<32x256xf32>
    %56 = arith.addf %42, %55 : vector<32x256xf32>
    %c0_43 = arith.constant 0 : index
    %c0_44 = arith.constant 0 : index
    %c0_45 = arith.constant 0 : index
    %57 = vector.load %arg18[%c0_43, %c0_44, %c0_45] : memref<1x32x256xf32, #tpu.memory_space<vmem>>, vector<1x32x256xf32>
    %58 = vector.shape_cast %57 : vector<1x32x256xf32> to vector<32x256xf32>
    %59 = vector.shape_cast %56 : vector<32x256xf32> to vector<1x32x256xf32>
    tpu.vector_store %arg18[%c0_43, %c0_44, %c0_45], %59 {strides = array<i32>} : memref<1x32x256xf32, #tpu.memory_space<vmem>>, vector<1x32x256xf32>,
    return
  }
  func.func @transform_0(%arg0: i32, %arg1: i32) -> (i32, i32, i32) {
    %c0_i32 = arith.constant 0 : i32
    %c0_i32_0 = arith.constant 0 : i32
    return %arg0, %c0_i32, %arg1 : i32, i32, i32
  }
  func.func @transform_1(%arg0: i32, %arg1: i32) -> (i32, i32, i32) {
    %c0_i32 = arith.constant 0 : i32
    %c0_i32_0 = arith.constant 0 : i32
    return %arg0, %c0_i32, %arg1 : i32, i32, i32
  }
  func.func @transform_2(%arg0: i32, %arg1: i32) -> (i32, i32, i32) {
    %c0_i32 = arith.constant 0 : i32
    %c0_i32_0 = arith.constant 0 : i32
    return %arg0, %c0_i32, %arg1 : i32, i32, i32
  }
  func.func @transform_3(%arg0: i32, %arg1: i32) -> (i32, i32, i32) {
    %c0_i32 = arith.constant 0 : i32
    %c0_i32_0 = arith.constant 0 : i32
    return %arg0, %c0_i32, %arg1 : i32, i32, i32
  }
  func.func @transform_4(%arg0: i32, %arg1: i32) -> (i32, i32) {
    %c0_i32 = arith.constant 0 : i32
    %c0_i32_0 = arith.constant 0 : i32
    %c0_i32_1 = arith.constant 0 : i32
    return %c0_i32, %c0_i32_0 : i32, i32
  }
  func.func @transform_5(%arg0: i32, %arg1: i32) -> (i32, i32) {
    %c0_i32 = arith.constant 0 : i32
    %c0_i32_0 = arith.constant 0 : i32
    %c0_i32_1 = arith.constant 0 : i32
    return %c0_i32, %c0_i32_0 : i32, i32
  }
  func.func @transform_6(%arg0: i32, %arg1: i32) -> (i32, i32) {
    %c0_i32 = arith.constant 0 : i32
    %c0_i32_0 = arith.constant 0 : i32
    %c0_i32_1 = arith.constant 0 : i32
    return %c0_i32, %c0_i32_0 : i32, i32
  }
  func.func @transform_7(%arg0: i32, %arg1: i32) -> (i32, i32) {
    %c0_i32 = arith.constant 0 : i32
    %c0_i32_0 = arith.constant 0 : i32
    %c0_i32_1 = arith.constant 0 : i32
    return %c0_i32, %c0_i32_0 : i32, i32
  }
  func.func @transform_8(%arg0: i32, %arg1: i32) -> (i32, i32) {
    %c0_i32 = arith.constant 0 : i32
    %c0_i32_0 = arith.constant 0 : i32
    %c0_i32_1 = arith.constant 0 : i32
    return %c0_i32, %c0_i32_0 : i32, i32
  }
  func.func @transform_9(%arg0: i32, %arg1: i32) -> (i32, i32) {
    %c0_i32 = arith.constant 0 : i32
    %c0_i32_0 = arith.constant 0 : i32
    %c0_i32_1 = arith.constant 0 : i32
    return %c0_i32, %c0_i32_0 : i32, i32
  }
  func.func @transform_10(%arg0: i32, %arg1: i32) -> (i32, i32) {
    %c0_i32 = arith.constant 0 : i32
    %c0_i32_0 = arith.constant 0 : i32
    %c0_i32_1 = arith.constant 0 : i32
    return %c0_i32, %c0_i32_0 : i32, i32
  }
  func.func @transform_11(%arg0: i32, %arg1: i32) -> (i32, i32) {
    %c0_i32 = arith.constant 0 : i32
    %c0_i32_0 = arith.constant 0 : i32
    %c0_i32_1 = arith.constant 0 : i32
    return %c0_i32, %c0_i32_0 : i32, i32
  }
  func.func @transform_12(%arg0: i32, %arg1: i32) -> (i32, i32) {
    %c0_i32 = arith.constant 0 : i32
    %c0_i32_0 = arith.constant 0 : i32
    %c0_i32_1 = arith.constant 0 : i32
    return %c0_i32, %c0_i32_0 : i32, i32
  }
  func.func @transform_13(%arg0: i32, %arg1: i32) -> (i32, i32) {
    %c0_i32 = arith.constant 0 : i32
    %c0_i32_0 = arith.constant 0 : i32
    %c0_i32_1 = arith.constant 0 : i32
    return %c0_i32, %c0_i32_0 : i32, i32
  }
  func.func @transform_14(%arg0: i32, %arg1: i32) -> (i32, i32) {
    %c0_i32 = arith.constant 0 : i32
    %c0_i32_0 = arith.constant 0 : i32
    %c0_i32_1 = arith.constant 0 : i32
    return %c0_i32, %c0_i32_0 : i32, i32
  }
  func.func @transform_15(%arg0: i32, %arg1: i32) -> (i32, i32) {
    %c0_i32 = arith.constant 0 : i32
    %c0_i32_0 = arith.constant 0 : i32
    %c0_i32_1 = arith.constant 0 : i32
    return %c0_i32, %c0_i32_0 : i32, i32
  }
  func.func @transform_16(%arg0: i32, %arg1: i32) -> (i32, i32, i32) {
    %c0_i32 = arith.constant 0 : i32
    %c0_i32_0 = arith.constant 0 : i32
    return %arg0, %c0_i32, %arg1 : i32, i32, i32
  }
}

</mosaic_0001>

<llo_original>
// kernel: spatial_pyramid_pooling.5
$region0: #{spatial_pyramid_pooling.5}
  #allocation0 [shape = 'u32[]', space=smem, size = 0x4, offset = 0x4, fixed_abs, tag = 'smem constant byte address 0x4 - core index']
  #allocation1 [shape = 'u32[144,128]{1,0:T(1,128)}', space=vmem, size = 0x12000, scoped, tag = 'internal scratch']
  %s0 = inlined_call_operand.vmem [shape: f32[2,4,256], index: 0, kind: input, shape index: {}]
  %s1 = inlined_call_operand.vmem [shape: f32[4,1], index: 1, kind: input, shape index: {}]
  %s2 = inlined_call_operand.vmem [shape: f32[4,1], index: 2, kind: input, shape index: {}]
  %s3 = inlined_call_operand.vmem [shape: bf16[64,4], index: 3, kind: input, shape index: {}]
  %s4 = inlined_call_operand.vmem [shape: f32[2,64,256], index: 4, kind: output, shape index: {}]
  %s5 = sld [smem:[#allocation0]]
  $region49: #{spatial_pyramid_pooling.5} parent=0
    _
  %s7 = ssub.s32 1, %s5
  %s8 = scalar_select 0, %s7, %s5
  loop: start=0, step=1, limit=4
  $region2: #{spatial_pyramid_pooling.5} parent=0 // loop_pre_header
    _
  $region3: #{spatial_pyramid_pooling.5} parent=0 // loop_header
    %s10 = sphi 0, %s14
    %p11 = scmp.ge.s32.totalorder %s10, 4
    %s17 = sphi 0, %s29
    %s18 = sphi 0, %s25
    %s19 = sphi 0, %s17
    %s20 = sphi 0, %s18
    %s21 = sphi 0, %s19
    %s22 = sphi 0, %s20
    %s34 = sphi 0, %s36
    %s37 = sphi 0, %s34
    %s38 = sphi 0, %s37
    %s54 = sphi 0, %s38
    %s58 = sphi 0, %s58
    %s60 = sphi 0, %s58
    %s61 = sphi 0, %s60
    %s75 = sphi 0, %s61
    %s79 = sphi 0, %s79
    %s81 = sphi 0, %s79
    %s82 = sphi 0, %s81
    %s96 = sphi 0, %s82
    %s100 = sphi 0, %s100
    %s102 = sphi 0, %s100
    %s103 = sphi 0, %s102
    %s117 = sphi 0, %s103
    %s125 = sphi 0, %s127
    %s128 = sphi 0, %s125
    %s129 = sphi 0, %s128
    %s145 = sphi 0, %s129
  $region4: #{spatial_pyramid_pooling.5} parent=0 // loop_header_branch
    %13 = sbr.rel (%p11) target = $region8
  $region5: #{spatial_pyramid_pooling.5} parent=0 // loop_body
    %s15 = ssub.s32 %s10, 1
    %s16 = ssub.s32 %s10, 2
    %s23 = sadd.s32 1, %s18
    %p24 = scmp.ge.s32.totalorder %s23, 1
    %s25 = scalar_select %p24, 0, %s23
    %s26 = sadd.s32 1, %s17
    %s27 = scalar_select %p24, %s26, %s17
    %p28 = scmp.ge.s32.totalorder %s27, 2
    %s29 = scalar_select %p28, 0, %s27
    %s30 = ssub.s32 %s17, %s29
    %s31 = ssub.s32 %s18, %s25
    %s32 = sor.u32 %s30, %s31
    %p33 = scmp.eq.s32.totalorder %s32, 0
    %s35 = sadd.s32 %s34, 1
    %s36 = scalar_select %p33, %s34, %s35
    %p39 = pneg %p33
    %p40 = scmp.eq.s32.totalorder %s10, 1
    %p41 = por %p39, %p40
    %p42 = scmp.ne.s32.totalorder %s34, %s37
    %p43 = scmp.eq.s32.totalorder %s10, 0
    %p44 = por %p42, %p43
    %p45 = scmp.ne.s32.totalorder %s34, %s37
    %p46 = scmp.eq.s32.totalorder %s15, 1
    %p47 = por %p45, %p46
    %p48 = scmp.ne.s32.totalorder %s37, %s38
    %p49 = scmp.eq.s32.totalorder %s15, 0
    %p50 = por %p48, %p49
    %p51 = scmp.ne.s32.totalorder %s37, %s38
    %p52 = scmp.eq.s32.totalorder %s16, 1
    %p53 = por %p51, %p52
    %p55 = scmp.ne.s32.totalorder %s38, %s54
    %p56 = scmp.eq.s32.totalorder %s16, 0
    %p57 = por %p55, %p56
    %s59 = sadd.s32 %s58, 1
    %p62 = scmp.eq.s32.totalorder %s10, 1
    %p63 = scmp.ne.s32.totalorder %s58, %s60
    %p64 = scmp.eq.s32.totalorder %s10, 0
    %p65 = por %p63, %p64
    %p66 = scmp.ne.s32.totalorder %s58, %s60
    %p67 = scmp.eq.s32.totalorder %s15, 1
    %p68 = por %p66, %p67
    %p69 = scmp.ne.s32.totalorder %s60, %s61
    %p70 = scmp.eq.s32.totalorder %s15, 0
    %p71 = por %p69, %p70
    %p72 = scmp.ne.s32.totalorder %s60, %s61
    %p73 = scmp.eq.s32.totalorder %s16, 1
    %p74 = por %p72, %p73
    %p76 = scmp.ne.s32.totalorder %s61, %s75
    %p77 = scmp.eq.s32.totalorder %s16, 0
    %p78 = por %p76, %p77
    %s80 = sadd.s32 %s79, 1
    %p83 = scmp.eq.s32.totalorder %s10, 1
    %p84 = scmp.ne.s32.totalorder %s79, %s81
    %p85 = scmp.eq.s32.totalorder %s10, 0
    %p86 = por %p84, %p85
    %p87 = scmp.ne.s32.totalorder %s79, %s81
    %p88 = scmp.eq.s32.totalorder %s15, 1
    %p89 = por %p87, %p88
    %p90 = scmp.ne.s32.totalorder %s81, %s82
    %p91 = scmp.eq.s32.totalorder %s15, 0
    %p92 = por %p90, %p91
    %p93 = scmp.ne.s32.totalorder %s81, %s82
    %p94 = scmp.eq.s32.totalorder %s16, 1
    %p95 = por %p93, %p94
    %p97 = scmp.ne.s32.totalorder %s82, %s96
    %p98 = scmp.eq.s32.totalorder %s16, 0
    %p99 = por %p97, %p98
    %s101 = sadd.s32 %s100, 1
    %p104 = scmp.eq.s32.totalorder %s10, 1
    %p105 = scmp.ne.s32.totalorder %s100, %s102
    %p106 = scmp.eq.s32.totalorder %s10, 0
    %p107 = por %p105, %p106
    %p108 = scmp.ne.s32.totalorder %s100, %s102
    %p109 = scmp.eq.s32.totalorder %s15, 1
    %p110 = por %p108, %p109
    %p111 = scmp.ne.s32.totalorder %s102, %s103
    %p112 = scmp.eq.s32.totalorder %s15, 0
    %p113 = por %p111, %p112
    %p114 = scmp.ne.s32.totalorder %s102, %s103
    %p115 = scmp.eq.s32.totalorder %s16, 1
    %p116 = por %p114, %p115
    %p118 = scmp.ne.s32.totalorder %s103, %s117
    %p119 = scmp.eq.s32.totalorder %s16, 0
    %p120 = por %p118, %p119
    %s121 = ssub.s32 %s17, %s29
    %s122 = ssub.s32 %s18, %s25
    %s123 = sor.u32 %s121, %s122
    %p124 = scmp.eq.s32.totalorder %s123, 0
    %s126 = sadd.s32 %s125, 1
    %s127 = scalar_select %p124, %s125, %s126
    %p130 = pneg %p124
    %p131 = scmp.eq.s32.totalorder %s10, 1
    %p132 = por %p130, %p131
    %p133 = scmp.ne.s32.totalorder %s125, %s128
    %p134 = scmp.eq.s32.totalorder %s10, 0
    %p135 = por %p133, %p134
    %p136 = scmp.ne.s32.totalorder %s125, %s128
    %p137 = scmp.eq.s32.totalorder %s15, 1
    %p138 = por %p136, %p137
    %p139 = scmp.ne.s32.totalorder %s128, %s129
    %p140 = scmp.eq.s32.totalorder %s15, 0
    %p141 = por %p139, %p140
    %p142 = scmp.ne.s32.totalorder %s128, %s129
    %p143 = scmp.eq.s32.totalorder %s16, 1
    %p144 = por %p142, %p143
    %p146 = scmp.ne.s32.totalorder %s129, %s145
    %p147 = scmp.eq.s32.totalorder %s16, 0
    %p148 = por %p146, %p147
    %p149 = scmp.le.s32.totalorder 1, %s10
    %p150 = scmp.lt.s32.totalorder %s10, 3
    %p151 = pnand %p149, %p150
    %p152 = pneg %p151
    // Predicated region
    $region9: #{spatial_pyramid_pooling.5} parent=5 // pred_check
      _
    $region10: #{spatial_pyramid_pooling.5} parent=5 // pred_check_branch
      %154 = sbr.rel (%p151) target = $region12
    $region11: #{spatial_pyramid_pooling.5} parent=5 // pred_region
      %s155 = ssub.s32 %s10, 1
      // Predicated region
      $region13: #{spatial_pyramid_pooling.5} parent=11 // pred_check
        %p156 = pneg %p71
      $region14: #{spatial_pyramid_pooling.5} parent=11 // pred_check_branch
        %158 = sbr.rel (%p156) target = $region16
      $region15: #{spatial_pyramid_pooling.5} parent=11 // pred_region
        _
      $region16: #{spatial_pyramid_pooling.5} parent=11 // pred_fallthru
        _
      // Predicated region
      $region17: #{spatial_pyramid_pooling.5} parent=11 // pred_check
        %p159 = pneg %p92
      $region18: #{spatial_pyramid_pooling.5} parent=11 // pred_check_branch
        %161 = sbr.rel (%p159) target = $region20
      $region19: #{spatial_pyramid_pooling.5} parent=11 // pred_region
        _
      $region20: #{spatial_pyramid_pooling.5} parent=11 // pred_fallthru
        _
      // Predicated region
      $region21: #{spatial_pyramid_pooling.5} parent=11 // pred_check
        %p162 = pneg %p113
      $region22: #{spatial_pyramid_pooling.5} parent=11 // pred_check_branch
        %164 = sbr.rel (%p162) target = $region24
      $region23: #{spatial_pyramid_pooling.5} parent=11 // pred_region
        _
      $region24: #{spatial_pyramid_pooling.5} parent=11 // pred_fallthru
        _
    $region12: #{spatial_pyramid_pooling.5} parent=5 // pred_fallthru
      _
    %p165 = scmp.lt.s32.totalorder %s10, 2
    // Predicated region
    $region25: #{spatial_pyramid_pooling.5} parent=5 // pred_check
      %p166 = pneg %p165
    $region26: #{spatial_pyramid_pooling.5} parent=5 // pred_check_branch
      %168 = sbr.rel (%p166) target = $region28
    $region27: #{spatial_pyramid_pooling.5} parent=5 // pred_region
      // Predicated region
      $region29: #{spatial_pyramid_pooling.5} parent=27 // pred_check
        %p169 = pneg %p44
      $region30: #{spatial_pyramid_pooling.5} parent=27 // pred_check_branch
        %171 = sbr.rel (%p169) target = $region32
      $region31: #{spatial_pyramid_pooling.5} parent=27 // pred_region
        %s172 = smul.u32 2, %s18
        %p173 = scmp.lt.s32.totalorder %s17, 1
        %s174 = scalar_select %p173, %s17, 1
        %p175 = scmp.lt.s32.totalorder %s172, 1
        %s176 = scalar_select %p175, %s172, 1
        %s177 = smul.addr %s174, 2
        %s178 = sadd.s32 %s176, %s177
        %s179 = smul.addr %s178, 4
        %s180 = scalar_lea.vmem %s0, %s179
        %s181 = smul.u32 2, %s18
      $region32: #{spatial_pyramid_pooling.5} parent=27 // pred_fallthru
        _
    $region28: #{spatial_pyramid_pooling.5} parent=5 // pred_fallthru
      _
    %p182 = scmp.le.s32.totalorder 1, %s10
    %p183 = scmp.lt.s32.totalorder %s10, 3
    %p184 = pnand %p182, %p183
    %p185 = pneg %p184
    // Predicated region
    $region33: #{spatial_pyramid_pooling.5} parent=5 // pred_check
      _
    $region34: #{spatial_pyramid_pooling.5} parent=5 // pred_check_branch
      %187 = sbr.rel (%p184) target = $region36
    $region35: #{spatial_pyramid_pooling.5} parent=5 // pred_region
      %s188 = ssub.s32 %s10, 1
      %s189 = smul.u32 2, %s20
      %p190 = scmp.lt.s32.totalorder %s19, 1
      %s191 = scalar_select %p190, %s19, 1
      %p192 = scmp.lt.s32.totalorder %s189, 1
      %s193 = scalar_select %p192, %s189, 1
      %s194 = smul.addr %s191, 2
      %s195 = sadd.s32 %s193, %s194
      %s196 = smul.addr %s195, 4
      %s197 = scalar_lea.vmem %s0, %s196
      %p198 = pneg %p50
      %p199 = pneg %p47
      %p200 = pneg %p71
      %p201 = pneg %p68
      %p202 = pneg %p92
      %p203 = pneg %p89
      %p204 = pneg %p113
      %p205 = pneg %p110
      %p206 = pneg %p141
      %p207 = pneg %p138
      %s208 = smul.u32 2, %s20
      %p209 = scmp.lt.s32.totalorder %s19, 1
      %s210 = scalar_select %p209, %s19, 1
      %p211 = scmp.lt.s32.totalorder %s208, 1
      %s212 = scalar_select %p211, %s208, 1
      %s213 = smul.addr %s210, 16
      %s214 = sadd.s32 %s212, %s213
      %s215 = smul.addr %s214, 8
      %s216 = scalar_lea.vmem %s4, %s215
      %s217 = smul.u32 2, %s20
      %p218 = scmp.lt.s32.totalorder %s19, 1
      %s219 = scalar_select %p218, %s19, 1
      %p220 = scmp.lt.s32.totalorder %s217, 1
      %s221 = scalar_select %p220, %s217, 1
      %s222 = smul.addr %s219, 2
      %s223 = sadd.s32 %s221, %s222
      %s224 = smul.addr %s223, 4
      %s225 = scalar_lea.vmem %s0, %s224
      %s226 = smul.u32 2, %s20
      %s227 = smul.u32 2, %s20
      %p228 = scmp.lt.s32.totalorder %s19, 1
      %s229 = scalar_select %p228, %s19, 1
      %p230 = scmp.lt.s32.totalorder %s227, 1
      %s231 = scalar_select %p230, %s227, 1
      %s232 = smul.addr %s229, 16
      %s233 = sadd.s32 %s231, %s232
      %s234 = smul.addr %s233, 8
      %s235 = scalar_lea.vmem %s4, %s234
      %s236 = smul.u32 2, %s20
      %v237 = vld [vmem:[%s225] sm:$0xff]
      %v238 = vld [vmem:[%s1] sm:$0xf]
      %240 = vset.pattern.permute.xlu0 0
      %241 = vperm.xlu0 %240, %v238
      %v242 = vpop.permute.xlu0 %241
      %v244 = vunpack.c.l.s4 839922192
      %v245 = vunpack.c.0.s8 %v244
      %v246 = vlaneseq
      %v247 = vshrl.u32 %v246, 7
      %v248 = vsub.s32 %v245, %v247
      %v249 = vrot.slane %v242, %v248
      %v251 = vmul.f32 %v237, %v249
      %v252 = vld [vmem:[%s2] sm:$0xf]
      %254 = vset.pattern.permute.xlu0 0
      %255 = vperm.xlu0 %254, %v252
      %v256 = vpop.permute.xlu0 %255
      %v258 = vunpack.c.l.s4 839922192
      %v259 = vunpack.c.0.s8 %v258
      %v260 = vlaneseq
      %v261 = vshrl.u32 %v260, 7
      %v262 = vsub.s32 %v259, %v261
      %v263 = vrot.slane %v256, %v262
      %v265 = vadd.f32 %v251, %v263
      %v266 = vmax.f32 %v265, 0.0
      %v267 = vld [vmem:[%s3] sm:$0xf]
      %v268 = vld [vmem:[%s3 + $0x4] sm:$0xf]
      %v269 = vld [vmem:[%s3 + $0x8] sm:$0xf]
      %v270 = vld [vmem:[%s3 + $0xc] sm:$0xf]
      %v271 = vld [vmem:[%s3 + $0x10] sm:$0xf]
      %v272 = vld [vmem:[%s3 + $0x14] sm:$0xf]
      %v273 = vld [vmem:[%s3 + $0x18] sm:$0xf]
      %v274 = vld [vmem:[%s3 + $0x1c] sm:$0xf]
      %v275 = vunpack.c.l.bf16 %v267
      %v276 = vunpack.c.l.bf16 %v268
      %v277 = vunpack.c.l.bf16 %v269
      %v278 = vunpack.c.l.bf16 %v270
      %v279 = vunpack.c.l.bf16 %v271
      %v280 = vunpack.c.l.bf16 %v272
      %v281 = vunpack.c.l.bf16 %v273
      %v282 = vunpack.c.l.bf16 %v274
      %284 = vset.pattern.permute.xlu0 0
      %285 = vperm.xlu0 %284, %v275
      %v286 = vpop.permute.xlu0 %285
      %289 = vset.pattern.permute.xlu0 0
      %290 = vperm.xlu0 %289, %v276
      %v291 = vpop.permute.xlu0 %290
      %294 = vset.pattern.permute.xlu0 0
      %295 = vperm.xlu0 %294, %v277
      %v296 = vpop.permute.xlu0 %295
      %299 = vset.pattern.permute.xlu0 0
      %300 = vperm.xlu0 %299, %v278
      %v301 = vpop.permute.xlu0 %300
      %304 = vset.pattern.permute.xlu0 0
      %305 = vperm.xlu0 %304, %v279
      %v306 = vpop.permute.xlu0 %305
      %309 = vset.pattern.permute.xlu0 0
      %310 = vperm.xlu0 %309, %v280
      %v311 = vpop.permute.xlu0 %310
      %314 = vset.pattern.permute.xlu0 0
      %315 = vperm.xlu0 %314, %v281
      %v316 = vpop.permute.xlu0 %315
      %319 = vset.pattern.permute.xlu0 0
      %320 = vperm.xlu0 %319, %v282
      %v321 = vpop.permute.xlu0 %320
      %v324 = vlaneseq
      %v325 = vshrl.u32 %v324, 7
      %v326 = vsub.s32 0, %v325
      %v327 = vrot.slane %v266, %v326
      %v328 = vlaneseq
      %v329 = vshrl.u32 %v328, 7
      %v330 = vsub.s32 4, %v329
      %v331 = vrot.slane %v266, %v330
      %v334 = vlaneseq
      %v335 = vshrl.u32 %v334, 7
      %v336 = vsub.s32 0, %v335
      %v337 = vrot.slane %v327, %v336
      %v338 = vlaneseq
      %v339 = vshrl.u32 %v338, 7
      %v340 = vsub.s32 0, %v339
      %v341 = vrot.slane %v331, %v340
      %v342 = vmul.f32 %v286, %v337
      %v343 = vmul.f32 %v286, %v341
      %v344 = vmul.f32 %v291, %v337
      %v345 = vmul.f32 %v291, %v341
      %v346 = vmul.f32 %v296, %v337
      %v347 = vmul.f32 %v296, %v341
      %v348 = vmul.f32 %v301, %v337
      %v349 = vmul.f32 %v301, %v341
      %v350 = vmul.f32 %v306, %v337
      %v351 = vmul.f32 %v306, %v341
      %v352 = vmul.f32 %v311, %v337
      %v353 = vmul.f32 %v311, %v341
      %v354 = vmul.f32 %v316, %v337
      %v355 = vmul.f32 %v316, %v341
      %v356 = vmul.f32 %v321, %v337
      %v357 = vmul.f32 %v321, %v341
      %v358 = vadd.f32 %v342, 0.0
      %v359 = vadd.f32 %v343, 0.0
      %v360 = vadd.f32 %v344, 0.0
      %v361 = vadd.f32 %v345, 0.0
      %v362 = vadd.f32 %v346, 0.0
      %v363 = vadd.f32 %v347, 0.0
      %v364 = vadd.f32 %v348, 0.0
      %v365 = vadd.f32 %v349, 0.0
      %v366 = vadd.f32 %v350, 0.0
      %v367 = vadd.f32 %v351, 0.0
      %v368 = vadd.f32 %v352, 0.0
      %v369 = vadd.f32 %v353, 0.0
      %v370 = vadd.f32 %v354, 0.0
      %v371 = vadd.f32 %v355, 0.0
      %v372 = vadd.f32 %v356, 0.0
      %v373 = vadd.f32 %v357, 0.0
      %374 = vset.pattern.permute.xlu0 1
      %375 = vperm.xlu0 %374, %v275
      %v376 = vpop.permute.xlu0 %375
      %378 = vset.pattern.permute.xlu0 1
      %379 = vperm.xlu0 %378, %v276
      %v380 = vpop.permute.xlu0 %379
      %382 = vset.pattern.permute.xlu0 1
      %383 = vperm.xlu0 %382, %v277
      %v384 = vpop.permute.xlu0 %383
      %386 = vset.pattern.permute.xlu0 1
      %387 = vperm.xlu0 %386, %v278
      %v388 = vpop.permute.xlu0 %387
      %390 = vset.pattern.permute.xlu0 1
      %391 = vperm.xlu0 %390, %v279
      %v392 = vpop.permute.xlu0 %391
      %394 = vset.pattern.permute.xlu0 1
      %395 = vperm.xlu0 %394, %v280
      %v396 = vpop.permute.xlu0 %395
      %398 = vset.pattern.permute.xlu0 1
      %399 = vperm.xlu0 %398, %v281
      %v400 = vpop.permute.xlu0 %399
      %402 = vset.pattern.permute.xlu0 1
      %403 = vperm.xlu0 %402, %v282
      %v404 = vpop.permute.xlu0 %403
      %v406 = vlaneseq
      %v407 = vshrl.u32 %v406, 7
      %v408 = vsub.s32 1, %v407
      %v409 = vrot.slane %v266, %v408
      %v410 = vlaneseq
      %v411 = vshrl.u32 %v410, 7
      %v412 = vsub.s32 5, %v411
      %v413 = vrot.slane %v266, %v412
      %v416 = vlaneseq
      %v417 = vshrl.u32 %v416, 7
      %v418 = vsub.s32 1, %v417
      %v419 = vrot.slane %v409, %v418
      %v420 = vlaneseq
      %v421 = vshrl.u32 %v420, 7
      %v422 = vsub.s32 1, %v421
      %v423 = vrot.slane %v413, %v422
      %v424 = vmul.f32 %v376, %v419
      %v425 = vmul.f32 %v376, %v423
      %v426 = vmul.f32 %v380, %v419
      %v427 = vmul.f32 %v380, %v423
      %v428 = vmul.f32 %v384, %v419
      %v429 = vmul.f32 %v384, %v423
      %v430 = vmul.f32 %v388, %v419
      %v431 = vmul.f32 %v388, %v423
      %v432 = vmul.f32 %v392, %v419
      %v433 = vmul.f32 %v392, %v423
      %v434 = vmul.f32 %v396, %v419
      %v435 = vmul.f32 %v396, %v423
      %v436 = vmul.f32 %v400, %v419
      %v437 = vmul.f32 %v400, %v423
      %v438 = vmul.f32 %v404, %v419
      %v439 = vmul.f32 %v404, %v423
      %v440 = vadd.f32 %v358, %v424
      %v441 = vadd.f32 %v359, %v425
      %v442 = vadd.f32 %v360, %v426
      %v443 = vadd.f32 %v361, %v427
      %v444 = vadd.f32 %v362, %v428
      %v445 = vadd.f32 %v363, %v429
      %v446 = vadd.f32 %v364, %v430
      %v447 = vadd.f32 %v365, %v431
      %v448 = vadd.f32 %v366, %v432
      %v449 = vadd.f32 %v367, %v433
      %v450 = vadd.f32 %v368, %v434
      %v451 = vadd.f32 %v369, %v435
      %v452 = vadd.f32 %v370, %v436
      %v453 = vadd.f32 %v371, %v437
      %v454 = vadd.f32 %v372, %v438
      %v455 = vadd.f32 %v373, %v439
      %456 = vset.pattern.permute.xlu0 2
      %457 = vperm.xlu0 %456, %v275
      %v458 = vpop.permute.xlu0 %457
      %460 = vset.pattern.permute.xlu0 2
      %461 = vperm.xlu0 %460, %v276
      %v462 = vpop.permute.xlu0 %461
      %464 = vset.pattern.permute.xlu0 2
      %465 = vperm.xlu0 %464, %v277
      %v466 = vpop.permute.xlu0 %465
      %468 = vset.pattern.permute.xlu0 2
      %469 = vperm.xlu0 %468, %v278
      %v470 = vpop.permute.xlu0 %469
      %472 = vset.pattern.permute.xlu0 2
      %473 = vperm.xlu0 %472, %v279
      %v474 = vpop.permute.xlu0 %473
      %476 = vset.pattern.permute.xlu0 2
      %477 = vperm.xlu0 %476, %v280
      %v478 = vpop.permute.xlu0 %477
      %480 = vset.pattern.permute.xlu0 2
      %481 = vperm.xlu0 %480, %v281
      %v482 = vpop.permute.xlu0 %481
      %484 = vset.pattern.permute.xlu0 2
      %485 = vperm.xlu0 %484, %v282
      %v486 = vpop.permute.xlu0 %485
      %v488 = vlaneseq
      %v489 = vshrl.u32 %v488, 7
      %v490 = vsub.s32 2, %v489
      %v491 = vrot.slane %v266, %v490
      %v492 = vlaneseq
      %v493 = vshrl.u32 %v492, 7
      %v494 = vsub.s32 6, %v493
      %v495 = vrot.slane %v266, %v494
      %v498 = vlaneseq
      %v499 = vshrl.u32 %v498, 7
      %v500 = vsub.s32 2, %v499
      %v501 = vrot.slane %v491, %v500
      %v502 = vlaneseq
      %v503 = vshrl.u32 %v502, 7
      %v504 = vsub.s32 2, %v503
      %v505 = vrot.slane %v495, %v504
      %v506 = vmul.f32 %v458, %v501
      %v507 = vmul.f32 %v458, %v505
      %v508 = vmul.f32 %v462, %v501
      %v509 = vmul.f32 %v462, %v505
      %v510 = vmul.f32 %v466, %v501
      %v511 = vmul.f32 %v466, %v505
      %v512 = vmul.f32 %v470, %v501
      %v513 = vmul.f32 %v470, %v505
      %v514 = vmul.f32 %v474, %v501
      %v515 = vmul.f32 %v474, %v505
      %v516 = vmul.f32 %v478, %v501
      %v517 = vmul.f32 %v478, %v505
      %v518 = vmul.f32 %v482, %v501
      %v519 = vmul.f32 %v482, %v505
      %v520 = vmul.f32 %v486, %v501
      %v521 = vmul.f32 %v486, %v505
      %v522 = vadd.f32 %v440, %v506
      %v523 = vadd.f32 %v441, %v507
      %v524 = vadd.f32 %v442, %v508
      %v525 = vadd.f32 %v443, %v509
      %v526 = vadd.f32 %v444, %v510
      %v527 = vadd.f32 %v445, %v511
      %v528 = vadd.f32 %v446, %v512
      %v529 = vadd.f32 %v447, %v513
      %v530 = vadd.f32 %v448, %v514
      %v531 = vadd.f32 %v449, %v515
      %v532 = vadd.f32 %v450, %v516
      %v533 = vadd.f32 %v451, %v517
      %v534 = vadd.f32 %v452, %v518
      %v535 = vadd.f32 %v453, %v519
      %v536 = vadd.f32 %v454, %v520
      %v537 = vadd.f32 %v455, %v521
      %538 = vset.pattern.permute.xlu0 3
      %539 = vperm.xlu0 %538, %v275
      %v540 = vpop.permute.xlu0 %539
      %542 = vset.pattern.permute.xlu0 3
      %543 = vperm.xlu0 %542, %v276
      %v544 = vpop.permute.xlu0 %543
      %546 = vset.pattern.permute.xlu0 3
      %547 = vperm.xlu0 %546, %v277
      %v548 = vpop.permute.xlu0 %547
      %550 = vset.pattern.permute.xlu0 3
      %551 = vperm.xlu0 %550, %v278
      %v552 = vpop.permute.xlu0 %551
      %554 = vset.pattern.permute.xlu0 3
      %555 = vperm.xlu0 %554, %v279
      %v556 = vpop.permute.xlu0 %555
      %558 = vset.pattern.permute.xlu0 3
      %559 = vperm.xlu0 %558, %v280
      %v560 = vpop.permute.xlu0 %559
      %562 = vset.pattern.permute.xlu0 3
      %563 = vperm.xlu0 %562, %v281
      %v564 = vpop.permute.xlu0 %563
      %566 = vset.pattern.permute.xlu0 3
      %567 = vperm.xlu0 %566, %v282
      %v568 = vpop.permute.xlu0 %567
      %v570 = vlaneseq
      %v571 = vshrl.u32 %v570, 7
      %v572 = vsub.s32 3, %v571
      %v573 = vrot.slane %v266, %v572
      %v574 = vlaneseq
      %v575 = vshrl.u32 %v574, 7
      %v576 = vsub.s32 7, %v575
      %v577 = vrot.slane %v266, %v576
      %v580 = vlaneseq
      %v581 = vshrl.u32 %v580, 7
      %v582 = vsub.s32 3, %v581
      %v583 = vrot.slane %v573, %v582
      %v584 = vlaneseq
      %v585 = vshrl.u32 %v584, 7
      %v586 = vsub.s32 3, %v585
      %v587 = vrot.slane %v577, %v586
      %v588 = vmul.f32 %v540, %v583
      %v589 = vmul.f32 %v540, %v587
      %v590 = vmul.f32 %v544, %v583
      %v591 = vmul.f32 %v544, %v587
      %v592 = vmul.f32 %v548, %v583
      %v593 = vmul.f32 %v548, %v587
      %v594 = vmul.f32 %v552, %v583
      %v595 = vmul.f32 %v552, %v587
      %v596 = vmul.f32 %v556, %v583
      %v597 = vmul.f32 %v556, %v587
      %v598 = vmul.f32 %v560, %v583
      %v599 = vmul.f32 %v560, %v587
      %v600 = vmul.f32 %v564, %v583
      %v601 = vmul.f32 %v564, %v587
      %v602 = vmul.f32 %v568, %v583
      %v603 = vmul.f32 %v568, %v587
      %v604 = vadd.f32 %v522, %v588
      %v605 = vadd.f32 %v523, %v589
      %v606 = vadd.f32 %v524, %v590
      %v607 = vadd.f32 %v525, %v591
      %v608 = vadd.f32 %v526, %v592
      %v609 = vadd.f32 %v527, %v593
      %v610 = vadd.f32 %v528, %v594
      %v611 = vadd.f32 %v529, %v595
      %v612 = vadd.f32 %v530, %v596
      %v613 = vadd.f32 %v531, %v597
      %v614 = vadd.f32 %v532, %v598
      %v615 = vadd.f32 %v533, %v599
      %v616 = vadd.f32 %v534, %v600
      %v617 = vadd.f32 %v535, %v601
      %v618 = vadd.f32 %v536, %v602
      %v619 = vadd.f32 %v537, %v603
      %620 = vst [vmem:[%s235] sm:$0xff] %v604
      %621 = vst [vmem:[%s235 + $0x8] sm:$0xff] %v605
      %622 = vst [vmem:[%s235 + $0x10] sm:$0xff] %v606
      %623 = vst [vmem:[%s235 + $0x18] sm:$0xff] %v607
      %624 = vst [vmem:[%s235 + $0x20] sm:$0xff] %v608
      %625 = vst [vmem:[%s235 + $0x28] sm:$0xff] %v609
      %626 = vst [vmem:[%s235 + $0x30] sm:$0xff] %v610
      %627 = vst [vmem:[%s235 + $0x38] sm:$0xff] %v611
      %628 = vst [vmem:[%s235 + $0x40] sm:$0xff] %v612
      %629 = vst [vmem:[%s235 + $0x48] sm:$0xff] %v613
      %630 = vst [vmem:[%s235 + $0x50] sm:$0xff] %v614
      %631 = vst [vmem:[%s235 + $0x58] sm:$0xff] %v615
      %632 = vst [vmem:[%s235 + $0x60] sm:$0xff] %v616
      %633 = vst [vmem:[%s235 + $0x68] sm:$0xff] %v617
      %634 = vst [vmem:[%s235 + $0x70] sm:$0xff] %v618
      %635 = vst [vmem:[%s235 + $0x78] sm:$0xff] %v619
      %s636 = smul.u32 2, %s20
      %p637 = scmp.lt.s32.totalorder %s19, 1
      %s638 = scalar_select %p637, %s19, 1
      %p639 = scmp.lt.s32.totalorder %s636, 1
      %s640 = scalar_select %p639, %s636, 1
      %s641 = smul.addr %s638, 16
      %s642 = sadd.s32 %s640, %s641
      %s643 = smul.addr %s642, 8
      %s644 = scalar_lea.vmem %s4, %s643
      // Predicated region
      $region37: #{spatial_pyramid_pooling.5} parent=35 // pred_check
        %p645 = pneg %p138
      $region38: #{spatial_pyramid_pooling.5} parent=35 // pred_check_branch
        %647 = sbr.rel (%p645) target = $region40
      $region39: #{spatial_pyramid_pooling.5} parent=35 // pred_region
        %s648 = smul.u32 2, %s20
      $region40: #{spatial_pyramid_pooling.5} parent=35 // pred_fallthru
        _
    $region36: #{spatial_pyramid_pooling.5} parent=5 // pred_fallthru
      _
    %p649 = scmp.le.s32.totalorder 2, %s10
    // Predicated region
    $region41: #{spatial_pyramid_pooling.5} parent=5 // pred_check
      %p650 = pneg %p649
    $region42: #{spatial_pyramid_pooling.5} parent=5 // pred_check_branch
      %652 = sbr.rel (%p650) target = $region44
    $region43: #{spatial_pyramid_pooling.5} parent=5 // pred_region
      %s653 = ssub.s32 %s10, 2
      // Predicated region
      $region45: #{spatial_pyramid_pooling.5} parent=43 // pred_check
        %p654 = pneg %p144
      $region46: #{spatial_pyramid_pooling.5} parent=43 // pred_check_branch
        %656 = sbr.rel (%p654) target = $region48
      $region47: #{spatial_pyramid_pooling.5} parent=43 // pred_region
        %s657 = smul.u32 2, %s22
        %p658 = scmp.lt.s32.totalorder %s21, 1
        %s659 = scalar_select %p658, %s21, 1
        %p660 = scmp.lt.s32.totalorder %s657, 1
        %s661 = scalar_select %p660, %s657, 1
        %s662 = smul.addr %s659, 16
        %s663 = sadd.s32 %s661, %s662
        %s664 = smul.addr %s663, 8
        %s665 = scalar_lea.vmem %s4, %s664
      $region48: #{spatial_pyramid_pooling.5} parent=43 // pred_fallthru
        _
    $region44: #{spatial_pyramid_pooling.5} parent=5 // pred_fallthru
      _
  $region6: #{spatial_pyramid_pooling.5} parent=0 // loop_footer
    %s14 = sadd.s32 1, %s10
  $region7: #{spatial_pyramid_pooling.5} parent=0 // loop_footer_branch
    %9 = sbr.rel target = $region3
  $region8: #{spatial_pyramid_pooling.5} parent=0 // loop_exit
    _

// kernel: spatial_pyramid_pooling.6
$region0: #{spatial_pyramid_pooling.6}
  #allocation0 [shape = 'u32[]', space=smem, size = 0x4, offset = 0x4, fixed_abs, tag = 'smem constant byte address 0x4 - core index']
  #allocation1 [shape = 'u32[144,128]{1,0:T(1,128)}', space=vmem, size = 0x12000, scoped, tag = 'internal scratch']
  %s0 = inlined_call_operand.vmem [shape: f32[2,64,36], index: 0, kind: input, shape index: {}]
  %s1 = inlined_call_operand.vmem [shape: f32[64,1], index: 1, kind: input, shape index: {}]
  %s2 = inlined_call_operand.vmem [shape: f32[64,1], index: 2, kind: input, shape index: {}]
  %s3 = inlined_call_operand.vmem [shape: bf16[32,64], index: 3, kind: input, shape index: {}]
  %s4 = inlined_call_operand.vmem [shape: f32[2,32,36], index: 4, kind: output, shape index: {}]
  %s5 = sld [smem:[#allocation0]]
  $region49: #{spatial_pyramid_pooling.6} parent=0
    _
  %s7 = ssub.s32 1, %s5
  %s8 = scalar_select 0, %s7, %s5
  loop: start=0, step=1, limit=4
  $region2: #{spatial_pyramid_pooling.6} parent=0 // loop_pre_header
    _
  $region3: #{spatial_pyramid_pooling.6} parent=0 // loop_header
    %s10 = sphi 0, %s14
    %p11 = scmp.ge.s32.totalorder %s10, 4
    %s17 = sphi 0, %s29
    %s18 = sphi 0, %s25
    %s19 = sphi 0, %s17
    %s20 = sphi 0, %s18
    %s21 = sphi 0, %s19
    %s22 = sphi 0, %s20
    %s34 = sphi 0, %s36
    %s37 = sphi 0, %s34
    %s38 = sphi 0, %s37
    %s54 = sphi 0, %s38
    %s58 = sphi 0, %s58
    %s60 = sphi 0, %s58
    %s61 = sphi 0, %s60
    %s75 = sphi 0, %s61
    %s79 = sphi 0, %s79
    %s81 = sphi 0, %s79
    %s82 = sphi 0, %s81
    %s96 = sphi 0, %s82
    %s100 = sphi 0, %s100
    %s102 = sphi 0, %s100
    %s103 = sphi 0, %s102
    %s117 = sphi 0, %s103
    %s125 = sphi 0, %s127
    %s128 = sphi 0, %s125
    %s129 = sphi 0, %s128
    %s145 = sphi 0, %s129
  $region4: #{spatial_pyramid_pooling.6} parent=0 // loop_header_branch
    %13 = sbr.rel (%p11) target = $region8
  $region5: #{spatial_pyramid_pooling.6} parent=0 // loop_body
    %s15 = ssub.s32 %s10, 1
    %s16 = ssub.s32 %s10, 2
    %s23 = sadd.s32 1, %s18
    %p24 = scmp.ge.s32.totalorder %s23, 1
    %s25 = scalar_select %p24, 0, %s23
    %s26 = sadd.s32 1, %s17
    %s27 = scalar_select %p24, %s26, %s17
    %p28 = scmp.ge.s32.totalorder %s27, 2
    %s29 = scalar_select %p28, 0, %s27
    %s30 = ssub.s32 %s17, %s29
    %s31 = ssub.s32 %s18, %s25
    %s32 = sor.u32 %s30, %s31
    %p33 = scmp.eq.s32.totalorder %s32, 0
    %s35 = sadd.s32 %s34, 1
    %s36 = scalar_select %p33, %s34, %s35
    %p39 = pneg %p33
    %p40 = scmp.eq.s32.totalorder %s10, 1
    %p41 = por %p39, %p40
    %p42 = scmp.ne.s32.totalorder %s34, %s37
    %p43 = scmp.eq.s32.totalorder %s10, 0
    %p44 = por %p42, %p43
    %p45 = scmp.ne.s32.totalorder %s34, %s37
    %p46 = scmp.eq.s32.totalorder %s15, 1
    %p47 = por %p45, %p46
    %p48 = scmp.ne.s32.totalorder %s37, %s38
    %p49 = scmp.eq.s32.totalorder %s15, 0
    %p50 = por %p48, %p49
    %p51 = scmp.ne.s32.totalorder %s37, %s38
    %p52 = scmp.eq.s32.totalorder %s16, 1
    %p53 = por %p51, %p52
    %p55 = scmp.ne.s32.totalorder %s38, %s54
    %p56 = scmp.eq.s32.totalorder %s16, 0
    %p57 = por %p55, %p56
    %s59 = sadd.s32 %s58, 1
    %p62 = scmp.eq.s32.totalorder %s10, 1
    %p63 = scmp.ne.s32.totalorder %s58, %s60
    %p64 = scmp.eq.s32.totalorder %s10, 0
    %p65 = por %p63, %p64
    %p66 = scmp.ne.s32.totalorder %s58, %s60
    %p67 = scmp.eq.s32.totalorder %s15, 1
    %p68 = por %p66, %p67
    %p69 = scmp.ne.s32.totalorder %s60, %s61
    %p70 = scmp.eq.s32.totalorder %s15, 0
    %p71 = por %p69, %p70
    %p72 = scmp.ne.s32.totalorder %s60, %s61
    %p73 = scmp.eq.s32.totalorder %s16, 1
    %p74 = por %p72, %p73
    %p76 = scmp.ne.s32.totalorder %s61, %s75
    %p77 = scmp.eq.s32.totalorder %s16, 0
    %p78 = por %p76, %p77
    %s80 = sadd.s32 %s79, 1
    %p83 = scmp.eq.s32.totalorder %s10, 1
    %p84 = scmp.ne.s32.totalorder %s79, %s81
    %p85 = scmp.eq.s32.totalorder %s10, 0
    %p86 = por %p84, %p85
    %p87 = scmp.ne.s32.totalorder %s79, %s81
    %p88 = scmp.eq.s32.totalorder %s15, 1
    %p89 = por %p87, %p88
    %p90 = scmp.ne.s32.totalorder %s81, %s82
    %p91 = scmp.eq.s32.totalorder %s15, 0
    %p92 = por %p90, %p91
    %p93 = scmp.ne.s32.totalorder %s81, %s82
    %p94 = scmp.eq.s32.totalorder %s16, 1
    %p95 = por %p93, %p94
    %p97 = scmp.ne.s32.totalorder %s82, %s96
    %p98 = scmp.eq.s32.totalorder %s16, 0
    %p99 = por %p97, %p98
    %s101 = sadd.s32 %s100, 1
    %p104 = scmp.eq.s32.totalorder %s10, 1
    %p105 = scmp.ne.s32.totalorder %s100, %s102
    %p106 = scmp.eq.s32.totalorder %s10, 0
    %p107 = por %p105, %p106
    %p108 = scmp.ne.s32.totalorder %s100, %s102
    %p109 = scmp.eq.s32.totalorder %s15, 1
    %p110 = por %p108, %p109
    %p111 = scmp.ne.s32.totalorder %s102, %s103
    %p112 = scmp.eq.s32.totalorder %s15, 0
    %p113 = por %p111, %p112
    %p114 = scmp.ne.s32.totalorder %s102, %s103
    %p115 = scmp.eq.s32.totalorder %s16, 1
    %p116 = por %p114, %p115
    %p118 = scmp.ne.s32.totalorder %s103, %s117
    %p119 = scmp.eq.s32.totalorder %s16, 0
    %p120 = por %p118, %p119
    %s121 = ssub.s32 %s17, %s29
    %s122 = ssub.s32 %s18, %s25
    %s123 = sor.u32 %s121, %s122
    %p124 = scmp.eq.s32.totalorder %s123, 0
    %s126 = sadd.s32 %s125, 1
    %s127 = scalar_select %p124, %s125, %s126
    %p130 = pneg %p124
    %p131 = scmp.eq.s32.totalorder %s10, 1
    %p132 = por %p130, %p131
    %p133 = scmp.ne.s32.totalorder %s125, %s128
    %p134 = scmp.eq.s32.totalorder %s10, 0
    %p135 = por %p133, %p134
    %p136 = scmp.ne.s32.totalorder %s125, %s128
    %p137 = scmp.eq.s32.totalorder %s15, 1
    %p138 = por %p136, %p137
    %p139 = scmp.ne.s32.totalorder %s128, %s129
    %p140 = scmp.eq.s32.totalorder %s15, 0
    %p141 = por %p139, %p140
    %p142 = scmp.ne.s32.totalorder %s128, %s129
    %p143 = scmp.eq.s32.totalorder %s16, 1
    %p144 = por %p142, %p143
    %p146 = scmp.ne.s32.totalorder %s129, %s145
    %p147 = scmp.eq.s32.totalorder %s16, 0
    %p148 = por %p146, %p147
    %p149 = scmp.le.s32.totalorder 1, %s10
    %p150 = scmp.lt.s32.totalorder %s10, 3
    %p151 = pnand %p149, %p150
    %p152 = pneg %p151
    // Predicated region
    $region9: #{spatial_pyramid_pooling.6} parent=5 // pred_check
      _
    $region10: #{spatial_pyramid_pooling.6} parent=5 // pred_check_branch
      %154 = sbr.rel (%p151) target = $region12
    $region11: #{spatial_pyramid_pooling.6} parent=5 // pred_region
      %s155 = ssub.s32 %s10, 1
      // Predicated region
      $region13: #{spatial_pyramid_pooling.6} parent=11 // pred_check
        %p156 = pneg %p71
      $region14: #{spatial_pyramid_pooling.6} parent=11 // pred_check_branch
        %158 = sbr.rel (%p156) target = $region16
      $region15: #{spatial_pyramid_pooling.6} parent=11 // pred_region
        _
      $region16: #{spatial_pyramid_pooling.6} parent=11 // pred_fallthru
        _
      // Predicated region
      $region17: #{spatial_pyramid_pooling.6} parent=11 // pred_check
        %p159 = pneg %p92
      $region18: #{spatial_pyramid_pooling.6} parent=11 // pred_check_branch
        %161 = sbr.rel (%p159) target = $region20
      $region19: #{spatial_pyramid_pooling.6} parent=11 // pred_region
        _
      $region20: #{spatial_pyramid_pooling.6} parent=11 // pred_fallthru
        _
      // Predicated region
      $region21: #{spatial_pyramid_pooling.6} parent=11 // pred_check
        %p162 = pneg %p113
      $region22: #{spatial_pyramid_pooling.6} parent=11 // pred_check_branch
        %164 = sbr.rel (%p162) target = $region24
      $region23: #{spatial_pyramid_pooling.6} parent=11 // pred_region
        _
      $region24: #{spatial_pyramid_pooling.6} parent=11 // pred_fallthru
        _
    $region12: #{spatial_pyramid_pooling.6} parent=5 // pred_fallthru
      _
    %p165 = scmp.lt.s32.totalorder %s10, 2
    // Predicated region
    $region25: #{spatial_pyramid_pooling.6} parent=5 // pred_check
      %p166 = pneg %p165
    $region26: #{spatial_pyramid_pooling.6} parent=5 // pred_check_branch
      %168 = sbr.rel (%p166) target = $region28
    $region27: #{spatial_pyramid_pooling.6} parent=5 // pred_region
      // Predicated region
      $region29: #{spatial_pyramid_pooling.6} parent=27 // pred_check
        %p169 = pneg %p44
      $region30: #{spatial_pyramid_pooling.6} parent=27 // pred_check_branch
        %171 = sbr.rel (%p169) target = $region32
      $region31: #{spatial_pyramid_pooling.6} parent=27 // pred_region
        %p172 = scmp.lt.s32.totalorder %s17, 1
        %s173 = scalar_select %p172, %s17, 1
        %p174 = scmp.lt.s32.totalorder %s18, 0
        %s175 = scalar_select %p174, %s18, 0
        %s176 = smul.addr %s173, 8
        %s177 = sadd.s32 %s175, %s176
        %s178 = smul.addr %s177, 8
        %s179 = scalar_lea.vmem %s0, %s178
      $region32: #{spatial_pyramid_pooling.6} parent=27 // pred_fallthru
        _
    $region28: #{spatial_pyramid_pooling.6} parent=5 // pred_fallthru
      _
    %p180 = scmp.le.s32.totalorder 1, %s10
    %p181 = scmp.lt.s32.totalorder %s10, 3
    %p182 = pnand %p180, %p181
    %p183 = pneg %p182
    // Predicated region
    $region33: #{spatial_pyramid_pooling.6} parent=5 // pred_check
      _
    $region34: #{spatial_pyramid_pooling.6} parent=5 // pred_check_branch
      %185 = sbr.rel (%p182) target = $region36
    $region35: #{spatial_pyramid_pooling.6} parent=5 // pred_region
      %s186 = ssub.s32 %s10, 1
      %p187 = scmp.lt.s32.totalorder %s19, 1
      %s188 = scalar_select %p187, %s19, 1
      %p189 = scmp.lt.s32.totalorder %s20, 0
      %s190 = scalar_select %p189, %s20, 0
      %s191 = smul.addr %s188, 8
      %s192 = sadd.s32 %s190, %s191
      %s193 = smul.addr %s192, 8
      %s194 = scalar_lea.vmem %s0, %s193
      %p195 = pneg %p50
      %p196 = pneg %p47
      %p197 = pneg %p71
      %p198 = pneg %p68
      %p199 = pneg %p92
      %p200 = pneg %p89
      %p201 = pneg %p113
      %p202 = pneg %p110
      %p203 = pneg %p141
      %p204 = pneg %p138
      %p205 = scmp.lt.s32.totalorder %s19, 1
      %s206 = scalar_select %p205, %s19, 1
      %p207 = scmp.lt.s32.totalorder %s20, 0
      %s208 = scalar_select %p207, %s20, 0
      %s209 = smul.addr %s206, 4
      %s210 = sadd.s32 %s208, %s209
      %s211 = smul.addr %s210, 8
      %s212 = scalar_lea.vmem %s4, %s211
      %p213 = scmp.lt.s32.totalorder %s19, 1
      %s214 = scalar_select %p213, %s19, 1
      %p215 = scmp.lt.s32.totalorder %s20, 0
      %s216 = scalar_select %p215, %s20, 0
      %s217 = smul.addr %s214, 8
      %s218 = sadd.s32 %s216, %s217
      %s219 = smul.addr %s218, 8
      %s220 = scalar_lea.vmem %s0, %s219
      %p221 = scmp.lt.s32.totalorder %s19, 1
      %s222 = scalar_select %p221, %s19, 1
      %p223 = scmp.lt.s32.totalorder %s20, 0
      %s224 = scalar_select %p223, %s20, 0
      %s225 = smul.addr %s222, 4
      %s226 = sadd.s32 %s224, %s225
      %s227 = smul.addr %s226, 8
      %s228 = scalar_lea.vmem %s4, %s227
      %v230 = vld [vmem:[%s220] sm:$0xff]
      %v231 = vld [vmem:[%s220 + $0x8] sm:$0xff]
      %v232 = vld [vmem:[%s220 + $0x10] sm:$0xff]
      %v233 = vld [vmem:[%s220 + $0x18] sm:$0xff]
      %v234 = vld [vmem:[%s220 + $0x20] sm:$0xff]
      %v235 = vld [vmem:[%s220 + $0x28] sm:$0xff]
      %v236 = vld [vmem:[%s220 + $0x30] sm:$0xff]
      %v237 = vld [vmem:[%s220 + $0x38] sm:$0xff]
      %v238 = vld [vmem:[%s1] sm:$0xff]
      %v239 = vld [vmem:[%s1 + $0x8] sm:$0xff]
      %v240 = vld [vmem:[%s1 + $0x10] sm:$0xff]
      %v241 = vld [vmem:[%s1 + $0x18] sm:$0xff]
      %v242 = vld [vmem:[%s1 + $0x20] sm:$0xff]
      %v243 = vld [vmem:[%s1 + $0x28] sm:$0xff]
      %v244 = vld [vmem:[%s1 + $0x30] sm:$0xff]
      %v245 = vld [vmem:[%s1 + $0x38] sm:$0xff]
      %247 = vset.pattern.permute.xlu0 0
      %248 = vperm.xlu0 %247, %v238
      %v249 = vpop.permute.xlu0 %248
      %252 = vset.pattern.permute.xlu0 0
      %253 = vperm.xlu0 %252, %v239
      %v254 = vpop.permute.xlu0 %253
      %257 = vset.pattern.permute.xlu0 0
      %258 = vperm.xlu0 %257, %v240
      %v259 = vpop.permute.xlu0 %258
      %262 = vset.pattern.permute.xlu0 0
      %263 = vperm.xlu0 %262, %v241
      %v264 = vpop.permute.xlu0 %263
      %267 = vset.pattern.permute.xlu0 0
      %268 = vperm.xlu0 %267, %v242
      %v269 = vpop.permute.xlu0 %268
      %272 = vset.pattern.permute.xlu0 0
      %273 = vperm.xlu0 %272, %v243
      %v274 = vpop.permute.xlu0 %273
      %277 = vset.pattern.permute.xlu0 0
      %278 = vperm.xlu0 %277, %v244
      %v279 = vpop.permute.xlu0 %278
      %282 = vset.pattern.permute.xlu0 0
      %283 = vperm.xlu0 %282, %v245
      %v284 = vpop.permute.xlu0 %283
      %v286 = vmul.f32 %v230, %v249
      %v287 = vmul.f32 %v231, %v254
      %v288 = vmul.f32 %v232, %v259
      %v289 = vmul.f32 %v233, %v264
      %v290 = vmul.f32 %v234, %v269
      %v291 = vmul.f32 %v235, %v274
      %v292 = vmul.f32 %v236, %v279
      %v293 = vmul.f32 %v237, %v284
      %v294 = vld [vmem:[%s2] sm:$0xff]
      %v295 = vld [vmem:[%s2 + $0x8] sm:$0xff]
      %v296 = vld [vmem:[%s2 + $0x10] sm:$0xff]
      %v297 = vld [vmem:[%s2 + $0x18] sm:$0xff]
      %v298 = vld [vmem:[%s2 + $0x20] sm:$0xff]
      %v299 = vld [vmem:[%s2 + $0x28] sm:$0xff]
      %v300 = vld [vmem:[%s2 + $0x30] sm:$0xff]
      %v301 = vld [vmem:[%s2 + $0x38] sm:$0xff]
      %303 = vset.pattern.permute.xlu0 0
      %304 = vperm.xlu0 %303, %v294
      %v305 = vpop.permute.xlu0 %304
      %308 = vset.pattern.permute.xlu0 0
      %309 = vperm.xlu0 %308, %v295
      %v310 = vpop.permute.xlu0 %309
      %313 = vset.pattern.permute.xlu0 0
      %314 = vperm.xlu0 %313, %v296
      %v315 = vpop.permute.xlu0 %314
      %318 = vset.pattern.permute.xlu0 0
      %319 = vperm.xlu0 %318, %v297
      %v320 = vpop.permute.xlu0 %319
      %323 = vset.pattern.permute.xlu0 0
      %324 = vperm.xlu0 %323, %v298
      %v325 = vpop.permute.xlu0 %324
      %328 = vset.pattern.permute.xlu0 0
      %329 = vperm.xlu0 %328, %v299
      %v330 = vpop.permute.xlu0 %329
      %333 = vset.pattern.permute.xlu0 0
      %334 = vperm.xlu0 %333, %v300
      %v335 = vpop.permute.xlu0 %334
      %338 = vset.pattern.permute.xlu0 0
      %339 = vperm.xlu0 %338, %v301
      %v340 = vpop.permute.xlu0 %339
      %v342 = vadd.f32 %v286, %v305
      %v343 = vadd.f32 %v287, %v310
      %v344 = vadd.f32 %v288, %v315
      %v345 = vadd.f32 %v289, %v320
      %v346 = vadd.f32 %v290, %v325
      %v347 = vadd.f32 %v291, %v330
      %v348 = vadd.f32 %v292, %v335
      %v349 = vadd.f32 %v293, %v340
      %v350 = vmax.f32 %v342, 0.0
      %v351 = vmax.f32 %v343, 0.0
      %v352 = vmax.f32 %v344, 0.0
      %v353 = vmax.f32 %v345, 0.0
      %v354 = vmax.f32 %v346, 0.0
      %v355 = vmax.f32 %v347, 0.0
      %v356 = vmax.f32 %v348, 0.0
      %v357 = vmax.f32 %v349, 0.0
      %v358 = vld [vmem:[%s3] sm:$0xf]
      %v359 = vld [vmem:[%s3 + $0x4] sm:$0xf]
      %v360 = vld [vmem:[%s3 + $0x8] sm:$0xf]
      %v361 = vld [vmem:[%s3 + $0xc] sm:$0xf]
      %v362 = vpack.c.bf16 %v351, %v350
      %v363 = vpack.c.bf16 %v353, %v352
      %v364 = vpack.c.bf16 %v355, %v354
      %v365 = vpack.c.bf16 %v357, %v356
      %v370 = vunpack.c.l.b16 %v358
      %v371 = vunpack.c.l.b16 %v359
      %v372 = vunpack.c.l.b16 %v360
      %v373 = vunpack.c.l.b16 %v361
      %v374 = vpack.c.b16 %v371, %v370
      %v375 = vpack.c.b16 %v373, %v372
      %vm376 = vcmask 523264
      %v378 = vsel %vm376, %v374, 0
      %v381 = vsel %vm376, %v375, 0
      %383 = vmatprep.subr.bf16.mxu0 0
      %384 = vmatpush1.bf16.msra.mxu0 %v362
      %385 = vmatprep.subr.bf16.mxu0 0
      %386 = vmatpush1.bf16.msra.mxu0 %v363
      %387 = vmatprep.subr.bf16.mxu0 0
      %388 = vmatpush1.bf16.msra.mxu0 %v364
      %389 = vmatprep.subr.bf16.mxu0 0
      %390 = vmatpush1.bf16.msra.mxu0 %v365
      %391 = vmatprep.subr.bf16.mxu0 0
      %392 = vmatpush1.bf16.msra.mxu0 0
      %393 = vmatprep.subr.bf16.mxu0 0
      %394 = vmatpush1.bf16.msra.mxu0 0
      %395 = vmatprep.subr.bf16.mxu0 0
      %396 = vmatpush1.bf16.msra.mxu0 0
      %397 = vmatprep.subr.bf16.mxu0 0
      %398 = vmatpush1.bf16.msra.mxu0 0
      %399 = vmatprep.subr.bf16.mxu0 0
      %400 = vmatpush1.bf16.msra.mxu0 0
      %401 = vmatprep.subr.bf16.mxu0 0
      %402 = vmatpush1.bf16.msra.mxu0 0
      %403 = vmatprep.subr.bf16.mxu0 0
      %404 = vmatpush1.bf16.msra.mxu0 0
      %405 = vmatprep.subr.bf16.mxu0 0
      %406 = vmatpush1.bf16.msra.mxu0 0
      %407 = vmatprep.subr.bf16.mxu0 0
      %408 = vmatpush1.bf16.msra.mxu0 0
      %409 = vmatprep.subr.bf16.mxu0 0
      %410 = vmatpush1.bf16.msra.mxu0 0
      %411 = vmatprep.subr.bf16.mxu0 0
      %412 = vmatpush1.bf16.msra.mxu0 0
      %413 = vmatprep.subr.bf16.mxu0 0
      %414 = vmatpush1.bf16.msra.mxu0 0
      %415 = vmatprep.mubr.bf16.mxu0 0
      %416 = vmatmul.mubr.bf16.gmra.mrb[0].mxu0 %v378
      %v417 = vpop.f32.mrb[0].mxu0
      %v418 = vadd.f32 0.0, %v417
      %v419 = vpop.f32.mrb[0].mxu0
      %v420 = vpop.f32.mrb[0].mxu0
      %v421 = vadd.f32 0.0, %v420
      %v422 = vpop.f32.mrb[0].mxu0
      %423 = vmatprep.mubr.bf16.mxu0 0
      %424 = vmatmul.mubr.bf16.gmra.mrb[0].mxu0 %v381
      %v425 = vpop.f32.mrb[0].mxu0
      %v426 = vadd.f32 0.0, %v425
      %v427 = vpop.f32.mrb[0].mxu0
      %v428 = vpop.f32.mrb[0].mxu0
      %v429 = vadd.f32 0.0, %v428
      %v430 = vpop.f32.mrb[0].mxu0
      %431 = vdwg.mxu0
      %vm432 = vcmask 293888
      %433 = vst.msk [vmem:[%s228] sm:$0xff] %vm432, %v418
      %434 = vst.msk [vmem:[%s228 + $0x8] sm:$0xff] %vm432, %v421
      %435 = vst.msk [vmem:[%s228 + $0x10] sm:$0xff] %vm432, %v426
      %436 = vst.msk [vmem:[%s228 + $0x18] sm:$0xff] %vm432, %v429
      %p437 = scmp.lt.s32.totalorder %s19, 1
      %s438 = scalar_select %p437, %s19, 1
      %p439 = scmp.lt.s32.totalorder %s20, 0
      %s440 = scalar_select %p439, %s20, 0
      %s441 = smul.addr %s438, 4
      %s442 = sadd.s32 %s440, %s441
      %s443 = smul.addr %s442, 8
      %s444 = scalar_lea.vmem %s4, %s443
      // Predicated region
      $region37: #{spatial_pyramid_pooling.6} parent=35 // pred_check
        %p445 = pneg %p138
      $region38: #{spatial_pyramid_pooling.6} parent=35 // pred_check_branch
        %447 = sbr.rel (%p445) target = $region40
      $region39: #{spatial_pyramid_pooling.6} parent=35 // pred_region
        _
      $region40: #{spatial_pyramid_pooling.6} parent=35 // pred_fallthru
        _
    $region36: #{spatial_pyramid_pooling.6} parent=5 // pred_fallthru
      _
    %p448 = scmp.le.s32.totalorder 2, %s10
    // Predicated region
    $region41: #{spatial_pyramid_pooling.6} parent=5 // pred_check
      %p449 = pneg %p448
    $region42: #{spatial_pyramid_pooling.6} parent=5 // pred_check_branch
      %451 = sbr.rel (%p449) target = $region44
    $region43: #{spatial_pyramid_pooling.6} parent=5 // pred_region
      %s452 = ssub.s32 %s10, 2
      // Predicated region
      $region45: #{spatial_pyramid_pooling.6} parent=43 // pred_check
        %p453 = pneg %p144
      $region46: #{spatial_pyramid_pooling.6} parent=43 // pred_check_branch
        %455 = sbr.rel (%p453) target = $region48
      $region47: #{spatial_pyramid_pooling.6} parent=43 // pred_region
        %p456 = scmp.lt.s32.totalorder %s21, 1
        %s457 = scalar_select %p456, %s21, 1
        %p458 = scmp.lt.s32.totalorder %s22, 0
        %s459 = scalar_select %p458, %s22, 0
        %s460 = smul.addr %s457, 4
        %s461 = sadd.s32 %s459, %s460
        %s462 = smul.addr %s461, 8
        %s463 = scalar_lea.vmem %s4, %s462
      $region48: #{spatial_pyramid_pooling.6} parent=43 // pred_fallthru
        _
    $region44: #{spatial_pyramid_pooling.6} parent=5 // pred_fallthru
      _
  $region6: #{spatial_pyramid_pooling.6} parent=0 // loop_footer
    %s14 = sadd.s32 1, %s10
  $region7: #{spatial_pyramid_pooling.6} parent=0 // loop_footer_branch
    %9 = sbr.rel target = $region3
  $region8: #{spatial_pyramid_pooling.6} parent=0 // loop_exit
    _

// kernel: spatial_pyramid_pooling.7
$region0: #{spatial_pyramid_pooling.7}
  #allocation0 [shape = 'u32[]', space=smem, size = 0x4, offset = 0x4, fixed_abs, tag = 'smem constant byte address 0x4 - core index']
  #allocation1 [shape = 'u32[144,128]{1,0:T(1,128)}', space=vmem, size = 0x12000, scoped, tag = 'internal scratch']
  %s0 = inlined_call_operand.vmem [shape: f32[2,64,9], index: 0, kind: input, shape index: {}]
  %s1 = inlined_call_operand.vmem [shape: f32[64,1], index: 1, kind: input, shape index: {}]
  %s2 = inlined_call_operand.vmem [shape: f32[64,1], index: 2, kind: input, shape index: {}]
  %s3 = inlined_call_operand.vmem [shape: bf16[32,64], index: 3, kind: input, shape index: {}]
  %s4 = inlined_call_operand.vmem [shape: f32[2,32,9], index: 4, kind: output, shape index: {}]
  %s5 = sld [smem:[#allocation0]]
  $region49: #{spatial_pyramid_pooling.7} parent=0
    _
  %s7 = ssub.s32 1, %s5
  %s8 = scalar_select 0, %s7, %s5
  loop: start=0, step=1, limit=4
  $region2: #{spatial_pyramid_pooling.7} parent=0 // loop_pre_header
    _
  $region3: #{spatial_pyramid_pooling.7} parent=0 // loop_header
    %s10 = sphi 0, %s14
    %p11 = scmp.ge.s32.totalorder %s10, 4
    %s17 = sphi 0, %s29
    %s18 = sphi 0, %s25
    %s19 = sphi 0, %s17
    %s20 = sphi 0, %s18
    %s21 = sphi 0, %s19
    %s22 = sphi 0, %s20
    %s34 = sphi 0, %s36
    %s37 = sphi 0, %s34
    %s38 = sphi 0, %s37
    %s54 = sphi 0, %s38
    %s58 = sphi 0, %s58
    %s60 = sphi 0, %s58
    %s61 = sphi 0, %s60
    %s75 = sphi 0, %s61
    %s79 = sphi 0, %s79
    %s81 = sphi 0, %s79
    %s82 = sphi 0, %s81
    %s96 = sphi 0, %s82
    %s100 = sphi 0, %s100
    %s102 = sphi 0, %s100
    %s103 = sphi 0, %s102
    %s117 = sphi 0, %s103
    %s125 = sphi 0, %s127
    %s128 = sphi 0, %s125
    %s129 = sphi 0, %s128
    %s145 = sphi 0, %s129
  $region4: #{spatial_pyramid_pooling.7} parent=0 // loop_header_branch
    %13 = sbr.rel (%p11) target = $region8
  $region5: #{spatial_pyramid_pooling.7} parent=0 // loop_body
    %s15 = ssub.s32 %s10, 1
    %s16 = ssub.s32 %s10, 2
    %s23 = sadd.s32 1, %s18
    %p24 = scmp.ge.s32.totalorder %s23, 1
    %s25 = scalar_select %p24, 0, %s23
    %s26 = sadd.s32 1, %s17
    %s27 = scalar_select %p24, %s26, %s17
    %p28 = scmp.ge.s32.totalorder %s27, 2
    %s29 = scalar_select %p28, 0, %s27
    %s30 = ssub.s32 %s17, %s29
    %s31 = ssub.s32 %s18, %s25
    %s32 = sor.u32 %s30, %s31
    %p33 = scmp.eq.s32.totalorder %s32, 0
    %s35 = sadd.s32 %s34, 1
    %s36 = scalar_select %p33, %s34, %s35
    %p39 = pneg %p33
    %p40 = scmp.eq.s32.totalorder %s10, 1
    %p41 = por %p39, %p40
    %p42 = scmp.ne.s32.totalorder %s34, %s37
    %p43 = scmp.eq.s32.totalorder %s10, 0
    %p44 = por %p42, %p43
    %p45 = scmp.ne.s32.totalorder %s34, %s37
    %p46 = scmp.eq.s32.totalorder %s15, 1
    %p47 = por %p45, %p46
    %p48 = scmp.ne.s32.totalorder %s37, %s38
    %p49 = scmp.eq.s32.totalorder %s15, 0
    %p50 = por %p48, %p49
    %p51 = scmp.ne.s32.totalorder %s37, %s38
    %p52 = scmp.eq.s32.totalorder %s16, 1
    %p53 = por %p51, %p52
    %p55 = scmp.ne.s32.totalorder %s38, %s54
    %p56 = scmp.eq.s32.totalorder %s16, 0
    %p57 = por %p55, %p56
    %s59 = sadd.s32 %s58, 1
    %p62 = scmp.eq.s32.totalorder %s10, 1
    %p63 = scmp.ne.s32.totalorder %s58, %s60
    %p64 = scmp.eq.s32.totalorder %s10, 0
    %p65 = por %p63, %p64
    %p66 = scmp.ne.s32.totalorder %s58, %s60
    %p67 = scmp.eq.s32.totalorder %s15, 1
    %p68 = por %p66, %p67
    %p69 = scmp.ne.s32.totalorder %s60, %s61
    %p70 = scmp.eq.s32.totalorder %s15, 0
    %p71 = por %p69, %p70
    %p72 = scmp.ne.s32.totalorder %s60, %s61
    %p73 = scmp.eq.s32.totalorder %s16, 1
    %p74 = por %p72, %p73
    %p76 = scmp.ne.s32.totalorder %s61, %s75
    %p77 = scmp.eq.s32.totalorder %s16, 0
    %p78 = por %p76, %p77
    %s80 = sadd.s32 %s79, 1
    %p83 = scmp.eq.s32.totalorder %s10, 1
    %p84 = scmp.ne.s32.totalorder %s79, %s81
    %p85 = scmp.eq.s32.totalorder %s10, 0
    %p86 = por %p84, %p85
    %p87 = scmp.ne.s32.totalorder %s79, %s81
    %p88 = scmp.eq.s32.totalorder %s15, 1
    %p89 = por %p87, %p88
    %p90 = scmp.ne.s32.totalorder %s81, %s82
    %p91 = scmp.eq.s32.totalorder %s15, 0
    %p92 = por %p90, %p91
    %p93 = scmp.ne.s32.totalorder %s81, %s82
    %p94 = scmp.eq.s32.totalorder %s16, 1
    %p95 = por %p93, %p94
    %p97 = scmp.ne.s32.totalorder %s82, %s96
    %p98 = scmp.eq.s32.totalorder %s16, 0
    %p99 = por %p97, %p98
    %s101 = sadd.s32 %s100, 1
    %p104 = scmp.eq.s32.totalorder %s10, 1
    %p105 = scmp.ne.s32.totalorder %s100, %s102
    %p106 = scmp.eq.s32.totalorder %s10, 0
    %p107 = por %p105, %p106
    %p108 = scmp.ne.s32.totalorder %s100, %s102
    %p109 = scmp.eq.s32.totalorder %s15, 1
    %p110 = por %p108, %p109
    %p111 = scmp.ne.s32.totalorder %s102, %s103
    %p112 = scmp.eq.s32.totalorder %s15, 0
    %p113 = por %p111, %p112
    %p114 = scmp.ne.s32.totalorder %s102, %s103
    %p115 = scmp.eq.s32.totalorder %s16, 1
    %p116 = por %p114, %p115
    %p118 = scmp.ne.s32.totalorder %s103, %s117
    %p119 = scmp.eq.s32.totalorder %s16, 0
    %p120 = por %p118, %p119
    %s121 = ssub.s32 %s17, %s29
    %s122 = ssub.s32 %s18, %s25
    %s123 = sor.u32 %s121, %s122
    %p124 = scmp.eq.s32.totalorder %s123, 0
    %s126 = sadd.s32 %s125, 1
    %s127 = scalar_select %p124, %s125, %s126
    %p130 = pneg %p124
    %p131 = scmp.eq.s32.totalorder %s10, 1
    %p132 = por %p130, %p131
    %p133 = scmp.ne.s32.totalorder %s125, %s128
    %p134 = scmp.eq.s32.totalorder %s10, 0
    %p135 = por %p133, %p134
    %p136 = scmp.ne.s32.totalorder %s125, %s128
    %p137 = scmp.eq.s32.totalorder %s15, 1
    %p138 = por %p136, %p137
    %p139 = scmp.ne.s32.totalorder %s128, %s129
    %p140 = scmp.eq.s32.totalorder %s15, 0
    %p141 = por %p139, %p140
    %p142 = scmp.ne.s32.totalorder %s128, %s129
    %p143 = scmp.eq.s32.totalorder %s16, 1
    %p144 = por %p142, %p143
    %p146 = scmp.ne.s32.totalorder %s129, %s145
    %p147 = scmp.eq.s32.totalorder %s16, 0
    %p148 = por %p146, %p147
    %p149 = scmp.le.s32.totalorder 1, %s10
    %p150 = scmp.lt.s32.totalorder %s10, 3
    %p151 = pnand %p149, %p150
    %p152 = pneg %p151
    // Predicated region
    $region9: #{spatial_pyramid_pooling.7} parent=5 // pred_check
      _
    $region10: #{spatial_pyramid_pooling.7} parent=5 // pred_check_branch
      %154 = sbr.rel (%p151) target = $region12
    $region11: #{spatial_pyramid_pooling.7} parent=5 // pred_region
      %s155 = ssub.s32 %s10, 1
      // Predicated region
      $region13: #{spatial_pyramid_pooling.7} parent=11 // pred_check
        %p156 = pneg %p71
      $region14: #{spatial_pyramid_pooling.7} parent=11 // pred_check_branch
        %158 = sbr.rel (%p156) target = $region16
      $region15: #{spatial_pyramid_pooling.7} parent=11 // pred_region
        _
      $region16: #{spatial_pyramid_pooling.7} parent=11 // pred_fallthru
        _
      // Predicated region
      $region17: #{spatial_pyramid_pooling.7} parent=11 // pred_check
        %p159 = pneg %p92
      $region18: #{spatial_pyramid_pooling.7} parent=11 // pred_check_branch
        %161 = sbr.rel (%p159) target = $region20
      $region19: #{spatial_pyramid_pooling.7} parent=11 // pred_region
        _
      $region20: #{spatial_pyramid_pooling.7} parent=11 // pred_fallthru
        _
      // Predicated region
      $region21: #{spatial_pyramid_pooling.7} parent=11 // pred_check
        %p162 = pneg %p113
      $region22: #{spatial_pyramid_pooling.7} parent=11 // pred_check_branch
        %164 = sbr.rel (%p162) target = $region24
      $region23: #{spatial_pyramid_pooling.7} parent=11 // pred_region
        _
      $region24: #{spatial_pyramid_pooling.7} parent=11 // pred_fallthru
        _
    $region12: #{spatial_pyramid_pooling.7} parent=5 // pred_fallthru
      _
    %p165 = scmp.lt.s32.totalorder %s10, 2
    // Predicated region
    $region25: #{spatial_pyramid_pooling.7} parent=5 // pred_check
      %p166 = pneg %p165
    $region26: #{spatial_pyramid_pooling.7} parent=5 // pred_check_branch
      %168 = sbr.rel (%p166) target = $region28
    $region27: #{spatial_pyramid_pooling.7} parent=5 // pred_region
      // Predicated region
      $region29: #{spatial_pyramid_pooling.7} parent=27 // pred_check
        %p169 = pneg %p44
      $region30: #{spatial_pyramid_pooling.7} parent=27 // pred_check_branch
        %171 = sbr.rel (%p169) target = $region32
      $region31: #{spatial_pyramid_pooling.7} parent=27 // pred_region
        %p172 = scmp.lt.s32.totalorder %s17, 1
        %s173 = scalar_select %p172, %s17, 1
        %p174 = scmp.lt.s32.totalorder %s18, 0
        %s175 = scalar_select %p174, %s18, 0
        %s176 = smul.addr %s173, 8
        %s177 = sadd.s32 %s175, %s176
        %s178 = smul.addr %s177, 8
        %s179 = scalar_lea.vmem %s0, %s178
      $region32: #{spatial_pyramid_pooling.7} parent=27 // pred_fallthru
        _
    $region28: #{spatial_pyramid_pooling.7} parent=5 // pred_fallthru
      _
    %p180 = scmp.le.s32.totalorder 1, %s10
    %p181 = scmp.lt.s32.totalorder %s10, 3
    %p182 = pnand %p180, %p181
    %p183 = pneg %p182
    // Predicated region
    $region33: #{spatial_pyramid_pooling.7} parent=5 // pred_check
      _
    $region34: #{spatial_pyramid_pooling.7} parent=5 // pred_check_branch
      %185 = sbr.rel (%p182) target = $region36
    $region35: #{spatial_pyramid_pooling.7} parent=5 // pred_region
      %s186 = ssub.s32 %s10, 1
      %p187 = scmp.lt.s32.totalorder %s19, 1
      %s188 = scalar_select %p187, %s19, 1
      %p189 = scmp.lt.s32.totalorder %s20, 0
      %s190 = scalar_select %p189, %s20, 0
      %s191 = smul.addr %s188, 8
      %s192 = sadd.s32 %s190, %s191
      %s193 = smul.addr %s192, 8
      %s194 = scalar_lea.vmem %s0, %s193
      %p195 = pneg %p50
      %p196 = pneg %p47
      %p197 = pneg %p71
      %p198 = pneg %p68
      %p199 = pneg %p92
      %p200 = pneg %p89
      %p201 = pneg %p113
      %p202 = pneg %p110
      %p203 = pneg %p141
      %p204 = pneg %p138
      %p205 = scmp.lt.s32.totalorder %s19, 1
      %s206 = scalar_select %p205, %s19, 1
      %p207 = scmp.lt.s32.totalorder %s20, 0
      %s208 = scalar_select %p207, %s20, 0
      %s209 = smul.addr %s206, 4
      %s210 = sadd.s32 %s208, %s209
      %s211 = smul.addr %s210, 8
      %s212 = scalar_lea.vmem %s4, %s211
      %p213 = scmp.lt.s32.totalorder %s19, 1
      %s214 = scalar_select %p213, %s19, 1
      %p215 = scmp.lt.s32.totalorder %s20, 0
      %s216 = scalar_select %p215, %s20, 0
      %s217 = smul.addr %s214, 8
      %s218 = sadd.s32 %s216, %s217
      %s219 = smul.addr %s218, 8
      %s220 = scalar_lea.vmem %s0, %s219
      %p221 = scmp.lt.s32.totalorder %s19, 1
      %s222 = scalar_select %p221, %s19, 1
      %p223 = scmp.lt.s32.totalorder %s20, 0
      %s224 = scalar_select %p223, %s20, 0
      %s225 = smul.addr %s222, 4
      %s226 = sadd.s32 %s224, %s225
      %s227 = smul.addr %s226, 8
      %s228 = scalar_lea.vmem %s4, %s227
      %v230 = vld [vmem:[%s220] sm:$0xff]
      %v231 = vld [vmem:[%s220 + $0x8] sm:$0xff]
      %v232 = vld [vmem:[%s220 + $0x10] sm:$0xff]
      %v233 = vld [vmem:[%s220 + $0x18] sm:$0xff]
      %v234 = vld [vmem:[%s220 + $0x20] sm:$0xff]
      %v235 = vld [vmem:[%s220 + $0x28] sm:$0xff]
      %v236 = vld [vmem:[%s220 + $0x30] sm:$0xff]
      %v237 = vld [vmem:[%s220 + $0x38] sm:$0xff]
      %v238 = vld [vmem:[%s1] sm:$0xff]
      %v239 = vld [vmem:[%s1 + $0x8] sm:$0xff]
      %v240 = vld [vmem:[%s1 + $0x10] sm:$0xff]
      %v241 = vld [vmem:[%s1 + $0x18] sm:$0xff]
      %v242 = vld [vmem:[%s1 + $0x20] sm:$0xff]
      %v243 = vld [vmem:[%s1 + $0x28] sm:$0xff]
      %v244 = vld [vmem:[%s1 + $0x30] sm:$0xff]
      %v245 = vld [vmem:[%s1 + $0x38] sm:$0xff]
      %247 = vset.pattern.permute.xlu0 0
      %248 = vperm.xlu0 %247, %v238
      %v249 = vpop.permute.xlu0 %248
      %252 = vset.pattern.permute.xlu0 0
      %253 = vperm.xlu0 %252, %v239
      %v254 = vpop.permute.xlu0 %253
      %257 = vset.pattern.permute.xlu0 0
      %258 = vperm.xlu0 %257, %v240
      %v259 = vpop.permute.xlu0 %258
      %262 = vset.pattern.permute.xlu0 0
      %263 = vperm.xlu0 %262, %v241
      %v264 = vpop.permute.xlu0 %263
      %267 = vset.pattern.permute.xlu0 0
      %268 = vperm.xlu0 %267, %v242
      %v269 = vpop.permute.xlu0 %268
      %272 = vset.pattern.permute.xlu0 0
      %273 = vperm.xlu0 %272, %v243
      %v274 = vpop.permute.xlu0 %273
      %277 = vset.pattern.permute.xlu0 0
      %278 = vperm.xlu0 %277, %v244
      %v279 = vpop.permute.xlu0 %278
      %282 = vset.pattern.permute.xlu0 0
      %283 = vperm.xlu0 %282, %v245
      %v284 = vpop.permute.xlu0 %283
      %v286 = vmul.f32 %v230, %v249
      %v287 = vmul.f32 %v231, %v254
      %v288 = vmul.f32 %v232, %v259
      %v289 = vmul.f32 %v233, %v264
      %v290 = vmul.f32 %v234, %v269
      %v291 = vmul.f32 %v235, %v274
      %v292 = vmul.f32 %v236, %v279
      %v293 = vmul.f32 %v237, %v284
      %v294 = vld [vmem:[%s2] sm:$0xff]
      %v295 = vld [vmem:[%s2 + $0x8] sm:$0xff]
      %v296 = vld [vmem:[%s2 + $0x10] sm:$0xff]
      %v297 = vld [vmem:[%s2 + $0x18] sm:$0xff]
      %v298 = vld [vmem:[%s2 + $0x20] sm:$0xff]
      %v299 = vld [vmem:[%s2 + $0x28] sm:$0xff]
      %v300 = vld [vmem:[%s2 + $0x30] sm:$0xff]
      %v301 = vld [vmem:[%s2 + $0x38] sm:$0xff]
      %303 = vset.pattern.permute.xlu0 0
      %304 = vperm.xlu0 %303, %v294
      %v305 = vpop.permute.xlu0 %304
      %308 = vset.pattern.permute.xlu0 0
      %309 = vperm.xlu0 %308, %v295
      %v310 = vpop.permute.xlu0 %309
      %313 = vset.pattern.permute.xlu0 0
      %314 = vperm.xlu0 %313, %v296
      %v315 = vpop.permute.xlu0 %314
      %318 = vset.pattern.permute.xlu0 0
      %319 = vperm.xlu0 %318, %v297
      %v320 = vpop.permute.xlu0 %319
      %323 = vset.pattern.permute.xlu0 0
      %324 = vperm.xlu0 %323, %v298
      %v325 = vpop.permute.xlu0 %324
      %328 = vset.pattern.permute.xlu0 0
      %329 = vperm.xlu0 %328, %v299
      %v330 = vpop.permute.xlu0 %329
      %333 = vset.pattern.permute.xlu0 0
      %334 = vperm.xlu0 %333, %v300
      %v335 = vpop.permute.xlu0 %334
      %338 = vset.pattern.permute.xlu0 0
      %339 = vperm.xlu0 %338, %v301
      %v340 = vpop.permute.xlu0 %339
      %v342 = vadd.f32 %v286, %v305
      %v343 = vadd.f32 %v287, %v310
      %v344 = vadd.f32 %v288, %v315
      %v345 = vadd.f32 %v289, %v320
      %v346 = vadd.f32 %v290, %v325
      %v347 = vadd.f32 %v291, %v330
      %v348 = vadd.f32 %v292, %v335
      %v349 = vadd.f32 %v293, %v340
      %v350 = vmax.f32 %v342, 0.0
      %v351 = vmax.f32 %v343, 0.0
      %v352 = vmax.f32 %v344, 0.0
      %v353 = vmax.f32 %v345, 0.0
      %v354 = vmax.f32 %v346, 0.0
      %v355 = vmax.f32 %v347, 0.0
      %v356 = vmax.f32 %v348, 0.0
      %v357 = vmax.f32 %v349, 0.0
      %v358 = vld [vmem:[%s3] sm:$0xf]
      %v359 = vld [vmem:[%s3 + $0x4] sm:$0xf]
      %v360 = vld [vmem:[%s3 + $0x8] sm:$0xf]
      %v361 = vld [vmem:[%s3 + $0xc] sm:$0xf]
      %v362 = vpack.c.bf16 %v351, %v350
      %v363 = vpack.c.bf16 %v353, %v352
      %v364 = vpack.c.bf16 %v355, %v354
      %v365 = vpack.c.bf16 %v357, %v356
      %v370 = vunpack.c.l.b16 %v358
      %v371 = vunpack.c.l.b16 %v359
      %v372 = vunpack.c.l.b16 %v360
      %v373 = vunpack.c.l.b16 %v361
      %v374 = vpack.c.b16 %v371, %v370
      %v375 = vpack.c.b16 %v373, %v372
      %vm376 = vcmask 523264
      %v378 = vsel %vm376, %v374, 0
      %v381 = vsel %vm376, %v375, 0
      %383 = vmatprep.subr.bf16.mxu0 0
      %384 = vmatpush1.bf16.msra.mxu0 %v362
      %385 = vmatprep.subr.bf16.mxu0 0
      %386 = vmatpush1.bf16.msra.mxu0 %v363
      %387 = vmatprep.subr.bf16.mxu0 0
      %388 = vmatpush1.bf16.msra.mxu0 %v364
      %389 = vmatprep.subr.bf16.mxu0 0
      %390 = vmatpush1.bf16.msra.mxu0 %v365
      %391 = vmatprep.subr.bf16.mxu0 0
      %392 = vmatpush1.bf16.msra.mxu0 0
      %393 = vmatprep.subr.bf16.mxu0 0
      %394 = vmatpush1.bf16.msra.mxu0 0
      %395 = vmatprep.subr.bf16.mxu0 0
      %396 = vmatpush1.bf16.msra.mxu0 0
      %397 = vmatprep.subr.bf16.mxu0 0
      %398 = vmatpush1.bf16.msra.mxu0 0
      %399 = vmatprep.subr.bf16.mxu0 0
      %400 = vmatpush1.bf16.msra.mxu0 0
      %401 = vmatprep.subr.bf16.mxu0 0
      %402 = vmatpush1.bf16.msra.mxu0 0
      %403 = vmatprep.subr.bf16.mxu0 0
      %404 = vmatpush1.bf16.msra.mxu0 0
      %405 = vmatprep.subr.bf16.mxu0 0
      %406 = vmatpush1.bf16.msra.mxu0 0
      %407 = vmatprep.subr.bf16.mxu0 0
      %408 = vmatpush1.bf16.msra.mxu0 0
      %409 = vmatprep.subr.bf16.mxu0 0
      %410 = vmatpush1.bf16.msra.mxu0 0
      %411 = vmatprep.subr.bf16.mxu0 0
      %412 = vmatpush1.bf16.msra.mxu0 0
      %413 = vmatprep.subr.bf16.mxu0 0
      %414 = vmatpush1.bf16.msra.mxu0 0
      %415 = vmatprep.mubr.bf16.mxu0 0
      %416 = vmatmul.mubr.bf16.gmra.mrb[0].mxu0 %v378
      %v417 = vpop.f32.mrb[0].mxu0
      %v418 = vadd.f32 0.0, %v417
      %v419 = vpop.f32.mrb[0].mxu0
      %v420 = vpop.f32.mrb[0].mxu0
      %v421 = vadd.f32 0.0, %v420
      %v422 = vpop.f32.mrb[0].mxu0
      %423 = vmatprep.mubr.bf16.mxu0 0
      %424 = vmatmul.mubr.bf16.gmra.mrb[0].mxu0 %v381
      %v425 = vpop.f32.mrb[0].mxu0
      %v426 = vadd.f32 0.0, %v425
      %v427 = vpop.f32.mrb[0].mxu0
      %v428 = vpop.f32.mrb[0].mxu0
      %v429 = vadd.f32 0.0, %v428
      %v430 = vpop.f32.mrb[0].mxu0
      %431 = vdwg.mxu0
      %vm432 = vcmask 72704
      %433 = vst.msk [vmem:[%s228] sm:$0xff] %vm432, %v418
      %434 = vst.msk [vmem:[%s228 + $0x8] sm:$0xff] %vm432, %v421
      %435 = vst.msk [vmem:[%s228 + $0x10] sm:$0xff] %vm432, %v426
      %436 = vst.msk [vmem:[%s228 + $0x18] sm:$0xff] %vm432, %v429
      %p437 = scmp.lt.s32.totalorder %s19, 1
      %s438 = scalar_select %p437, %s19, 1
      %p439 = scmp.lt.s32.totalorder %s20, 0
      %s440 = scalar_select %p439, %s20, 0
      %s441 = smul.addr %s438, 4
      %s442 = sadd.s32 %s440, %s441
      %s443 = smul.addr %s442, 8
      %s444 = scalar_lea.vmem %s4, %s443
      // Predicated region
      $region37: #{spatial_pyramid_pooling.7} parent=35 // pred_check
        %p445 = pneg %p138
      $region38: #{spatial_pyramid_pooling.7} parent=35 // pred_check_branch
        %447 = sbr.rel (%p445) target = $region40
      $region39: #{spatial_pyramid_pooling.7} parent=35 // pred_region
        _
      $region40: #{spatial_pyramid_pooling.7} parent=35 // pred_fallthru
        _
    $region36: #{spatial_pyramid_pooling.7} parent=5 // pred_fallthru
      _
    %p448 = scmp.le.s32.totalorder 2, %s10
    // Predicated region
    $region41: #{spatial_pyramid_pooling.7} parent=5 // pred_check
      %p449 = pneg %p448
    $region42: #{spatial_pyramid_pooling.7} parent=5 // pred_check_branch
      %451 = sbr.rel (%p449) target = $region44
    $region43: #{spatial_pyramid_pooling.7} parent=5 // pred_region
      %s452 = ssub.s32 %s10, 2
      // Predicated region
      $region45: #{spatial_pyramid_pooling.7} parent=43 // pred_check
        %p453 = pneg %p144
      $region46: #{spatial_pyramid_pooling.7} parent=43 // pred_check_branch
        %455 = sbr.rel (%p453) target = $region48
      $region47: #{spatial_pyramid_pooling.7} parent=43 // pred_region
        %p456 = scmp.lt.s32.totalorder %s21, 1
        %s457 = scalar_select %p456, %s21, 1
        %p458 = scmp.lt.s32.totalorder %s22, 0
        %s459 = scalar_select %p458, %s22, 0
        %s460 = smul.addr %s457, 4
        %s461 = sadd.s32 %s459, %s460
        %s462 = smul.addr %s461, 8
        %s463 = scalar_lea.vmem %s4, %s462
      $region48: #{spatial_pyramid_pooling.7} parent=43 // pred_fallthru
        _
    $region44: #{spatial_pyramid_pooling.7} parent=5 // pred_fallthru
      _
  $region6: #{spatial_pyramid_pooling.7} parent=0 // loop_footer
    %s14 = sadd.s32 1, %s10
  $region7: #{spatial_pyramid_pooling.7} parent=0 // loop_footer_branch
    %9 = sbr.rel target = $region3
  $region8: #{spatial_pyramid_pooling.7} parent=0 // loop_exit
    _

// kernel: spatial_pyramid_pooling.8
$region0: #{spatial_pyramid_pooling.8}
  #allocation0 [shape = 'u32[]', space=smem, size = 0x4, offset = 0x4, fixed_abs, tag = 'smem constant byte address 0x4 - core index']
  #allocation1 [shape = 'u32[144,128]{1,0:T(1,128)}', space=vmem, size = 0x12000, scoped, tag = 'internal scratch']
  %s0 = inlined_call_operand.vmem [shape: f32[2,64,4], index: 0, kind: input, shape index: {}]
  %s1 = inlined_call_operand.vmem [shape: f32[64,1], index: 1, kind: input, shape index: {}]
  %s2 = inlined_call_operand.vmem [shape: f32[64,1], index: 2, kind: input, shape index: {}]
  %s3 = inlined_call_operand.vmem [shape: bf16[32,64], index: 3, kind: input, shape index: {}]
  %s4 = inlined_call_operand.vmem [shape: f32[2,32,4], index: 4, kind: output, shape index: {}]
  %s5 = sld [smem:[#allocation0]]
  $region49: #{spatial_pyramid_pooling.8} parent=0
    _
  %s7 = ssub.s32 1, %s5
  %s8 = scalar_select 0, %s7, %s5
  loop: start=0, step=1, limit=4
  $region2: #{spatial_pyramid_pooling.8} parent=0 // loop_pre_header
    _
  $region3: #{spatial_pyramid_pooling.8} parent=0 // loop_header
    %s10 = sphi 0, %s14
    %p11 = scmp.ge.s32.totalorder %s10, 4
    %s17 = sphi 0, %s29
    %s18 = sphi 0, %s25
    %s19 = sphi 0, %s17
    %s20 = sphi 0, %s18
    %s21 = sphi 0, %s19
    %s22 = sphi 0, %s20
    %s34 = sphi 0, %s36
    %s37 = sphi 0, %s34
    %s38 = sphi 0, %s37
    %s54 = sphi 0, %s38
    %s58 = sphi 0, %s58
    %s60 = sphi 0, %s58
    %s61 = sphi 0, %s60
    %s75 = sphi 0, %s61
    %s79 = sphi 0, %s79
    %s81 = sphi 0, %s79
    %s82 = sphi 0, %s81
    %s96 = sphi 0, %s82
    %s100 = sphi 0, %s100
    %s102 = sphi 0, %s100
    %s103 = sphi 0, %s102
    %s117 = sphi 0, %s103
    %s125 = sphi 0, %s127
    %s128 = sphi 0, %s125
    %s129 = sphi 0, %s128
    %s145 = sphi 0, %s129
  $region4: #{spatial_pyramid_pooling.8} parent=0 // loop_header_branch
    %13 = sbr.rel (%p11) target = $region8
  $region5: #{spatial_pyramid_pooling.8} parent=0 // loop_body
    %s15 = ssub.s32 %s10, 1
    %s16 = ssub.s32 %s10, 2
    %s23 = sadd.s32 1, %s18
    %p24 = scmp.ge.s32.totalorder %s23, 1
    %s25 = scalar_select %p24, 0, %s23
    %s26 = sadd.s32 1, %s17
    %s27 = scalar_select %p24, %s26, %s17
    %p28 = scmp.ge.s32.totalorder %s27, 2
    %s29 = scalar_select %p28, 0, %s27
    %s30 = ssub.s32 %s17, %s29
    %s31 = ssub.s32 %s18, %s25
    %s32 = sor.u32 %s30, %s31
    %p33 = scmp.eq.s32.totalorder %s32, 0
    %s35 = sadd.s32 %s34, 1
    %s36 = scalar_select %p33, %s34, %s35
    %p39 = pneg %p33
    %p40 = scmp.eq.s32.totalorder %s10, 1
    %p41 = por %p39, %p40
    %p42 = scmp.ne.s32.totalorder %s34, %s37
    %p43 = scmp.eq.s32.totalorder %s10, 0
    %p44 = por %p42, %p43
    %p45 = scmp.ne.s32.totalorder %s34, %s37
    %p46 = scmp.eq.s32.totalorder %s15, 1
    %p47 = por %p45, %p46
    %p48 = scmp.ne.s32.totalorder %s37, %s38
    %p49 = scmp.eq.s32.totalorder %s15, 0
    %p50 = por %p48, %p49
    %p51 = scmp.ne.s32.totalorder %s37, %s38
    %p52 = scmp.eq.s32.totalorder %s16, 1
    %p53 = por %p51, %p52
    %p55 = scmp.ne.s32.totalorder %s38, %s54
    %p56 = scmp.eq.s32.totalorder %s16, 0
    %p57 = por %p55, %p56
    %s59 = sadd.s32 %s58, 1
    %p62 = scmp.eq.s32.totalorder %s10, 1
    %p63 = scmp.ne.s32.totalorder %s58, %s60
    %p64 = scmp.eq.s32.totalorder %s10, 0
    %p65 = por %p63, %p64
    %p66 = scmp.ne.s32.totalorder %s58, %s60
    %p67 = scmp.eq.s32.totalorder %s15, 1
    %p68 = por %p66, %p67
    %p69 = scmp.ne.s32.totalorder %s60, %s61
    %p70 = scmp.eq.s32.totalorder %s15, 0
    %p71 = por %p69, %p70
    %p72 = scmp.ne.s32.totalorder %s60, %s61
    %p73 = scmp.eq.s32.totalorder %s16, 1
    %p74 = por %p72, %p73
    %p76 = scmp.ne.s32.totalorder %s61, %s75
    %p77 = scmp.eq.s32.totalorder %s16, 0
    %p78 = por %p76, %p77
    %s80 = sadd.s32 %s79, 1
    %p83 = scmp.eq.s32.totalorder %s10, 1
    %p84 = scmp.ne.s32.totalorder %s79, %s81
    %p85 = scmp.eq.s32.totalorder %s10, 0
    %p86 = por %p84, %p85
    %p87 = scmp.ne.s32.totalorder %s79, %s81
    %p88 = scmp.eq.s32.totalorder %s15, 1
    %p89 = por %p87, %p88
    %p90 = scmp.ne.s32.totalorder %s81, %s82
    %p91 = scmp.eq.s32.totalorder %s15, 0
    %p92 = por %p90, %p91
    %p93 = scmp.ne.s32.totalorder %s81, %s82
    %p94 = scmp.eq.s32.totalorder %s16, 1
    %p95 = por %p93, %p94
    %p97 = scmp.ne.s32.totalorder %s82, %s96
    %p98 = scmp.eq.s32.totalorder %s16, 0
    %p99 = por %p97, %p98
    %s101 = sadd.s32 %s100, 1
    %p104 = scmp.eq.s32.totalorder %s10, 1
    %p105 = scmp.ne.s32.totalorder %s100, %s102
    %p106 = scmp.eq.s32.totalorder %s10, 0
    %p107 = por %p105, %p106
    %p108 = scmp.ne.s32.totalorder %s100, %s102
    %p109 = scmp.eq.s32.totalorder %s15, 1
    %p110 = por %p108, %p109
    %p111 = scmp.ne.s32.totalorder %s102, %s103
    %p112 = scmp.eq.s32.totalorder %s15, 0
    %p113 = por %p111, %p112
    %p114 = scmp.ne.s32.totalorder %s102, %s103
    %p115 = scmp.eq.s32.totalorder %s16, 1
    %p116 = por %p114, %p115
    %p118 = scmp.ne.s32.totalorder %s103, %s117
    %p119 = scmp.eq.s32.totalorder %s16, 0
    %p120 = por %p118, %p119
    %s121 = ssub.s32 %s17, %s29
    %s122 = ssub.s32 %s18, %s25
    %s123 = sor.u32 %s121, %s122
    %p124 = scmp.eq.s32.totalorder %s123, 0
    %s126 = sadd.s32 %s125, 1
    %s127 = scalar_select %p124, %s125, %s126
    %p130 = pneg %p124
    %p131 = scmp.eq.s32.totalorder %s10, 1
    %p132 = por %p130, %p131
    %p133 = scmp.ne.s32.totalorder %s125, %s128
    %p134 = scmp.eq.s32.totalorder %s10, 0
    %p135 = por %p133, %p134
    %p136 = scmp.ne.s32.totalorder %s125, %s128
    %p137 = scmp.eq.s32.totalorder %s15, 1
    %p138 = por %p136, %p137
    %p139 = scmp.ne.s32.totalorder %s128, %s129
    %p140 = scmp.eq.s32.totalorder %s15, 0
    %p141 = por %p139, %p140
    %p142 = scmp.ne.s32.totalorder %s128, %s129
    %p143 = scmp.eq.s32.totalorder %s16, 1
    %p144 = por %p142, %p143
    %p146 = scmp.ne.s32.totalorder %s129, %s145
    %p147 = scmp.eq.s32.totalorder %s16, 0
    %p148 = por %p146, %p147
    %p149 = scmp.le.s32.totalorder 1, %s10
    %p150 = scmp.lt.s32.totalorder %s10, 3
    %p151 = pnand %p149, %p150
    %p152 = pneg %p151
    // Predicated region
    $region9: #{spatial_pyramid_pooling.8} parent=5 // pred_check
      _
    $region10: #{spatial_pyramid_pooling.8} parent=5 // pred_check_branch
      %154 = sbr.rel (%p151) target = $region12
    $region11: #{spatial_pyramid_pooling.8} parent=5 // pred_region
      %s155 = ssub.s32 %s10, 1
      // Predicated region
      $region13: #{spatial_pyramid_pooling.8} parent=11 // pred_check
        %p156 = pneg %p71
      $region14: #{spatial_pyramid_pooling.8} parent=11 // pred_check_branch
        %158 = sbr.rel (%p156) target = $region16
      $region15: #{spatial_pyramid_pooling.8} parent=11 // pred_region
        _
      $region16: #{spatial_pyramid_pooling.8} parent=11 // pred_fallthru
        _
      // Predicated region
      $region17: #{spatial_pyramid_pooling.8} parent=11 // pred_check
        %p159 = pneg %p92
      $region18: #{spatial_pyramid_pooling.8} parent=11 // pred_check_branch
        %161 = sbr.rel (%p159) target = $region20
      $region19: #{spatial_pyramid_pooling.8} parent=11 // pred_region
        _
      $region20: #{spatial_pyramid_pooling.8} parent=11 // pred_fallthru
        _
      // Predicated region
      $region21: #{spatial_pyramid_pooling.8} parent=11 // pred_check
        %p162 = pneg %p113
      $region22: #{spatial_pyramid_pooling.8} parent=11 // pred_check_branch
        %164 = sbr.rel (%p162) target = $region24
      $region23: #{spatial_pyramid_pooling.8} parent=11 // pred_region
        _
      $region24: #{spatial_pyramid_pooling.8} parent=11 // pred_fallthru
        _
    $region12: #{spatial_pyramid_pooling.8} parent=5 // pred_fallthru
      _
    %p165 = scmp.lt.s32.totalorder %s10, 2
    // Predicated region
    $region25: #{spatial_pyramid_pooling.8} parent=5 // pred_check
      %p166 = pneg %p165
    $region26: #{spatial_pyramid_pooling.8} parent=5 // pred_check_branch
      %168 = sbr.rel (%p166) target = $region28
    $region27: #{spatial_pyramid_pooling.8} parent=5 // pred_region
      // Predicated region
      $region29: #{spatial_pyramid_pooling.8} parent=27 // pred_check
        %p169 = pneg %p44
      $region30: #{spatial_pyramid_pooling.8} parent=27 // pred_check_branch
        %171 = sbr.rel (%p169) target = $region32
      $region31: #{spatial_pyramid_pooling.8} parent=27 // pred_region
        %p172 = scmp.lt.s32.totalorder %s17, 1
        %s173 = scalar_select %p172, %s17, 1
        %p174 = scmp.lt.s32.totalorder %s18, 0
        %s175 = scalar_select %p174, %s18, 0
        %s176 = smul.addr %s173, 8
        %s177 = sadd.s32 %s175, %s176
        %s178 = smul.addr %s177, 8
        %s179 = scalar_lea.vmem %s0, %s178
      $region32: #{spatial_pyramid_pooling.8} parent=27 // pred_fallthru
        _
    $region28: #{spatial_pyramid_pooling.8} parent=5 // pred_fallthru
      _
    %p180 = scmp.le.s32.totalorder 1, %s10
    %p181 = scmp.lt.s32.totalorder %s10, 3
    %p182 = pnand %p180, %p181
    %p183 = pneg %p182
    // Predicated region
    $region33: #{spatial_pyramid_pooling.8} parent=5 // pred_check
      _
    $region34: #{spatial_pyramid_pooling.8} parent=5 // pred_check_branch
      %185 = sbr.rel (%p182) target = $region36
    $region35: #{spatial_pyramid_pooling.8} parent=5 // pred_region
      %s186 = ssub.s32 %s10, 1
      %p187 = scmp.lt.s32.totalorder %s19, 1
      %s188 = scalar_select %p187, %s19, 1
      %p189 = scmp.lt.s32.totalorder %s20, 0
      %s190 = scalar_select %p189, %s20, 0
      %s191 = smul.addr %s188, 8
      %s192 = sadd.s32 %s190, %s191
      %s193 = smul.addr %s192, 8
      %s194 = scalar_lea.vmem %s0, %s193
      %p195 = pneg %p50
      %p196 = pneg %p47
      %p197 = pneg %p71
      %p198 = pneg %p68
      %p199 = pneg %p92
      %p200 = pneg %p89
      %p201 = pneg %p113
      %p202 = pneg %p110
      %p203 = pneg %p141
      %p204 = pneg %p138
      %p205 = scmp.lt.s32.totalorder %s19, 1
      %s206 = scalar_select %p205, %s19, 1
      %p207 = scmp.lt.s32.totalorder %s20, 0
      %s208 = scalar_select %p207, %s20, 0
      %s209 = smul.addr %s206, 4
      %s210 = sadd.s32 %s208, %s209
      %s211 = smul.addr %s210, 8
      %s212 = scalar_lea.vmem %s4, %s211
      %p213 = scmp.lt.s32.totalorder %s19, 1
      %s214 = scalar_select %p213, %s19, 1
      %p215 = scmp.lt.s32.totalorder %s20, 0
      %s216 = scalar_select %p215, %s20, 0
      %s217 = smul.addr %s214, 8
      %s218 = sadd.s32 %s216, %s217
      %s219 = smul.addr %s218, 8
      %s220 = scalar_lea.vmem %s0, %s219
      %p221 = scmp.lt.s32.totalorder %s19, 1
      %s222 = scalar_select %p221, %s19, 1
      %p223 = scmp.lt.s32.totalorder %s20, 0
      %s224 = scalar_select %p223, %s20, 0
      %s225 = smul.addr %s222, 4
      %s226 = sadd.s32 %s224, %s225
      %s227 = smul.addr %s226, 8
      %s228 = scalar_lea.vmem %s4, %s227
      %v230 = vld [vmem:[%s220] sm:$0xff]
      %v231 = vld [vmem:[%s220 + $0x8] sm:$0xff]
      %v232 = vld [vmem:[%s220 + $0x10] sm:$0xff]
      %v233 = vld [vmem:[%s220 + $0x18] sm:$0xff]
      %v234 = vld [vmem:[%s220 + $0x20] sm:$0xff]
      %v235 = vld [vmem:[%s220 + $0x28] sm:$0xff]
      %v236 = vld [vmem:[%s220 + $0x30] sm:$0xff]
      %v237 = vld [vmem:[%s220 + $0x38] sm:$0xff]
      %v238 = vld [vmem:[%s1] sm:$0xff]
      %v239 = vld [vmem:[%s1 + $0x8] sm:$0xff]
      %v240 = vld [vmem:[%s1 + $0x10] sm:$0xff]
      %v241 = vld [vmem:[%s1 + $0x18] sm:$0xff]
      %v242 = vld [vmem:[%s1 + $0x20] sm:$0xff]
      %v243 = vld [vmem:[%s1 + $0x28] sm:$0xff]
      %v244 = vld [vmem:[%s1 + $0x30] sm:$0xff]
      %v245 = vld [vmem:[%s1 + $0x38] sm:$0xff]
      %247 = vset.pattern.permute.xlu0 0
      %248 = vperm.xlu0 %247, %v238
      %v249 = vpop.permute.xlu0 %248
      %252 = vset.pattern.permute.xlu0 0
      %253 = vperm.xlu0 %252, %v239
      %v254 = vpop.permute.xlu0 %253
      %257 = vset.pattern.permute.xlu0 0
      %258 = vperm.xlu0 %257, %v240
      %v259 = vpop.permute.xlu0 %258
      %262 = vset.pattern.permute.xlu0 0
      %263 = vperm.xlu0 %262, %v241
      %v264 = vpop.permute.xlu0 %263
      %267 = vset.pattern.permute.xlu0 0
      %268 = vperm.xlu0 %267, %v242
      %v269 = vpop.permute.xlu0 %268
      %272 = vset.pattern.permute.xlu0 0
      %273 = vperm.xlu0 %272, %v243
      %v274 = vpop.permute.xlu0 %273
      %277 = vset.pattern.permute.xlu0 0
      %278 = vperm.xlu0 %277, %v244
      %v279 = vpop.permute.xlu0 %278
      %282 = vset.pattern.permute.xlu0 0
      %283 = vperm.xlu0 %282, %v245
      %v284 = vpop.permute.xlu0 %283
      %v286 = vmul.f32 %v230, %v249
      %v287 = vmul.f32 %v231, %v254
      %v288 = vmul.f32 %v232, %v259
      %v289 = vmul.f32 %v233, %v264
      %v290 = vmul.f32 %v234, %v269
      %v291 = vmul.f32 %v235, %v274
      %v292 = vmul.f32 %v236, %v279
      %v293 = vmul.f32 %v237, %v284
      %v294 = vld [vmem:[%s2] sm:$0xff]
      %v295 = vld [vmem:[%s2 + $0x8] sm:$0xff]
      %v296 = vld [vmem:[%s2 + $0x10] sm:$0xff]
      %v297 = vld [vmem:[%s2 + $0x18] sm:$0xff]
      %v298 = vld [vmem:[%s2 + $0x20] sm:$0xff]
      %v299 = vld [vmem:[%s2 + $0x28] sm:$0xff]
      %v300 = vld [vmem:[%s2 + $0x30] sm:$0xff]
      %v301 = vld [vmem:[%s2 + $0x38] sm:$0xff]
      %303 = vset.pattern.permute.xlu0 0
      %304 = vperm.xlu0 %303, %v294
      %v305 = vpop.permute.xlu0 %304
      %308 = vset.pattern.permute.xlu0 0
      %309 = vperm.xlu0 %308, %v295
      %v310 = vpop.permute.xlu0 %309
      %313 = vset.pattern.permute.xlu0 0
      %314 = vperm.xlu0 %313, %v296
      %v315 = vpop.permute.xlu0 %314
      %318 = vset.pattern.permute.xlu0 0
      %319 = vperm.xlu0 %318, %v297
      %v320 = vpop.permute.xlu0 %319
      %323 = vset.pattern.permute.xlu0 0
      %324 = vperm.xlu0 %323, %v298
      %v325 = vpop.permute.xlu0 %324
      %328 = vset.pattern.permute.xlu0 0
      %329 = vperm.xlu0 %328, %v299
      %v330 = vpop.permute.xlu0 %329
      %333 = vset.pattern.permute.xlu0 0
      %334 = vperm.xlu0 %333, %v300
      %v335 = vpop.permute.xlu0 %334
      %338 = vset.pattern.permute.xlu0 0
      %339 = vperm.xlu0 %338, %v301
      %v340 = vpop.permute.xlu0 %339
      %v342 = vadd.f32 %v286, %v305
      %v343 = vadd.f32 %v287, %v310
      %v344 = vadd.f32 %v288, %v315
      %v345 = vadd.f32 %v289, %v320
      %v346 = vadd.f32 %v290, %v325
      %v347 = vadd.f32 %v291, %v330
      %v348 = vadd.f32 %v292, %v335
      %v349 = vadd.f32 %v293, %v340
      %v350 = vmax.f32 %v342, 0.0
      %v351 = vmax.f32 %v343, 0.0
      %v352 = vmax.f32 %v344, 0.0
      %v353 = vmax.f32 %v345, 0.0
      %v354 = vmax.f32 %v346, 0.0
      %v355 = vmax.f32 %v347, 0.0
      %v356 = vmax.f32 %v348, 0.0
      %v357 = vmax.f32 %v349, 0.0
      %v358 = vld [vmem:[%s3] sm:$0xf]
      %v359 = vld [vmem:[%s3 + $0x4] sm:$0xf]
      %v360 = vld [vmem:[%s3 + $0x8] sm:$0xf]
      %v361 = vld [vmem:[%s3 + $0xc] sm:$0xf]
      %v362 = vpack.c.bf16 %v351, %v350
      %v363 = vpack.c.bf16 %v353, %v352
      %v364 = vpack.c.bf16 %v355, %v354
      %v365 = vpack.c.bf16 %v357, %v356
      %v370 = vunpack.c.l.b16 %v358
      %v371 = vunpack.c.l.b16 %v359
      %v372 = vunpack.c.l.b16 %v360
      %v373 = vunpack.c.l.b16 %v361
      %v374 = vpack.c.b16 %v371, %v370
      %v375 = vpack.c.b16 %v373, %v372
      %vm376 = vcmask 523264
      %v378 = vsel %vm376, %v374, 0
      %v381 = vsel %vm376, %v375, 0
      %383 = vmatprep.subr.bf16.mxu0 0
      %384 = vmatpush1.bf16.msra.mxu0 %v362
      %385 = vmatprep.subr.bf16.mxu0 0
      %386 = vmatpush1.bf16.msra.mxu0 %v363
      %387 = vmatprep.subr.bf16.mxu0 0
      %388 = vmatpush1.bf16.msra.mxu0 %v364
      %389 = vmatprep.subr.bf16.mxu0 0
      %390 = vmatpush1.bf16.msra.mxu0 %v365
      %391 = vmatprep.subr.bf16.mxu0 0
      %392 = vmatpush1.bf16.msra.mxu0 0
      %393 = vmatprep.subr.bf16.mxu0 0
      %394 = vmatpush1.bf16.msra.mxu0 0
      %395 = vmatprep.subr.bf16.mxu0 0
      %396 = vmatpush1.bf16.msra.mxu0 0
      %397 = vmatprep.subr.bf16.mxu0 0
      %398 = vmatpush1.bf16.msra.mxu0 0
      %399 = vmatprep.subr.bf16.mxu0 0
      %400 = vmatpush1.bf16.msra.mxu0 0
      %401 = vmatprep.subr.bf16.mxu0 0
      %402 = vmatpush1.bf16.msra.mxu0 0
      %403 = vmatprep.subr.bf16.mxu0 0
      %404 = vmatpush1.bf16.msra.mxu0 0
      %405 = vmatprep.subr.bf16.mxu0 0
      %406 = vmatpush1.bf16.msra.mxu0 0
      %407 = vmatprep.subr.bf16.mxu0 0
      %408 = vmatpush1.bf16.msra.mxu0 0
      %409 = vmatprep.subr.bf16.mxu0 0
      %410 = vmatpush1.bf16.msra.mxu0 0
      %411 = vmatprep.subr.bf16.mxu0 0
      %412 = vmatpush1.bf16.msra.mxu0 0
      %413 = vmatprep.subr.bf16.mxu0 0
      %414 = vmatpush1.bf16.msra.mxu0 0
      %415 = vmatprep.mubr.bf16.mxu0 0
      %416 = vmatmul.mubr.bf16.gmra.mrb[0].mxu0 %v378
      %v417 = vpop.f32.mrb[0].mxu0
      %v418 = vadd.f32 0.0, %v417
      %v419 = vpop.f32.mrb[0].mxu0
      %v420 = vpop.f32.mrb[0].mxu0
      %v421 = vadd.f32 0.0, %v420
      %v422 = vpop.f32.mrb[0].mxu0
      %423 = vmatprep.mubr.bf16.mxu0 0
      %424 = vmatmul.mubr.bf16.gmra.mrb[0].mxu0 %v381
      %v425 = vpop.f32.mrb[0].mxu0
      %v426 = vadd.f32 0.0, %v425
      %v427 = vpop.f32.mrb[0].mxu0
      %v428 = vpop.f32.mrb[0].mxu0
      %v429 = vadd.f32 0.0, %v428
      %v430 = vpop.f32.mrb[0].mxu0
      %431 = vdwg.mxu0
      %vm432 = vcmask 31744
      %433 = vst.msk [vmem:[%s228] sm:$0xff] %vm432, %v418
      %434 = vst.msk [vmem:[%s228 + $0x8] sm:$0xff] %vm432, %v421
      %435 = vst.msk [vmem:[%s228 + $0x10] sm:$0xff] %vm432, %v426
      %436 = vst.msk [vmem:[%s228 + $0x18] sm:$0xff] %vm432, %v429
      %p437 = scmp.lt.s32.totalorder %s19, 1
      %s438 = scalar_select %p437, %s19, 1
      %p439 = scmp.lt.s32.totalorder %s20, 0
      %s440 = scalar_select %p439, %s20, 0
      %s441 = smul.addr %s438, 4
      %s442 = sadd.s32 %s440, %s441
      %s443 = smul.addr %s442, 8
      %s444 = scalar_lea.vmem %s4, %s443
      // Predicated region
      $region37: #{spatial_pyramid_pooling.8} parent=35 // pred_check
        %p445 = pneg %p138
      $region38: #{spatial_pyramid_pooling.8} parent=35 // pred_check_branch
        %447 = sbr.rel (%p445) target = $region40
      $region39: #{spatial_pyramid_pooling.8} parent=35 // pred_region
        _
      $region40: #{spatial_pyramid_pooling.8} parent=35 // pred_fallthru
        _
    $region36: #{spatial_pyramid_pooling.8} parent=5 // pred_fallthru
      _
    %p448 = scmp.le.s32.totalorder 2, %s10
    // Predicated region
    $region41: #{spatial_pyramid_pooling.8} parent=5 // pred_check
      %p449 = pneg %p448
    $region42: #{spatial_pyramid_pooling.8} parent=5 // pred_check_branch
      %451 = sbr.rel (%p449) target = $region44
    $region43: #{spatial_pyramid_pooling.8} parent=5 // pred_region
      %s452 = ssub.s32 %s10, 2
      // Predicated region
      $region45: #{spatial_pyramid_pooling.8} parent=43 // pred_check
        %p453 = pneg %p144
      $region46: #{spatial_pyramid_pooling.8} parent=43 // pred_check_branch
        %455 = sbr.rel (%p453) target = $region48
      $region47: #{spatial_pyramid_pooling.8} parent=43 // pred_region
        %p456 = scmp.lt.s32.totalorder %s21, 1
        %s457 = scalar_select %p456, %s21, 1
        %p458 = scmp.lt.s32.totalorder %s22, 0
        %s459 = scalar_select %p458, %s22, 0
        %s460 = smul.addr %s457, 4
        %s461 = sadd.s32 %s459, %s460
        %s462 = smul.addr %s461, 8
        %s463 = scalar_lea.vmem %s4, %s462
      $region48: #{spatial_pyramid_pooling.8} parent=43 // pred_fallthru
        _
    $region44: #{spatial_pyramid_pooling.8} parent=5 // pred_fallthru
      _
  $region6: #{spatial_pyramid_pooling.8} parent=0 // loop_footer
    %s14 = sadd.s32 1, %s10
  $region7: #{spatial_pyramid_pooling.8} parent=0 // loop_footer_branch
    %9 = sbr.rel target = $region3
  $region8: #{spatial_pyramid_pooling.8} parent=0 // loop_exit
    _

// kernel: spatial_pyramid_pooling.9
$region0: #{spatial_pyramid_pooling.9}
  #allocation0 [shape = 'u32[]', space=smem, size = 0x4, offset = 0x4, fixed_abs, tag = 'smem constant byte address 0x4 - core index']
  #allocation1 [shape = 'u32[144,128]{1,0:T(1,128)}', space=vmem, size = 0x12000, scoped, tag = 'internal scratch']
  %s0 = inlined_call_operand.vmem [shape: f32[2,64,256], index: 0, kind: input, shape index: {}]
  %s1 = inlined_call_operand.vmem [shape: f32[2,32,256], index: 1, kind: input, shape index: {}]
  %s2 = inlined_call_operand.vmem [shape: f32[2,32,256], index: 2, kind: input, shape index: {}]
  %s3 = inlined_call_operand.vmem [shape: f32[2,32,256], index: 3, kind: input, shape index: {}]
  %s4 = inlined_call_operand.vmem [shape: f32[64,1], index: 4, kind: input, shape index: {}]
  %s5 = inlined_call_operand.vmem [shape: f32[32,1], index: 5, kind: input, shape index: {}]
  %s6 = inlined_call_operand.vmem [shape: f32[32,1], index: 6, kind: input, shape index: {}]
  %s7 = inlined_call_operand.vmem [shape: f32[32,1], index: 7, kind: input, shape index: {}]
  %s8 = inlined_call_operand.vmem [shape: f32[64,1], index: 8, kind: input, shape index: {}]
  %s9 = inlined_call_operand.vmem [shape: f32[32,1], index: 9, kind: input, shape index: {}]
  %s10 = inlined_call_operand.vmem [shape: f32[32,1], index: 10, kind: input, shape index: {}]
  %s11 = inlined_call_operand.vmem [shape: f32[32,1], index: 11, kind: input, shape index: {}]
  %s12 = inlined_call_operand.vmem [shape: bf16[32,64], index: 12, kind: input, shape index: {}]
  %s13 = inlined_call_operand.vmem [shape: bf16[32,32], index: 13, kind: input, shape index: {}]
  %s14 = inlined_call_operand.vmem [shape: bf16[32,32], index: 14, kind: input, shape index: {}]
  %s15 = inlined_call_operand.vmem [shape: bf16[32,32], index: 15, kind: input, shape index: {}]
  %s16 = inlined_call_operand.vmem [shape: f32[2,32,256], index: 16, kind: output, shape index: {}]
  %s17 = sld [smem:[#allocation0]]
  $region97: #{spatial_pyramid_pooling.9} parent=0
    _
  %s19 = ssub.s32 1, %s17
  %s20 = scalar_select 0, %s19, %s17
  loop: start=0, step=1, limit=4
  $region2: #{spatial_pyramid_pooling.9} parent=0 // loop_pre_header
    _
  $region3: #{spatial_pyramid_pooling.9} parent=0 // loop_header
    %s22 = sphi 0, %s26
    %p23 = scmp.ge.s32.totalorder %s22, 4
    %s29 = sphi 0, %s41
    %s30 = sphi 0, %s37
    %s31 = sphi 0, %s29
    %s32 = sphi 0, %s30
    %s33 = sphi 0, %s31
    %s34 = sphi 0, %s32
    %s46 = sphi 0, %s48
    %s49 = sphi 0, %s46
    %s50 = sphi 0, %s49
    %s66 = sphi 0, %s50
    %s74 = sphi 0, %s76
    %s77 = sphi 0, %s74
    %s78 = sphi 0, %s77
    %s94 = sphi 0, %s78
    %s102 = sphi 0, %s104
    %s105 = sphi 0, %s102
    %s106 = sphi 0, %s105
    %s122 = sphi 0, %s106
    %s130 = sphi 0, %s132
    %s133 = sphi 0, %s130
    %s134 = sphi 0, %s133
    %s150 = sphi 0, %s134
    %s154 = sphi 0, %s154
    %s156 = sphi 0, %s154
    %s157 = sphi 0, %s156
    %s171 = sphi 0, %s157
    %s175 = sphi 0, %s175
    %s177 = sphi 0, %s175
    %s178 = sphi 0, %s177
    %s192 = sphi 0, %s178
    %s196 = sphi 0, %s196
    %s198 = sphi 0, %s196
    %s199 = sphi 0, %s198
    %s213 = sphi 0, %s199
    %s217 = sphi 0, %s217
    %s219 = sphi 0, %s217
    %s220 = sphi 0, %s219
    %s234 = sphi 0, %s220
    %s238 = sphi 0, %s238
    %s240 = sphi 0, %s238
    %s241 = sphi 0, %s240
    %s255 = sphi 0, %s241
    %s259 = sphi 0, %s259
    %s261 = sphi 0, %s259
    %s262 = sphi 0, %s261
    %s276 = sphi 0, %s262
    %s280 = sphi 0, %s280
    %s282 = sphi 0, %s280
    %s283 = sphi 0, %s282
    %s297 = sphi 0, %s283
    %s301 = sphi 0, %s301
    %s303 = sphi 0, %s301
    %s304 = sphi 0, %s303
    %s318 = sphi 0, %s304
    %s322 = sphi 0, %s322
    %s324 = sphi 0, %s322
    %s325 = sphi 0, %s324
    %s339 = sphi 0, %s325
    %s343 = sphi 0, %s343
    %s345 = sphi 0, %s343
    %s346 = sphi 0, %s345
    %s360 = sphi 0, %s346
    %s364 = sphi 0, %s364
    %s366 = sphi 0, %s364
    %s367 = sphi 0, %s366
    %s381 = sphi 0, %s367
    %s385 = sphi 0, %s385
    %s387 = sphi 0, %s385
    %s388 = sphi 0, %s387
    %s402 = sphi 0, %s388
    %s410 = sphi 0, %s412
    %s413 = sphi 0, %s410
    %s414 = sphi 0, %s413
    %s430 = sphi 0, %s414
  $region4: #{spatial_pyramid_pooling.9} parent=0 // loop_header_branch
    %25 = sbr.rel (%p23) target = $region8
  $region5: #{spatial_pyramid_pooling.9} parent=0 // loop_body
    %s27 = ssub.s32 %s22, 1
    %s28 = ssub.s32 %s22, 2
    %s35 = sadd.s32 1, %s30
    %p36 = scmp.ge.s32.totalorder %s35, 1
    %s37 = scalar_select %p36, 0, %s35
    %s38 = sadd.s32 1, %s29
    %s39 = scalar_select %p36, %s38, %s29
    %p40 = scmp.ge.s32.totalorder %s39, 2
    %s41 = scalar_select %p40, 0, %s39
    %s42 = ssub.s32 %s29, %s41
    %s43 = ssub.s32 %s30, %s37
    %s44 = sor.u32 %s42, %s43
    %p45 = scmp.eq.s32.totalorder %s44, 0
    %s47 = sadd.s32 %s46, 1
    %s48 = scalar_select %p45, %s46, %s47
    %p51 = pneg %p45
    %p52 = scmp.eq.s32.totalorder %s22, 1
    %p53 = por %p51, %p52
    %p54 = scmp.ne.s32.totalorder %s46, %s49
    %p55 = scmp.eq.s32.totalorder %s22, 0
    %p56 = por %p54, %p55
    %p57 = scmp.ne.s32.totalorder %s46, %s49
    %p58 = scmp.eq.s32.totalorder %s27, 1
    %p59 = por %p57, %p58
    %p60 = scmp.ne.s32.totalorder %s49, %s50
    %p61 = scmp.eq.s32.totalorder %s27, 0
    %p62 = por %p60, %p61
    %p63 = scmp.ne.s32.totalorder %s49, %s50
    %p64 = scmp.eq.s32.totalorder %s28, 1
    %p65 = por %p63, %p64
    %p67 = scmp.ne.s32.totalorder %s50, %s66
    %p68 = scmp.eq.s32.totalorder %s28, 0
    %p69 = por %p67, %p68
    %s70 = ssub.s32 %s29, %s41
    %s71 = ssub.s32 %s30, %s37
    %s72 = sor.u32 %s70, %s71
    %p73 = scmp.eq.s32.totalorder %s72, 0
    %s75 = sadd.s32 %s74, 1
    %s76 = scalar_select %p73, %s74, %s75
    %p79 = pneg %p73
    %p80 = scmp.eq.s32.totalorder %s22, 1
    %p81 = por %p79, %p80
    %p82 = scmp.ne.s32.totalorder %s74, %s77
    %p83 = scmp.eq.s32.totalorder %s22, 0
    %p84 = por %p82, %p83
    %p85 = scmp.ne.s32.totalorder %s74, %s77
    %p86 = scmp.eq.s32.totalorder %s27, 1
    %p87 = por %p85, %p86
    %p88 = scmp.ne.s32.totalorder %s77, %s78
    %p89 = scmp.eq.s32.totalorder %s27, 0
    %p90 = por %p88, %p89
    %p91 = scmp.ne.s32.totalorder %s77, %s78
    %p92 = scmp.eq.s32.totalorder %s28, 1
    %p93 = por %p91, %p92
    %p95 = scmp.ne.s32.totalorder %s78, %s94
    %p96 = scmp.eq.s32.totalorder %s28, 0
    %p97 = por %p95, %p96
    %s98 = ssub.s32 %s29, %s41
    %s99 = ssub.s32 %s30, %s37
    %s100 = sor.u32 %s98, %s99
    %p101 = scmp.eq.s32.totalorder %s100, 0
    %s103 = sadd.s32 %s102, 1
    %s104 = scalar_select %p101, %s102, %s103
    %p107 = pneg %p101
    %p108 = scmp.eq.s32.totalorder %s22, 1
    %p109 = por %p107, %p108
    %p110 = scmp.ne.s32.totalorder %s102, %s105
    %p111 = scmp.eq.s32.totalorder %s22, 0
    %p112 = por %p110, %p111
    %p113 = scmp.ne.s32.totalorder %s102, %s105
    %p114 = scmp.eq.s32.totalorder %s27, 1
    %p115 = por %p113, %p114
    %p116 = scmp.ne.s32.totalorder %s105, %s106
    %p117 = scmp.eq.s32.totalorder %s27, 0
    %p118 = por %p116, %p117
    %p119 = scmp.ne.s32.totalorder %s105, %s106
    %p120 = scmp.eq.s32.totalorder %s28, 1
    %p121 = por %p119, %p120
    %p123 = scmp.ne.s32.totalorder %s106, %s122
    %p124 = scmp.eq.s32.totalorder %s28, 0
    %p125 = por %p123, %p124
    %s126 = ssub.s32 %s29, %s41
    %s127 = ssub.s32 %s30, %s37
    %s128 = sor.u32 %s126, %s127
    %p129 = scmp.eq.s32.totalorder %s128, 0
    %s131 = sadd.s32 %s130, 1
    %s132 = scalar_select %p129, %s130, %s131
    %p135 = pneg %p129
    %p136 = scmp.eq.s32.totalorder %s22, 1
    %p137 = por %p135, %p136
    %p138 = scmp.ne.s32.totalorder %s130, %s133
    %p139 = scmp.eq.s32.totalorder %s22, 0
    %p140 = por %p138, %p139
    %p141 = scmp.ne.s32.totalorder %s130, %s133
    %p142 = scmp.eq.s32.totalorder %s27, 1
    %p143 = por %p141, %p142
    %p144 = scmp.ne.s32.totalorder %s133, %s134
    %p145 = scmp.eq.s32.totalorder %s27, 0
    %p146 = por %p144, %p145
    %p147 = scmp.ne.s32.totalorder %s133, %s134
    %p148 = scmp.eq.s32.totalorder %s28, 1
    %p149 = por %p147, %p148
    %p151 = scmp.ne.s32.totalorder %s134, %s150
    %p152 = scmp.eq.s32.totalorder %s28, 0
    %p153 = por %p151, %p152
    %s155 = sadd.s32 %s154, 1
    %p158 = scmp.eq.s32.totalorder %s22, 1
    %p159 = scmp.ne.s32.totalorder %s154, %s156
    %p160 = scmp.eq.s32.totalorder %s22, 0
    %p161 = por %p159, %p160
    %p162 = scmp.ne.s32.totalorder %s154, %s156
    %p163 = scmp.eq.s32.totalorder %s27, 1
    %p164 = por %p162, %p163
    %p165 = scmp.ne.s32.totalorder %s156, %s157
    %p166 = scmp.eq.s32.totalorder %s27, 0
    %p167 = por %p165, %p166
    %p168 = scmp.ne.s32.totalorder %s156, %s157
    %p169 = scmp.eq.s32.totalorder %s28, 1
    %p170 = por %p168, %p169
    %p172 = scmp.ne.s32.totalorder %s157, %s171
    %p173 = scmp.eq.s32.totalorder %s28, 0
    %p174 = por %p172, %p173
    %s176 = sadd.s32 %s175, 1
    %p179 = scmp.eq.s32.totalorder %s22, 1
    %p180 = scmp.ne.s32.totalorder %s175, %s177
    %p181 = scmp.eq.s32.totalorder %s22, 0
    %p182 = por %p180, %p181
    %p183 = scmp.ne.s32.totalorder %s175, %s177
    %p184 = scmp.eq.s32.totalorder %s27, 1
    %p185 = por %p183, %p184
    %p186 = scmp.ne.s32.totalorder %s177, %s178
    %p187 = scmp.eq.s32.totalorder %s27, 0
    %p188 = por %p186, %p187
    %p189 = scmp.ne.s32.totalorder %s177, %s178
    %p190 = scmp.eq.s32.totalorder %s28, 1
    %p191 = por %p189, %p190
    %p193 = scmp.ne.s32.totalorder %s178, %s192
    %p194 = scmp.eq.s32.totalorder %s28, 0
    %p195 = por %p193, %p194
    %s197 = sadd.s32 %s196, 1
    %p200 = scmp.eq.s32.totalorder %s22, 1
    %p201 = scmp.ne.s32.totalorder %s196, %s198
    %p202 = scmp.eq.s32.totalorder %s22, 0
    %p203 = por %p201, %p202
    %p204 = scmp.ne.s32.totalorder %s196, %s198
    %p205 = scmp.eq.s32.totalorder %s27, 1
    %p206 = por %p204, %p205
    %p207 = scmp.ne.s32.totalorder %s198, %s199
    %p208 = scmp.eq.s32.totalorder %s27, 0
    %p209 = por %p207, %p208
    %p210 = scmp.ne.s32.totalorder %s198, %s199
    %p211 = scmp.eq.s32.totalorder %s28, 1
    %p212 = por %p210, %p211
    %p214 = scmp.ne.s32.totalorder %s199, %s213
    %p215 = scmp.eq.s32.totalorder %s28, 0
    %p216 = por %p214, %p215
    %s218 = sadd.s32 %s217, 1
    %p221 = scmp.eq.s32.totalorder %s22, 1
    %p222 = scmp.ne.s32.totalorder %s217, %s219
    %p223 = scmp.eq.s32.totalorder %s22, 0
    %p224 = por %p222, %p223
    %p225 = scmp.ne.s32.totalorder %s217, %s219
    %p226 = scmp.eq.s32.totalorder %s27, 1
    %p227 = por %p225, %p226
    %p228 = scmp.ne.s32.totalorder %s219, %s220
    %p229 = scmp.eq.s32.totalorder %s27, 0
    %p230 = por %p228, %p229
    %p231 = scmp.ne.s32.totalorder %s219, %s220
    %p232 = scmp.eq.s32.totalorder %s28, 1
    %p233 = por %p231, %p232
    %p235 = scmp.ne.s32.totalorder %s220, %s234
    %p236 = scmp.eq.s32.totalorder %s28, 0
    %p237 = por %p235, %p236
    %s239 = sadd.s32 %s238, 1
    %p242 = scmp.eq.s32.totalorder %s22, 1
    %p243 = scmp.ne.s32.totalorder %s238, %s240
    %p244 = scmp.eq.s32.totalorder %s22, 0
    %p245 = por %p243, %p244
    %p246 = scmp.ne.s32.totalorder %s238, %s240
    %p247 = scmp.eq.s32.totalorder %s27, 1
    %p248 = por %p246, %p247
    %p249 = scmp.ne.s32.totalorder %s240, %s241
    %p250 = scmp.eq.s32.totalorder %s27, 0
    %p251 = por %p249, %p250
    %p252 = scmp.ne.s32.totalorder %s240, %s241
    %p253 = scmp.eq.s32.totalorder %s28, 1
    %p254 = por %p252, %p253
    %p256 = scmp.ne.s32.totalorder %s241, %s255
    %p257 = scmp.eq.s32.totalorder %s28, 0
    %p258 = por %p256, %p257
    %s260 = sadd.s32 %s259, 1
    %p263 = scmp.eq.s32.totalorder %s22, 1
    %p264 = scmp.ne.s32.totalorder %s259, %s261
    %p265 = scmp.eq.s32.totalorder %s22, 0
    %p266 = por %p264, %p265
    %p267 = scmp.ne.s32.totalorder %s259, %s261
    %p268 = scmp.eq.s32.totalorder %s27, 1
    %p269 = por %p267, %p268
    %p270 = scmp.ne.s32.totalorder %s261, %s262
    %p271 = scmp.eq.s32.totalorder %s27, 0
    %p272 = por %p270, %p271
    %p273 = scmp.ne.s32.totalorder %s261, %s262
    %p274 = scmp.eq.s32.totalorder %s28, 1
    %p275 = por %p273, %p274
    %p277 = scmp.ne.s32.totalorder %s262, %s276
    %p278 = scmp.eq.s32.totalorder %s28, 0
    %p279 = por %p277, %p278
    %s281 = sadd.s32 %s280, 1
    %p284 = scmp.eq.s32.totalorder %s22, 1
    %p285 = scmp.ne.s32.totalorder %s280, %s282
    %p286 = scmp.eq.s32.totalorder %s22, 0
    %p287 = por %p285, %p286
    %p288 = scmp.ne.s32.totalorder %s280, %s282
    %p289 = scmp.eq.s32.totalorder %s27, 1
    %p290 = por %p288, %p289
    %p291 = scmp.ne.s32.totalorder %s282, %s283
    %p292 = scmp.eq.s32.totalorder %s27, 0
    %p293 = por %p291, %p292
    %p294 = scmp.ne.s32.totalorder %s282, %s283
    %p295 = scmp.eq.s32.totalorder %s28, 1
    %p296 = por %p294, %p295
    %p298 = scmp.ne.s32.totalorder %s283, %s297
    %p299 = scmp.eq.s32.totalorder %s28, 0
    %p300 = por %p298, %p299
    %s302 = sadd.s32 %s301, 1
    %p305 = scmp.eq.s32.totalorder %s22, 1
    %p306 = scmp.ne.s32.totalorder %s301, %s303
    %p307 = scmp.eq.s32.totalorder %s22, 0
    %p308 = por %p306, %p307
    %p309 = scmp.ne.s32.totalorder %s301, %s303
    %p310 = scmp.eq.s32.totalorder %s27, 1
    %p311 = por %p309, %p310
    %p312 = scmp.ne.s32.totalorder %s303, %s304
    %p313 = scmp.eq.s32.totalorder %s27, 0
    %p314 = por %p312, %p313
    %p315 = scmp.ne.s32.totalorder %s303, %s304
    %p316 = scmp.eq.s32.totalorder %s28, 1
    %p317 = por %p315, %p316
    %p319 = scmp.ne.s32.totalorder %s304, %s318
    %p320 = scmp.eq.s32.totalorder %s28, 0
    %p321 = por %p319, %p320
    %s323 = sadd.s32 %s322, 1
    %p326 = scmp.eq.s32.totalorder %s22, 1
    %p327 = scmp.ne.s32.totalorder %s322, %s324
    %p328 = scmp.eq.s32.totalorder %s22, 0
    %p329 = por %p327, %p328
    %p330 = scmp.ne.s32.totalorder %s322, %s324
    %p331 = scmp.eq.s32.totalorder %s27, 1
    %p332 = por %p330, %p331
    %p333 = scmp.ne.s32.totalorder %s324, %s325
    %p334 = scmp.eq.s32.totalorder %s27, 0
    %p335 = por %p333, %p334
    %p336 = scmp.ne.s32.totalorder %s324, %s325
    %p337 = scmp.eq.s32.totalorder %s28, 1
    %p338 = por %p336, %p337
    %p340 = scmp.ne.s32.totalorder %s325, %s339
    %p341 = scmp.eq.s32.totalorder %s28, 0
    %p342 = por %p340, %p341
    %s344 = sadd.s32 %s343, 1
    %p347 = scmp.eq.s32.totalorder %s22, 1
    %p348 = scmp.ne.s32.totalorder %s343, %s345
    %p349 = scmp.eq.s32.totalorder %s22, 0
    %p350 = por %p348, %p349
    %p351 = scmp.ne.s32.totalorder %s343, %s345
    %p352 = scmp.eq.s32.totalorder %s27, 1
    %p353 = por %p351, %p352
    %p354 = scmp.ne.s32.totalorder %s345, %s346
    %p355 = scmp.eq.s32.totalorder %s27, 0
    %p356 = por %p354, %p355
    %p357 = scmp.ne.s32.totalorder %s345, %s346
    %p358 = scmp.eq.s32.totalorder %s28, 1
    %p359 = por %p357, %p358
    %p361 = scmp.ne.s32.totalorder %s346, %s360
    %p362 = scmp.eq.s32.totalorder %s28, 0
    %p363 = por %p361, %p362
    %s365 = sadd.s32 %s364, 1
    %p368 = scmp.eq.s32.totalorder %s22, 1
    %p369 = scmp.ne.s32.totalorder %s364, %s366
    %p370 = scmp.eq.s32.totalorder %s22, 0
    %p371 = por %p369, %p370
    %p372 = scmp.ne.s32.totalorder %s364, %s366
    %p373 = scmp.eq.s32.totalorder %s27, 1
    %p374 = por %p372, %p373
    %p375 = scmp.ne.s32.totalorder %s366, %s367
    %p376 = scmp.eq.s32.totalorder %s27, 0
    %p377 = por %p375, %p376
    %p378 = scmp.ne.s32.totalorder %s366, %s367
    %p379 = scmp.eq.s32.totalorder %s28, 1
    %p380 = por %p378, %p379
    %p382 = scmp.ne.s32.totalorder %s367, %s381
    %p383 = scmp.eq.s32.totalorder %s28, 0
    %p384 = por %p382, %p383
    %s386 = sadd.s32 %s385, 1
    %p389 = scmp.eq.s32.totalorder %s22, 1
    %p390 = scmp.ne.s32.totalorder %s385, %s387
    %p391 = scmp.eq.s32.totalorder %s22, 0
    %p392 = por %p390, %p391
    %p393 = scmp.ne.s32.totalorder %s385, %s387
    %p394 = scmp.eq.s32.totalorder %s27, 1
    %p395 = por %p393, %p394
    %p396 = scmp.ne.s32.totalorder %s387, %s388
    %p397 = scmp.eq.s32.totalorder %s27, 0
    %p398 = por %p396, %p397
    %p399 = scmp.ne.s32.totalorder %s387, %s388
    %p400 = scmp.eq.s32.totalorder %s28, 1
    %p401 = por %p399, %p400
    %p403 = scmp.ne.s32.totalorder %s388, %s402
    %p404 = scmp.eq.s32.totalorder %s28, 0
    %p405 = por %p403, %p404
    %s406 = ssub.s32 %s29, %s41
    %s407 = ssub.s32 %s30, %s37
    %s408 = sor.u32 %s406, %s407
    %p409 = scmp.eq.s32.totalorder %s408, 0
    %s411 = sadd.s32 %s410, 1
    %s412 = scalar_select %p409, %s410, %s411
    %p415 = pneg %p409
    %p416 = scmp.eq.s32.totalorder %s22, 1
    %p417 = por %p415, %p416
    %p418 = scmp.ne.s32.totalorder %s410, %s413
    %p419 = scmp.eq.s32.totalorder %s22, 0
    %p420 = por %p418, %p419
    %p421 = scmp.ne.s32.totalorder %s410, %s413
    %p422 = scmp.eq.s32.totalorder %s27, 1
    %p423 = por %p421, %p422
    %p424 = scmp.ne.s32.totalorder %s413, %s414
    %p425 = scmp.eq.s32.totalorder %s27, 0
    %p426 = por %p424, %p425
    %p427 = scmp.ne.s32.totalorder %s413, %s414
    %p428 = scmp.eq.s32.totalorder %s28, 1
    %p429 = por %p427, %p428
    %p431 = scmp.ne.s32.totalorder %s414, %s430
    %p432 = scmp.eq.s32.totalorder %s28, 0
    %p433 = por %p431, %p432
    %p434 = scmp.le.s32.totalorder 1, %s22
    %p435 = scmp.lt.s32.totalorder %s22, 3
    %p436 = pnand %p434, %p435
    %p437 = pneg %p436
    // Predicated region
    $region9: #{spatial_pyramid_pooling.9} parent=5 // pred_check
      _
    $region10: #{spatial_pyramid_pooling.9} parent=5 // pred_check_branch
      %439 = sbr.rel (%p436) target = $region12
    $region11: #{spatial_pyramid_pooling.9} parent=5 // pred_region
      %s440 = ssub.s32 %s22, 1
      // Predicated region
      $region13: #{spatial_pyramid_pooling.9} parent=11 // pred_check
        %p441 = pneg %p167
      $region14: #{spatial_pyramid_pooling.9} parent=11 // pred_check_branch
        %443 = sbr.rel (%p441) target = $region16
      $region15: #{spatial_pyramid_pooling.9} parent=11 // pred_region
        _
      $region16: #{spatial_pyramid_pooling.9} parent=11 // pred_fallthru
        _
      // Predicated region
      $region17: #{spatial_pyramid_pooling.9} parent=11 // pred_check
        %p444 = pneg %p188
      $region18: #{spatial_pyramid_pooling.9} parent=11 // pred_check_branch
        %446 = sbr.rel (%p444) target = $region20
      $region19: #{spatial_pyramid_pooling.9} parent=11 // pred_region
        _
      $region20: #{spatial_pyramid_pooling.9} parent=11 // pred_fallthru
        _
      // Predicated region
      $region21: #{spatial_pyramid_pooling.9} parent=11 // pred_check
        %p447 = pneg %p209
      $region22: #{spatial_pyramid_pooling.9} parent=11 // pred_check_branch
        %449 = sbr.rel (%p447) target = $region24
      $region23: #{spatial_pyramid_pooling.9} parent=11 // pred_region
        _
      $region24: #{spatial_pyramid_pooling.9} parent=11 // pred_fallthru
        _
      // Predicated region
      $region25: #{spatial_pyramid_pooling.9} parent=11 // pred_check
        %p450 = pneg %p230
      $region26: #{spatial_pyramid_pooling.9} parent=11 // pred_check_branch
        %452 = sbr.rel (%p450) target = $region28
      $region27: #{spatial_pyramid_pooling.9} parent=11 // pred_region
        _
      $region28: #{spatial_pyramid_pooling.9} parent=11 // pred_fallthru
        _
      // Predicated region
      $region29: #{spatial_pyramid_pooling.9} parent=11 // pred_check
        %p453 = pneg %p251
      $region30: #{spatial_pyramid_pooling.9} parent=11 // pred_check_branch
        %455 = sbr.rel (%p453) target = $region32
      $region31: #{spatial_pyramid_pooling.9} parent=11 // pred_region
        _
      $region32: #{spatial_pyramid_pooling.9} parent=11 // pred_fallthru
        _
      // Predicated region
      $region33: #{spatial_pyramid_pooling.9} parent=11 // pred_check
        %p456 = pneg %p272
      $region34: #{spatial_pyramid_pooling.9} parent=11 // pred_check_branch
        %458 = sbr.rel (%p456) target = $region36
      $region35: #{spatial_pyramid_pooling.9} parent=11 // pred_region
        _
      $region36: #{spatial_pyramid_pooling.9} parent=11 // pred_fallthru
        _
      // Predicated region
      $region37: #{spatial_pyramid_pooling.9} parent=11 // pred_check
        %p459 = pneg %p293
      $region38: #{spatial_pyramid_pooling.9} parent=11 // pred_check_branch
        %461 = sbr.rel (%p459) target = $region40
      $region39: #{spatial_pyramid_pooling.9} parent=11 // pred_region
        _
      $region40: #{spatial_pyramid_pooling.9} parent=11 // pred_fallthru
        _
      // Predicated region
      $region41: #{spatial_pyramid_pooling.9} parent=11 // pred_check
        %p462 = pneg %p314
      $region42: #{spatial_pyramid_pooling.9} parent=11 // pred_check_branch
        %464 = sbr.rel (%p462) target = $region44
      $region43: #{spatial_pyramid_pooling.9} parent=11 // pred_region
        _
      $region44: #{spatial_pyramid_pooling.9} parent=11 // pred_fallthru
        _
      // Predicated region
      $region45: #{spatial_pyramid_pooling.9} parent=11 // pred_check
        %p465 = pneg %p335
      $region46: #{spatial_pyramid_pooling.9} parent=11 // pred_check_branch
        %467 = sbr.rel (%p465) target = $region48
      $region47: #{spatial_pyramid_pooling.9} parent=11 // pred_region
        _
      $region48: #{spatial_pyramid_pooling.9} parent=11 // pred_fallthru
        _
      // Predicated region
      $region49: #{spatial_pyramid_pooling.9} parent=11 // pred_check
        %p468 = pneg %p356
      $region50: #{spatial_pyramid_pooling.9} parent=11 // pred_check_branch
        %470 = sbr.rel (%p468) target = $region52
      $region51: #{spatial_pyramid_pooling.9} parent=11 // pred_region
        _
      $region52: #{spatial_pyramid_pooling.9} parent=11 // pred_fallthru
        _
      // Predicated region
      $region53: #{spatial_pyramid_pooling.9} parent=11 // pred_check
        %p471 = pneg %p377
      $region54: #{spatial_pyramid_pooling.9} parent=11 // pred_check_branch
        %473 = sbr.rel (%p471) target = $region56
      $region55: #{spatial_pyramid_pooling.9} parent=11 // pred_region
        _
      $region56: #{spatial_pyramid_pooling.9} parent=11 // pred_fallthru
        _
      // Predicated region
      $region57: #{spatial_pyramid_pooling.9} parent=11 // pred_check
        %p474 = pneg %p398
      $region58: #{spatial_pyramid_pooling.9} parent=11 // pred_check_branch
        %476 = sbr.rel (%p474) target = $region60
      $region59: #{spatial_pyramid_pooling.9} parent=11 // pred_region
        _
      $region60: #{spatial_pyramid_pooling.9} parent=11 // pred_fallthru
        _
    $region12: #{spatial_pyramid_pooling.9} parent=5 // pred_fallthru
      _
    %p477 = scmp.lt.s32.totalorder %s22, 2
    // Predicated region
    $region61: #{spatial_pyramid_pooling.9} parent=5 // pred_check
      %p478 = pneg %p477
    $region62: #{spatial_pyramid_pooling.9} parent=5 // pred_check_branch
      %480 = sbr.rel (%p478) target = $region64
    $region63: #{spatial_pyramid_pooling.9} parent=5 // pred_region
      // Predicated region
      $region65: #{spatial_pyramid_pooling.9} parent=63 // pred_check
        %p481 = pneg %p56
      $region66: #{spatial_pyramid_pooling.9} parent=63 // pred_check_branch
        %483 = sbr.rel (%p481) target = $region68
      $region67: #{spatial_pyramid_pooling.9} parent=63 // pred_region
        %s484 = smul.u32 2, %s30
        %p485 = scmp.lt.s32.totalorder %s29, 1
        %s486 = scalar_select %p485, %s29, 1
        %p487 = scmp.lt.s32.totalorder %s484, 1
        %s488 = scalar_select %p487, %s484, 1
        %s489 = smul.addr %s486, 16
        %s490 = sadd.s32 %s488, %s489
        %s491 = smul.addr %s490, 8
        %s492 = scalar_lea.vmem %s0, %s491
        %s493 = smul.u32 2, %s30
      $region68: #{spatial_pyramid_pooling.9} parent=63 // pred_fallthru
        _
      // Predicated region
      $region69: #{spatial_pyramid_pooling.9} parent=63 // pred_check
        %p494 = pneg %p84
      $region70: #{spatial_pyramid_pooling.9} parent=63 // pred_check_branch
        %496 = sbr.rel (%p494) target = $region72
      $region71: #{spatial_pyramid_pooling.9} parent=63 // pred_region
        %s497 = smul.u32 2, %s30
        %p498 = scmp.lt.s32.totalorder %s29, 1
        %s499 = scalar_select %p498, %s29, 1
        %p500 = scmp.lt.s32.totalorder %s497, 1
        %s501 = scalar_select %p500, %s497, 1
        %s502 = smul.addr %s499, 8
        %s503 = sadd.s32 %s501, %s502
        %s504 = smul.addr %s503, 8
        %s505 = scalar_lea.vmem %s1, %s504
        %s506 = smul.u32 2, %s30
      $region72: #{spatial_pyramid_pooling.9} parent=63 // pred_fallthru
        _
      // Predicated region
      $region73: #{spatial_pyramid_pooling.9} parent=63 // pred_check
        %p507 = pneg %p112
      $region74: #{spatial_pyramid_pooling.9} parent=63 // pred_check_branch
        %509 = sbr.rel (%p507) target = $region76
      $region75: #{spatial_pyramid_pooling.9} parent=63 // pred_region
        %s510 = smul.u32 2, %s30
        %p511 = scmp.lt.s32.totalorder %s29, 1
        %s512 = scalar_select %p511, %s29, 1
        %p513 = scmp.lt.s32.totalorder %s510, 1
        %s514 = scalar_select %p513, %s510, 1
        %s515 = smul.addr %s512, 8
        %s516 = sadd.s32 %s514, %s515
        %s517 = smul.addr %s516, 8
        %s518 = scalar_lea.vmem %s2, %s517
        %s519 = smul.u32 2, %s30
      $region76: #{spatial_pyramid_pooling.9} parent=63 // pred_fallthru
        _
      // Predicated region
      $region77: #{spatial_pyramid_pooling.9} parent=63 // pred_check
        %p520 = pneg %p140
      $region78: #{spatial_pyramid_pooling.9} parent=63 // pred_check_branch
        %522 = sbr.rel (%p520) target = $region80
      $region79: #{spatial_pyramid_pooling.9} parent=63 // pred_region
        %s523 = smul.u32 2, %s30
        %p524 = scmp.lt.s32.totalorder %s29, 1
        %s525 = scalar_select %p524, %s29, 1
        %p526 = scmp.lt.s32.totalorder %s523, 1
        %s527 = scalar_select %p526, %s523, 1
        %s528 = smul.addr %s525, 8
        %s529 = sadd.s32 %s527, %s528
        %s530 = smul.addr %s529, 8
        %s531 = scalar_lea.vmem %s3, %s530
        %s532 = smul.u32 2, %s30
      $region80: #{spatial_pyramid_pooling.9} parent=63 // pred_fallthru
        _
    $region64: #{spatial_pyramid_pooling.9} parent=5 // pred_fallthru
      _
    %p533 = scmp.le.s32.totalorder 1, %s22
    %p534 = scmp.lt.s32.totalorder %s22, 3
    %p535 = pnand %p533, %p534
    %p536 = pneg %p535
    // Predicated region
    $region81: #{spatial_pyramid_pooling.9} parent=5 // pred_check
      _
    $region82: #{spatial_pyramid_pooling.9} parent=5 // pred_check_branch
      %538 = sbr.rel (%p535) target = $region84
    $region83: #{spatial_pyramid_pooling.9} parent=5 // pred_region
      %s539 = ssub.s32 %s22, 1
      %s540 = smul.u32 2, %s32
      %p541 = scmp.lt.s32.totalorder %s31, 1
      %s542 = scalar_select %p541, %s31, 1
      %p543 = scmp.lt.s32.totalorder %s540, 1
      %s544 = scalar_select %p543, %s540, 1
      %s545 = smul.addr %s542, 16
      %s546 = sadd.s32 %s544, %s545
      %s547 = smul.addr %s546, 8
      %s548 = scalar_lea.vmem %s0, %s547
      %p549 = pneg %p62
      %p550 = pneg %p59
      %s551 = smul.u32 2, %s32
      %p552 = scmp.lt.s32.totalorder %s31, 1
      %s553 = scalar_select %p552, %s31, 1
      %p554 = scmp.lt.s32.totalorder %s551, 1
      %s555 = scalar_select %p554, %s551, 1
      %s556 = smul.addr %s553, 8
      %s557 = sadd.s32 %s555, %s556
      %s558 = smul.addr %s557, 8
      %s559 = scalar_lea.vmem %s1, %s558
      %p560 = pneg %p90
      %p561 = pneg %p87
      %s562 = smul.u32 2, %s32
      %p563 = scmp.lt.s32.totalorder %s31, 1
      %s564 = scalar_select %p563, %s31, 1
      %p565 = scmp.lt.s32.totalorder %s562, 1
      %s566 = scalar_select %p565, %s562, 1
      %s567 = smul.addr %s564, 8
      %s568 = sadd.s32 %s566, %s567
      %s569 = smul.addr %s568, 8
      %s570 = scalar_lea.vmem %s2, %s569
      %p571 = pneg %p118
      %p572 = pneg %p115
      %s573 = smul.u32 2, %s32
      %p574 = scmp.lt.s32.totalorder %s31, 1
      %s575 = scalar_select %p574, %s31, 1
      %p576 = scmp.lt.s32.totalorder %s573, 1
      %s577 = scalar_select %p576, %s573, 1
      %s578 = smul.addr %s575, 8
      %s579 = sadd.s32 %s577, %s578
      %s580 = smul.addr %s579, 8
      %s581 = scalar_lea.vmem %s3, %s580
      %p582 = pneg %p146
      %p583 = pneg %p143
      %p584 = pneg %p167
      %p585 = pneg %p164
      %p586 = pneg %p188
      %p587 = pneg %p185
      %p588 = pneg %p209
      %p589 = pneg %p206
      %p590 = pneg %p230
      %p591 = pneg %p227
      %p592 = pneg %p251
      %p593 = pneg %p248
      %p594 = pneg %p272
      %p595 = pneg %p269
      %p596 = pneg %p293
      %p597 = pneg %p290
      %p598 = pneg %p314
      %p599 = pneg %p311
      %p600 = pneg %p335
      %p601 = pneg %p332
      %p602 = pneg %p356
      %p603 = pneg %p353
      %p604 = pneg %p377
      %p605 = pneg %p374
      %p606 = pneg %p398
      %p607 = pneg %p395
      %p608 = pneg %p426
      %p609 = pneg %p423
      %s610 = smul.u32 2, %s32
      %p611 = scmp.lt.s32.totalorder %s31, 1
      %s612 = scalar_select %p611, %s31, 1
      %p613 = scmp.lt.s32.totalorder %s610, 1
      %s614 = scalar_select %p613, %s610, 1
      %s615 = smul.addr %s612, 8
      %s616 = sadd.s32 %s614, %s615
      %s617 = smul.addr %s616, 8
      %s618 = scalar_lea.vmem %s16, %s617
      %s619 = smul.u32 2, %s32
      %p620 = scmp.lt.s32.totalorder %s31, 1
      %s621 = scalar_select %p620, %s31, 1
      %p622 = scmp.lt.s32.totalorder %s619, 1
      %s623 = scalar_select %p622, %s619, 1
      %s624 = smul.addr %s621, 16
      %s625 = sadd.s32 %s623, %s624
      %s626 = smul.addr %s625, 8
      %s627 = scalar_lea.vmem %s0, %s626
      %s628 = smul.u32 2, %s32
      %s629 = smul.u32 2, %s32
      %p630 = scmp.lt.s32.totalorder %s31, 1
      %s631 = scalar_select %p630, %s31, 1
      %p632 = scmp.lt.s32.totalorder %s629, 1
      %s633 = scalar_select %p632, %s629, 1
      %s634 = smul.addr %s631, 8
      %s635 = sadd.s32 %s633, %s634
      %s636 = smul.addr %s635, 8
      %s637 = scalar_lea.vmem %s1, %s636
      %s638 = smul.u32 2, %s32
      %s639 = smul.u32 2, %s32
      %p640 = scmp.lt.s32.totalorder %s31, 1
      %s641 = scalar_select %p640, %s31, 1
      %p642 = scmp.lt.s32.totalorder %s639, 1
      %s643 = scalar_select %p642, %s639, 1
      %s644 = smul.addr %s641, 8
      %s645 = sadd.s32 %s643, %s644
      %s646 = smul.addr %s645, 8
      %s647 = scalar_lea.vmem %s2, %s646
      %s648 = smul.u32 2, %s32
      %s649 = smul.u32 2, %s32
      %p650 = scmp.lt.s32.totalorder %s31, 1
      %s651 = scalar_select %p650, %s31, 1
      %p652 = scmp.lt.s32.totalorder %s649, 1
      %s653 = scalar_select %p652, %s649, 1
      %s654 = smul.addr %s651, 8
      %s655 = sadd.s32 %s653, %s654
      %s656 = smul.addr %s655, 8
      %s657 = scalar_lea.vmem %s3, %s656
      %s658 = smul.u32 2, %s32
      %s659 = smul.u32 2, %s32
      %p660 = scmp.lt.s32.totalorder %s31, 1
      %s661 = scalar_select %p660, %s31, 1
      %p662 = scmp.lt.s32.totalorder %s659, 1
      %s663 = scalar_select %p662, %s659, 1
      %s664 = smul.addr %s661, 8
      %s665 = sadd.s32 %s663, %s664
      %s666 = smul.addr %s665, 8
      %s667 = scalar_lea.vmem %s16, %s666
      %s668 = smul.u32 2, %s32
      %v670 = vld [vmem:[%s627] sm:$0xff]
      %v671 = vld [vmem:[%s627 + $0x8] sm:$0xff]
      %v672 = vld [vmem:[%s627 + $0x10] sm:$0xff]
      %v673 = vld [vmem:[%s627 + $0x18] sm:$0xff]
      %v674 = vld [vmem:[%s627 + $0x20] sm:$0xff]
      %v675 = vld [vmem:[%s627 + $0x28] sm:$0xff]
      %v676 = vld [vmem:[%s627 + $0x30] sm:$0xff]
      %v677 = vld [vmem:[%s627 + $0x38] sm:$0xff]
      %v678 = vld [vmem:[%s627 + $0x40] sm:$0xff]
      %v679 = vld [vmem:[%s627 + $0x48] sm:$0xff]
      %v680 = vld [vmem:[%s627 + $0x50] sm:$0xff]
      %v681 = vld [vmem:[%s627 + $0x58] sm:$0xff]
      %v682 = vld [vmem:[%s627 + $0x60] sm:$0xff]
      %v683 = vld [vmem:[%s627 + $0x68] sm:$0xff]
      %v684 = vld [vmem:[%s627 + $0x70] sm:$0xff]
      %v685 = vld [vmem:[%s627 + $0x78] sm:$0xff]
      %v686 = vld [vmem:[%s4] sm:$0xff]
      %v687 = vld [vmem:[%s4 + $0x8] sm:$0xff]
      %v688 = vld [vmem:[%s4 + $0x10] sm:$0xff]
      %v689 = vld [vmem:[%s4 + $0x18] sm:$0xff]
      %v690 = vld [vmem:[%s4 + $0x20] sm:$0xff]
      %v691 = vld [vmem:[%s4 + $0x28] sm:$0xff]
      %v692 = vld [vmem:[%s4 + $0x30] sm:$0xff]
      %v693 = vld [vmem:[%s4 + $0x38] sm:$0xff]
      %695 = vset.pattern.permute.xlu0 0
      %696 = vperm.xlu0 %695, %v686
      %v697 = vpop.permute.xlu0 %696
      %700 = vset.pattern.permute.xlu0 0
      %701 = vperm.xlu0 %700, %v687
      %v702 = vpop.permute.xlu0 %701
      %705 = vset.pattern.permute.xlu0 0
      %706 = vperm.xlu0 %705, %v688
      %v707 = vpop.permute.xlu0 %706
      %710 = vset.pattern.permute.xlu0 0
      %711 = vperm.xlu0 %710, %v689
      %v712 = vpop.permute.xlu0 %711
      %715 = vset.pattern.permute.xlu0 0
      %716 = vperm.xlu0 %715, %v690
      %v717 = vpop.permute.xlu0 %716
      %720 = vset.pattern.permute.xlu0 0
      %721 = vperm.xlu0 %720, %v691
      %v722 = vpop.permute.xlu0 %721
      %725 = vset.pattern.permute.xlu0 0
      %726 = vperm.xlu0 %725, %v692
      %v727 = vpop.permute.xlu0 %726
      %730 = vset.pattern.permute.xlu0 0
      %731 = vperm.xlu0 %730, %v693
      %v732 = vpop.permute.xlu0 %731
      %v734 = vmul.f32 %v670, %v697
      %v735 = vmul.f32 %v671, %v697
      %v736 = vmul.f32 %v672, %v702
      %v737 = vmul.f32 %v673, %v702
      %v738 = vmul.f32 %v674, %v707
      %v739 = vmul.f32 %v675, %v707
      %v740 = vmul.f32 %v676, %v712
      %v741 = vmul.f32 %v677, %v712
      %v742 = vmul.f32 %v678, %v717
      %v743 = vmul.f32 %v679, %v717
      %v744 = vmul.f32 %v680, %v722
      %v745 = vmul.f32 %v681, %v722
      %v746 = vmul.f32 %v682, %v727
      %v747 = vmul.f32 %v683, %v727
      %v748 = vmul.f32 %v684, %v732
      %v749 = vmul.f32 %v685, %v732
      %v750 = vld [vmem:[%s8] sm:$0xff]
      %v751 = vld [vmem:[%s8 + $0x8] sm:$0xff]
      %v752 = vld [vmem:[%s8 + $0x10] sm:$0xff]
      %v753 = vld [vmem:[%s8 + $0x18] sm:$0xff]
      %v754 = vld [vmem:[%s8 + $0x20] sm:$0xff]
      %v755 = vld [vmem:[%s8 + $0x28] sm:$0xff]
      %v756 = vld [vmem:[%s8 + $0x30] sm:$0xff]
      %v757 = vld [vmem:[%s8 + $0x38] sm:$0xff]
      %759 = vset.pattern.permute.xlu0 0
      %760 = vperm.xlu0 %759, %v750
      %v761 = vpop.permute.xlu0 %760
      %764 = vset.pattern.permute.xlu0 0
      %765 = vperm.xlu0 %764, %v751
      %v766 = vpop.permute.xlu0 %765
      %769 = vset.pattern.permute.xlu0 0
      %770 = vperm.xlu0 %769, %v752
      %v771 = vpop.permute.xlu0 %770
      %774 = vset.pattern.permute.xlu0 0
      %775 = vperm.xlu0 %774, %v753
      %v776 = vpop.permute.xlu0 %775
      %779 = vset.pattern.permute.xlu0 0
      %780 = vperm.xlu0 %779, %v754
      %v781 = vpop.permute.xlu0 %780
      %784 = vset.pattern.permute.xlu0 0
      %785 = vperm.xlu0 %784, %v755
      %v786 = vpop.permute.xlu0 %785
      %789 = vset.pattern.permute.xlu0 0
      %790 = vperm.xlu0 %789, %v756
      %v791 = vpop.permute.xlu0 %790
      %794 = vset.pattern.permute.xlu0 0
      %795 = vperm.xlu0 %794, %v757
      %v796 = vpop.permute.xlu0 %795
      %v798 = vadd.f32 %v734, %v761
      %v799 = vadd.f32 %v735, %v761
      %v800 = vadd.f32 %v736, %v766
      %v801 = vadd.f32 %v737, %v766
      %v802 = vadd.f32 %v738, %v771
      %v803 = vadd.f32 %v739, %v771
      %v804 = vadd.f32 %v740, %v776
      %v805 = vadd.f32 %v741, %v776
      %v806 = vadd.f32 %v742, %v781
      %v807 = vadd.f32 %v743, %v781
      %v808 = vadd.f32 %v744, %v786
      %v809 = vadd.f32 %v745, %v786
      %v810 = vadd.f32 %v746, %v791
      %v811 = vadd.f32 %v747, %v791
      %v812 = vadd.f32 %v748, %v796
      %v813 = vadd.f32 %v749, %v796
      %v814 = vmax.f32 %v798, 0.0
      %v815 = vmax.f32 %v799, 0.0
      %v816 = vmax.f32 %v800, 0.0
      %v817 = vmax.f32 %v801, 0.0
      %v818 = vmax.f32 %v802, 0.0
      %v819 = vmax.f32 %v803, 0.0
      %v820 = vmax.f32 %v804, 0.0
      %v821 = vmax.f32 %v805, 0.0
      %v822 = vmax.f32 %v806, 0.0
      %v823 = vmax.f32 %v807, 0.0
      %v824 = vmax.f32 %v808, 0.0
      %v825 = vmax.f32 %v809, 0.0
      %v826 = vmax.f32 %v810, 0.0
      %v827 = vmax.f32 %v811, 0.0
      %v828 = vmax.f32 %v812, 0.0
      %v829 = vmax.f32 %v813, 0.0
      %v830 = vld [vmem:[%s12] sm:$0xf]
      %v831 = vld [vmem:[%s12 + $0x4] sm:$0xf]
      %v832 = vld [vmem:[%s12 + $0x8] sm:$0xf]
      %v833 = vld [vmem:[%s12 + $0xc] sm:$0xf]
      %v834 = vpack.c.bf16 %v816, %v814
      %v835 = vpack.c.bf16 %v817, %v815
      %v836 = vpack.c.bf16 %v820, %v818
      %v837 = vpack.c.bf16 %v821, %v819
      %v838 = vpack.c.bf16 %v824, %v822
      %v839 = vpack.c.bf16 %v825, %v823
      %v840 = vpack.c.bf16 %v828, %v826
      %v841 = vpack.c.bf16 %v829, %v827
      %v842 = vld [vmem:[%s637] sm:$0xff]
      %v843 = vld [vmem:[%s637 + $0x8] sm:$0xff]
      %v844 = vld [vmem:[%s637 + $0x10] sm:$0xff]
      %v845 = vld [vmem:[%s637 + $0x18] sm:$0xff]
      %v846 = vld [vmem:[%s637 + $0x20] sm:$0xff]
      %v847 = vld [vmem:[%s637 + $0x28] sm:$0xff]
      %v848 = vld [vmem:[%s637 + $0x30] sm:$0xff]
      %v849 = vld [vmem:[%s637 + $0x38] sm:$0xff]
      %v850 = vld [vmem:[%s5] sm:$0xff]
      %v851 = vld [vmem:[%s5 + $0x8] sm:$0xff]
      %v852 = vld [vmem:[%s5 + $0x10] sm:$0xff]
      %v853 = vld [vmem:[%s5 + $0x18] sm:$0xff]
      %855 = vset.pattern.permute.xlu0 0
      %856 = vperm.xlu0 %855, %v850
      %v857 = vpop.permute.xlu0 %856
      %860 = vset.pattern.permute.xlu0 0
      %861 = vperm.xlu0 %860, %v851
      %v862 = vpop.permute.xlu0 %861
      %865 = vset.pattern.permute.xlu0 0
      %866 = vperm.xlu0 %865, %v852
      %v867 = vpop.permute.xlu0 %866
      %870 = vset.pattern.permute.xlu0 0
      %871 = vperm.xlu0 %870, %v853
      %v872 = vpop.permute.xlu0 %871
      %v874 = vmul.f32 %v842, %v857
      %v875 = vmul.f32 %v843, %v857
      %v876 = vmul.f32 %v844, %v862
      %v877 = vmul.f32 %v845, %v862
      %v878 = vmul.f32 %v846, %v867
      %v879 = vmul.f32 %v847, %v867
      %v880 = vmul.f32 %v848, %v872
      %v881 = vmul.f32 %v849, %v872
      %v882 = vld [vmem:[%s9] sm:$0xff]
      %v883 = vld [vmem:[%s9 + $0x8] sm:$0xff]
      %v884 = vld [vmem:[%s9 + $0x10] sm:$0xff]
      %v885 = vld [vmem:[%s9 + $0x18] sm:$0xff]
      %887 = vset.pattern.permute.xlu0 0
      %888 = vperm.xlu0 %887, %v882
      %v889 = vpop.permute.xlu0 %888
      %892 = vset.pattern.permute.xlu0 0
      %893 = vperm.xlu0 %892, %v883
      %v894 = vpop.permute.xlu0 %893
      %897 = vset.pattern.permute.xlu0 0
      %898 = vperm.xlu0 %897, %v884
      %v899 = vpop.permute.xlu0 %898
      %902 = vset.pattern.permute.xlu0 0
      %903 = vperm.xlu0 %902, %v885
      %v904 = vpop.permute.xlu0 %903
      %v906 = vadd.f32 %v874, %v889
      %v907 = vadd.f32 %v875, %v889
      %v908 = vadd.f32 %v876, %v894
      %v909 = vadd.f32 %v877, %v894
      %v910 = vadd.f32 %v878, %v899
      %v911 = vadd.f32 %v879, %v899
      %v912 = vadd.f32 %v880, %v904
      %v913 = vadd.f32 %v881, %v904
      %v914 = vmax.f32 %v906, 0.0
      %v915 = vmax.f32 %v907, 0.0
      %v916 = vmax.f32 %v908, 0.0
      %v917 = vmax.f32 %v909, 0.0
      %v918 = vmax.f32 %v910, 0.0
      %v919 = vmax.f32 %v911, 0.0
      %v920 = vmax.f32 %v912, 0.0
      %v921 = vmax.f32 %v913, 0.0
      %v922 = vld [vmem:[%s13] sm:$0xf]
      %v923 = vld [vmem:[%s13 + $0x4] sm:$0xf]
      %v924 = vld [vmem:[%s13 + $0x8] sm:$0xf]
      %v925 = vld [vmem:[%s13 + $0xc] sm:$0xf]
      %v926 = vpack.c.bf16 %v916, %v914
      %v927 = vpack.c.bf16 %v917, %v915
      %v928 = vpack.c.bf16 %v920, %v918
      %v929 = vpack.c.bf16 %v921, %v919
      %v934 = vunpack.c.l.b16 %v922
      %v935 = vunpack.c.l.b16 %v923
      %v936 = vunpack.c.l.b16 %v924
      %v937 = vunpack.c.l.b16 %v925
      %v938 = vpack.c.b16 %v935, %v934
      %v939 = vpack.c.b16 %v937, %v936
      %vm940 = vcmask 261120
      %v942 = vsel %vm940, %v938, 0
      %v945 = vsel %vm940, %v939, 0
      %947 = vmatprep.subr.bf16.mxu0 %v927
      %948 = vmatpush1.bf16.msra.mxu0 %v926
      %949 = vmatprep.subr.bf16.mxu0 %v929
      %950 = vmatpush1.bf16.msra.mxu0 %v928
      %951 = vmatprep.subr.bf16.mxu0 0
      %952 = vmatpush1.bf16.msra.mxu0 0
      %953 = vmatprep.subr.bf16.mxu0 0
      %954 = vmatpush1.bf16.msra.mxu0 0
      %955 = vmatprep.subr.bf16.mxu0 0
      %956 = vmatpush1.bf16.msra.mxu0 0
      %957 = vmatprep.subr.bf16.mxu0 0
      %958 = vmatpush1.bf16.msra.mxu0 0
      %959 = vmatprep.subr.bf16.mxu0 0
      %960 = vmatpush1.bf16.msra.mxu0 0
      %961 = vmatprep.subr.bf16.mxu0 0
      %962 = vmatpush1.bf16.msra.mxu0 0
      %963 = vmatprep.subr.bf16.mxu0 0
      %964 = vmatpush1.bf16.msra.mxu0 0
      %965 = vmatprep.subr.bf16.mxu0 0
      %966 = vmatpush1.bf16.msra.mxu0 0
      %967 = vmatprep.subr.bf16.mxu0 0
      %968 = vmatpush1.bf16.msra.mxu0 0
      %969 = vmatprep.subr.bf16.mxu0 0
      %970 = vmatpush1.bf16.msra.mxu0 0
      %971 = vmatprep.subr.bf16.mxu0 0
      %972 = vmatpush1.bf16.msra.mxu0 0
      %973 = vmatprep.subr.bf16.mxu0 0
      %974 = vmatpush1.bf16.msra.mxu0 0
      %975 = vmatprep.subr.bf16.mxu0 0
      %976 = vmatpush1.bf16.msra.mxu0 0
      %977 = vmatprep.subr.bf16.mxu0 0
      %978 = vmatpush1.bf16.msra.mxu0 0
      %979 = vmatprep.mubr.bf16.mxu0 0
      %980 = vmatmul.mubr.bf16.gmra.mrb[0].mxu0 %v942
      %v981 = vpop.f32.mrb[0].mxu0
      %v982 = vadd.f32 0.0, %v981
      %v983 = vpop.f32.mrb[0].mxu0
      %v984 = vadd.f32 0.0, %v983
      %v985 = vpop.f32.mrb[0].mxu0
      %v986 = vadd.f32 0.0, %v985
      %v987 = vpop.f32.mrb[0].mxu0
      %v988 = vadd.f32 0.0, %v987
      %989 = vmatprep.mubr.bf16.mxu0 0
      %990 = vmatmul.mubr.bf16.gmra.mrb[0].mxu0 %v945
      %v991 = vpop.f32.mrb[0].mxu0
      %v992 = vadd.f32 0.0, %v991
      %v993 = vpop.f32.mrb[0].mxu0
      %v994 = vadd.f32 0.0, %v993
      %v995 = vpop.f32.mrb[0].mxu0
      %v996 = vadd.f32 0.0, %v995
      %v997 = vpop.f32.mrb[0].mxu0
      %v998 = vadd.f32 0.0, %v997
      %999 = vdwg.mxu0
      %v1004 = vunpack.c.l.b16 %v830
      %v1005 = vunpack.c.l.b16 %v831
      %v1006 = vunpack.c.l.b16 %v832
      %v1007 = vunpack.c.l.b16 %v833
      %v1008 = vpack.c.b16 %v1005, %v1004
      %v1009 = vpack.c.b16 %v1007, %v1006
      %vm1010 = vcmask 523264
      %v1012 = vsel %vm1010, %v1008, 0
      %v1015 = vsel %vm1010, %v1009, 0
      %1017 = vmatprep.subr.bf16.mxu0 %v835
      %1018 = vmatpush1.bf16.msra.mxu0 %v834
      %1019 = vmatprep.subr.bf16.mxu0 %v837
      %1020 = vmatpush1.bf16.msra.mxu0 %v836
      %1021 = vmatprep.subr.bf16.mxu0 %v839
      %1022 = vmatpush1.bf16.msra.mxu0 %v838
      %1023 = vmatprep.subr.bf16.mxu0 %v841
      %1024 = vmatpush1.bf16.msra.mxu0 %v840
      %1025 = vmatprep.subr.bf16.mxu0 0
      %1026 = vmatpush1.bf16.msra.mxu0 0
      %1027 = vmatprep.subr.bf16.mxu0 0
      %1028 = vmatpush1.bf16.msra.mxu0 0
      %1029 = vmatprep.subr.bf16.mxu0 0
      %1030 = vmatpush1.bf16.msra.mxu0 0
      %1031 = vmatprep.subr.bf16.mxu0 0
      %1032 = vmatpush1.bf16.msra.mxu0 0
      %1033 = vmatprep.subr.bf16.mxu0 0
      %1034 = vmatpush1.bf16.msra.mxu0 0
      %1035 = vmatprep.subr.bf16.mxu0 0
      %1036 = vmatpush1.bf16.msra.mxu0 0
      %1037 = vmatprep.subr.bf16.mxu0 0
      %1038 = vmatpush1.bf16.msra.mxu0 0
      %1039 = vmatprep.subr.bf16.mxu0 0
      %1040 = vmatpush1.bf16.msra.mxu0 0
      %1041 = vmatprep.subr.bf16.mxu0 0
      %1042 = vmatpush1.bf16.msra.mxu0 0
      %1043 = vmatprep.subr.bf16.mxu0 0
      %1044 = vmatpush1.bf16.msra.mxu0 0
      %1045 = vmatprep.subr.bf16.mxu0 0
      %1046 = vmatpush1.bf16.msra.mxu0 0
      %1047 = vmatprep.subr.bf16.mxu0 0
      %1048 = vmatpush1.bf16.msra.mxu0 0
      %1049 = vmatprep.mubr.bf16.mxu0 0
      %1050 = vmatmul.mubr.bf16.gmra.mrb[0].mxu0 %v1012
      %v1051 = vpop.f32.mrb[0].mxu0
      %v1052 = vadd.f32 %v982, %v1051
      %v1053 = vpop.f32.mrb[0].mxu0
      %v1054 = vadd.f32 %v984, %v1053
      %v1055 = vpop.f32.mrb[0].mxu0
      %v1056 = vadd.f32 %v986, %v1055
      %v1057 = vpop.f32.mrb[0].mxu0
      %v1058 = vadd.f32 %v988, %v1057
      %1059 = vmatprep.mubr.bf16.mxu0 0
      %1060 = vmatmul.mubr.bf16.gmra.mrb[0].mxu0 %v1015
      %v1061 = vpop.f32.mrb[0].mxu0
      %v1062 = vadd.f32 %v992, %v1061
      %v1063 = vpop.f32.mrb[0].mxu0
      %v1064 = vadd.f32 %v994, %v1063
      %v1065 = vpop.f32.mrb[0].mxu0
      %v1066 = vadd.f32 %v996, %v1065
      %v1067 = vpop.f32.mrb[0].mxu0
      %v1068 = vadd.f32 %v998, %v1067
      %1069 = vdwg.mxu0
      %v1070 = vld [vmem:[%s647] sm:$0xff]
      %v1071 = vld [vmem:[%s647 + $0x8] sm:$0xff]
      %v1072 = vld [vmem:[%s647 + $0x10] sm:$0xff]
      %v1073 = vld [vmem:[%s647 + $0x18] sm:$0xff]
      %v1074 = vld [vmem:[%s647 + $0x20] sm:$0xff]
      %v1075 = vld [vmem:[%s647 + $0x28] sm:$0xff]
      %v1076 = vld [vmem:[%s647 + $0x30] sm:$0xff]
      %v1077 = vld [vmem:[%s647 + $0x38] sm:$0xff]
      %v1078 = vld [vmem:[%s6] sm:$0xff]
      %v1079 = vld [vmem:[%s6 + $0x8] sm:$0xff]
      %v1080 = vld [vmem:[%s6 + $0x10] sm:$0xff]
      %v1081 = vld [vmem:[%s6 + $0x18] sm:$0xff]
      %1083 = vset.pattern.permute.xlu0 0
      %1084 = vperm.xlu0 %1083, %v1078
      %v1085 = vpop.permute.xlu0 %1084
      %1088 = vset.pattern.permute.xlu0 0
      %1089 = vperm.xlu0 %1088, %v1079
      %v1090 = vpop.permute.xlu0 %1089
      %1093 = vset.pattern.permute.xlu0 0
      %1094 = vperm.xlu0 %1093, %v1080
      %v1095 = vpop.permute.xlu0 %1094
      %1098 = vset.pattern.permute.xlu0 0
      %1099 = vperm.xlu0 %1098, %v1081
      %v1100 = vpop.permute.xlu0 %1099
      %v1102 = vmul.f32 %v1070, %v1085
      %v1103 = vmul.f32 %v1071, %v1085
      %v1104 = vmul.f32 %v1072, %v1090
      %v1105 = vmul.f32 %v1073, %v1090
      %v1106 = vmul.f32 %v1074, %v1095
      %v1107 = vmul.f32 %v1075, %v1095
      %v1108 = vmul.f32 %v1076, %v1100
      %v1109 = vmul.f32 %v1077, %v1100
      %v1110 = vld [vmem:[%s10] sm:$0xff]
      %v1111 = vld [vmem:[%s10 + $0x8] sm:$0xff]
      %v1112 = vld [vmem:[%s10 + $0x10] sm:$0xff]
      %v1113 = vld [vmem:[%s10 + $0x18] sm:$0xff]
      %1115 = vset.pattern.permute.xlu0 0
      %1116 = vperm.xlu0 %1115, %v1110
      %v1117 = vpop.permute.xlu0 %1116
      %1120 = vset.pattern.permute.xlu0 0
      %1121 = vperm.xlu0 %1120, %v1111
      %v1122 = vpop.permute.xlu0 %1121
      %1125 = vset.pattern.permute.xlu0 0
      %1126 = vperm.xlu0 %1125, %v1112
      %v1127 = vpop.permute.xlu0 %1126
      %1130 = vset.pattern.permute.xlu0 0
      %1131 = vperm.xlu0 %1130, %v1113
      %v1132 = vpop.permute.xlu0 %1131
      %v1134 = vadd.f32 %v1102, %v1117
      %v1135 = vadd.f32 %v1103, %v1117
      %v1136 = vadd.f32 %v1104, %v1122
      %v1137 = vadd.f32 %v1105, %v1122
      %v1138 = vadd.f32 %v1106, %v1127
      %v1139 = vadd.f32 %v1107, %v1127
      %v1140 = vadd.f32 %v1108, %v1132
      %v1141 = vadd.f32 %v1109, %v1132
      %v1142 = vmax.f32 %v1134, 0.0
      %v1143 = vmax.f32 %v1135, 0.0
      %v1144 = vmax.f32 %v1136, 0.0
      %v1145 = vmax.f32 %v1137, 0.0
      %v1146 = vmax.f32 %v1138, 0.0
      %v1147 = vmax.f32 %v1139, 0.0
      %v1148 = vmax.f32 %v1140, 0.0
      %v1149 = vmax.f32 %v1141, 0.0
      %v1150 = vld [vmem:[%s14] sm:$0xf]
      %v1151 = vld [vmem:[%s14 + $0x4] sm:$0xf]
      %v1152 = vld [vmem:[%s14 + $0x8] sm:$0xf]
      %v1153 = vld [vmem:[%s14 + $0xc] sm:$0xf]
      %v1154 = vpack.c.bf16 %v1144, %v1142
      %v1155 = vpack.c.bf16 %v1145, %v1143
      %v1156 = vpack.c.bf16 %v1148, %v1146
      %v1157 = vpack.c.bf16 %v1149, %v1147
      %v1162 = vunpack.c.l.b16 %v1150
      %v1163 = vunpack.c.l.b16 %v1151
      %v1164 = vunpack.c.l.b16 %v1152
      %v1165 = vunpack.c.l.b16 %v1153
      %v1166 = vpack.c.b16 %v1163, %v1162
      %v1167 = vpack.c.b16 %v1165, %v1164
      %v1169 = vsel %vm940, %v1166, 0
      %v1172 = vsel %vm940, %v1167, 0
      %1174 = vmatprep.subr.bf16.mxu0 %v1155
      %1175 = vmatpush1.bf16.msra.mxu0 %v1154
      %1176 = vmatprep.subr.bf16.mxu0 %v1157
      %1177 = vmatpush1.bf16.msra.mxu0 %v1156
      %1178 = vmatprep.subr.bf16.mxu0 0
      %1179 = vmatpush1.bf16.msra.mxu0 0
      %1180 = vmatprep.subr.bf16.mxu0 0
      %1181 = vmatpush1.bf16.msra.mxu0 0
      %1182 = vmatprep.subr.bf16.mxu0 0
      %1183 = vmatpush1.bf16.msra.mxu0 0
      %1184 = vmatprep.subr.bf16.mxu0 0
      %1185 = vmatpush1.bf16.msra.mxu0 0
      %1186 = vmatprep.subr.bf16.mxu0 0
      %1187 = vmatpush1.bf16.msra.mxu0 0
      %1188 = vmatprep.subr.bf16.mxu0 0
      %1189 = vmatpush1.bf16.msra.mxu0 0
      %1190 = vmatprep.subr.bf16.mxu0 0
      %1191 = vmatpush1.bf16.msra.mxu0 0
      %1192 = vmatprep.subr.bf16.mxu0 0
      %1193 = vmatpush1.bf16.msra.mxu0 0
      %1194 = vmatprep.subr.bf16.mxu0 0
      %1195 = vmatpush1.bf16.msra.mxu0 0
      %1196 = vmatprep.subr.bf16.mxu0 0
      %1197 = vmatpush1.bf16.msra.mxu0 0
      %1198 = vmatprep.subr.bf16.mxu0 0
      %1199 = vmatpush1.bf16.msra.mxu0 0
      %1200 = vmatprep.subr.bf16.mxu0 0
      %1201 = vmatpush1.bf16.msra.mxu0 0
      %1202 = vmatprep.subr.bf16.mxu0 0
      %1203 = vmatpush1.bf16.msra.mxu0 0
      %1204 = vmatprep.subr.bf16.mxu0 0
      %1205 = vmatpush1.bf16.msra.mxu0 0
      %1206 = vmatprep.mubr.bf16.mxu0 0
      %1207 = vmatmul.mubr.bf16.gmra.mrb[0].mxu0 %v1169
      %v1208 = vpop.f32.mrb[0].mxu0
      %v1209 = vadd.f32 0.0, %v1208
      %v1210 = vpop.f32.mrb[0].mxu0
      %v1211 = vadd.f32 0.0, %v1210
      %v1212 = vpop.f32.mrb[0].mxu0
      %v1213 = vadd.f32 0.0, %v1212
      %v1214 = vpop.f32.mrb[0].mxu0
      %v1215 = vadd.f32 0.0, %v1214
      %1216 = vmatprep.mubr.bf16.mxu0 0
      %1217 = vmatmul.mubr.bf16.gmra.mrb[0].mxu0 %v1172
      %v1218 = vpop.f32.mrb[0].mxu0
      %v1219 = vadd.f32 0.0, %v1218
      %v1220 = vpop.f32.mrb[0].mxu0
      %v1221 = vadd.f32 0.0, %v1220
      %v1222 = vpop.f32.mrb[0].mxu0
      %v1223 = vadd.f32 0.0, %v1222
      %v1224 = vpop.f32.mrb[0].mxu0
      %v1225 = vadd.f32 0.0, %v1224
      %1226 = vdwg.mxu0
      %v1227 = vadd.f32 %v1052, %v1209
      %v1228 = vadd.f32 %v1054, %v1211
      %v1229 = vadd.f32 %v1056, %v1213
      %v1230 = vadd.f32 %v1058, %v1215
      %v1231 = vadd.f32 %v1062, %v1219
      %v1232 = vadd.f32 %v1064, %v1221
      %v1233 = vadd.f32 %v1066, %v1223
      %v1234 = vadd.f32 %v1068, %v1225
      %v1235 = vld [vmem:[%s657] sm:$0xff]
      %v1236 = vld [vmem:[%s657 + $0x8] sm:$0xff]
      %v1237 = vld [vmem:[%s657 + $0x10] sm:$0xff]
      %v1238 = vld [vmem:[%s657 + $0x18] sm:$0xff]
      %v1239 = vld [vmem:[%s657 + $0x20] sm:$0xff]
      %v1240 = vld [vmem:[%s657 + $0x28] sm:$0xff]
      %v1241 = vld [vmem:[%s657 + $0x30] sm:$0xff]
      %v1242 = vld [vmem:[%s657 + $0x38] sm:$0xff]
      %v1243 = vld [vmem:[%s7] sm:$0xff]
      %v1244 = vld [vmem:[%s7 + $0x8] sm:$0xff]
      %v1245 = vld [vmem:[%s7 + $0x10] sm:$0xff]
      %v1246 = vld [vmem:[%s7 + $0x18] sm:$0xff]
      %1248 = vset.pattern.permute.xlu0 0
      %1249 = vperm.xlu0 %1248, %v1243
      %v1250 = vpop.permute.xlu0 %1249
      %1253 = vset.pattern.permute.xlu0 0
      %1254 = vperm.xlu0 %1253, %v1244
      %v1255 = vpop.permute.xlu0 %1254
      %1258 = vset.pattern.permute.xlu0 0
      %1259 = vperm.xlu0 %1258, %v1245
      %v1260 = vpop.permute.xlu0 %1259
      %1263 = vset.pattern.permute.xlu0 0
      %1264 = vperm.xlu0 %1263, %v1246
      %v1265 = vpop.permute.xlu0 %1264
      %v1267 = vmul.f32 %v1235, %v1250
      %v1268 = vmul.f32 %v1236, %v1250
      %v1269 = vmul.f32 %v1237, %v1255
      %v1270 = vmul.f32 %v1238, %v1255
      %v1271 = vmul.f32 %v1239, %v1260
      %v1272 = vmul.f32 %v1240, %v1260
      %v1273 = vmul.f32 %v1241, %v1265
      %v1274 = vmul.f32 %v1242, %v1265
      %v1275 = vld [vmem:[%s11] sm:$0xff]
      %v1276 = vld [vmem:[%s11 + $0x8] sm:$0xff]
      %v1277 = vld [vmem:[%s11 + $0x10] sm:$0xff]
      %v1278 = vld [vmem:[%s11 + $0x18] sm:$0xff]
      %1280 = vset.pattern.permute.xlu0 0
      %1281 = vperm.xlu0 %1280, %v1275
      %v1282 = vpop.permute.xlu0 %1281
      %1285 = vset.pattern.permute.xlu0 0
      %1286 = vperm.xlu0 %1285, %v1276
      %v1287 = vpop.permute.xlu0 %1286
      %1290 = vset.pattern.permute.xlu0 0
      %1291 = vperm.xlu0 %1290, %v1277
      %v1292 = vpop.permute.xlu0 %1291
      %1295 = vset.pattern.permute.xlu0 0
      %1296 = vperm.xlu0 %1295, %v1278
      %v1297 = vpop.permute.xlu0 %1296
      %v1299 = vadd.f32 %v1267, %v1282
      %v1300 = vadd.f32 %v1268, %v1282
      %v1301 = vadd.f32 %v1269, %v1287
      %v1302 = vadd.f32 %v1270, %v1287
      %v1303 = vadd.f32 %v1271, %v1292
      %v1304 = vadd.f32 %v1272, %v1292
      %v1305 = vadd.f32 %v1273, %v1297
      %v1306 = vadd.f32 %v1274, %v1297
      %v1307 = vmax.f32 %v1299, 0.0
      %v1308 = vmax.f32 %v1300, 0.0
      %v1309 = vmax.f32 %v1301, 0.0
      %v1310 = vmax.f32 %v1302, 0.0
      %v1311 = vmax.f32 %v1303, 0.0
      %v1312 = vmax.f32 %v1304, 0.0
      %v1313 = vmax.f32 %v1305, 0.0
      %v1314 = vmax.f32 %v1306, 0.0
      %v1315 = vld [vmem:[%s15] sm:$0xf]
      %v1316 = vld [vmem:[%s15 + $0x4] sm:$0xf]
      %v1317 = vld [vmem:[%s15 + $0x8] sm:$0xf]
      %v1318 = vld [vmem:[%s15 + $0xc] sm:$0xf]
      %v1319 = vpack.c.bf16 %v1309, %v1307
      %v1320 = vpack.c.bf16 %v1310, %v1308
      %v1321 = vpack.c.bf16 %v1313, %v1311
      %v1322 = vpack.c.bf16 %v1314, %v1312
      %v1327 = vunpack.c.l.b16 %v1315
      %v1328 = vunpack.c.l.b16 %v1316
      %v1329 = vunpack.c.l.b16 %v1317
      %v1330 = vunpack.c.l.b16 %v1318
      %v1331 = vpack.c.b16 %v1328, %v1327
      %v1332 = vpack.c.b16 %v1330, %v1329
      %v1334 = vsel %vm940, %v1331, 0
      %v1337 = vsel %vm940, %v1332, 0
      %1339 = vmatprep.subr.bf16.mxu0 %v1320
      %1340 = vmatpush1.bf16.msra.mxu0 %v1319
      %1341 = vmatprep.subr.bf16.mxu0 %v1322
      %1342 = vmatpush1.bf16.msra.mxu0 %v1321
      %1343 = vmatprep.subr.bf16.mxu0 0
      %1344 = vmatpush1.bf16.msra.mxu0 0
      %1345 = vmatprep.subr.bf16.mxu0 0
      %1346 = vmatpush1.bf16.msra.mxu0 0
      %1347 = vmatprep.subr.bf16.mxu0 0
      %1348 = vmatpush1.bf16.msra.mxu0 0
      %1349 = vmatprep.subr.bf16.mxu0 0
      %1350 = vmatpush1.bf16.msra.mxu0 0
      %1351 = vmatprep.subr.bf16.mxu0 0
      %1352 = vmatpush1.bf16.msra.mxu0 0
      %1353 = vmatprep.subr.bf16.mxu0 0
      %1354 = vmatpush1.bf16.msra.mxu0 0
      %1355 = vmatprep.subr.bf16.mxu0 0
      %1356 = vmatpush1.bf16.msra.mxu0 0
      %1357 = vmatprep.subr.bf16.mxu0 0
      %1358 = vmatpush1.bf16.msra.mxu0 0
      %1359 = vmatprep.subr.bf16.mxu0 0
      %1360 = vmatpush1.bf16.msra.mxu0 0
      %1361 = vmatprep.subr.bf16.mxu0 0
      %1362 = vmatpush1.bf16.msra.mxu0 0
      %1363 = vmatprep.subr.bf16.mxu0 0
      %1364 = vmatpush1.bf16.msra.mxu0 0
      %1365 = vmatprep.subr.bf16.mxu0 0
      %1366 = vmatpush1.bf16.msra.mxu0 0
      %1367 = vmatprep.subr.bf16.mxu0 0
      %1368 = vmatpush1.bf16.msra.mxu0 0
      %1369 = vmatprep.subr.bf16.mxu0 0
      %1370 = vmatpush1.bf16.msra.mxu0 0
      %1371 = vmatprep.mubr.bf16.mxu0 0
      %1372 = vmatmul.mubr.bf16.gmra.mrb[0].mxu0 %v1334
      %v1373 = vpop.f32.mrb[0].mxu0
      %v1374 = vadd.f32 0.0, %v1373
      %v1375 = vpop.f32.mrb[0].mxu0
      %v1376 = vadd.f32 0.0, %v1375
      %v1377 = vpop.f32.mrb[0].mxu0
      %v1378 = vadd.f32 0.0, %v1377
      %v1379 = vpop.f32.mrb[0].mxu0
      %v1380 = vadd.f32 0.0, %v1379
      %1381 = vmatprep.mubr.bf16.mxu0 0
      %1382 = vmatmul.mubr.bf16.gmra.mrb[0].mxu0 %v1337
      %v1383 = vpop.f32.mrb[0].mxu0
      %v1384 = vadd.f32 0.0, %v1383
      %v1385 = vpop.f32.mrb[0].mxu0
      %v1386 = vadd.f32 0.0, %v1385
      %v1387 = vpop.f32.mrb[0].mxu0
      %v1388 = vadd.f32 0.0, %v1387
      %v1389 = vpop.f32.mrb[0].mxu0
      %v1390 = vadd.f32 0.0, %v1389
      %1391 = vdwg.mxu0
      %v1392 = vadd.f32 %v1227, %v1374
      %v1393 = vadd.f32 %v1228, %v1376
      %v1394 = vadd.f32 %v1229, %v1378
      %v1395 = vadd.f32 %v1230, %v1380
      %v1396 = vadd.f32 %v1231, %v1384
      %v1397 = vadd.f32 %v1232, %v1386
      %v1398 = vadd.f32 %v1233, %v1388
      %v1399 = vadd.f32 %v1234, %v1390
      %1400 = vst [vmem:[%s667] sm:$0xff] %v1392
      %1401 = vst [vmem:[%s667 + $0x8] sm:$0xff] %v1393
      %1402 = vst [vmem:[%s667 + $0x10] sm:$0xff] %v1394
      %1403 = vst [vmem:[%s667 + $0x18] sm:$0xff] %v1395
      %1404 = vst [vmem:[%s667 + $0x20] sm:$0xff] %v1396
      %1405 = vst [vmem:[%s667 + $0x28] sm:$0xff] %v1397
      %1406 = vst [vmem:[%s667 + $0x30] sm:$0xff] %v1398
      %1407 = vst [vmem:[%s667 + $0x38] sm:$0xff] %v1399
      %s1408 = smul.u32 2, %s32
      %p1409 = scmp.lt.s32.totalorder %s31, 1
      %s1410 = scalar_select %p1409, %s31, 1
      %p1411 = scmp.lt.s32.totalorder %s1408, 1
      %s1412 = scalar_select %p1411, %s1408, 1
      %s1413 = smul.addr %s1410, 8
      %s1414 = sadd.s32 %s1412, %s1413
      %s1415 = smul.addr %s1414, 8
      %s1416 = scalar_lea.vmem %s16, %s1415
      // Predicated region
      $region85: #{spatial_pyramid_pooling.9} parent=83 // pred_check
        %p1417 = pneg %p423
      $region86: #{spatial_pyramid_pooling.9} parent=83 // pred_check_branch
        %1419 = sbr.rel (%p1417) target = $region88
      $region87: #{spatial_pyramid_pooling.9} parent=83 // pred_region
        %s1420 = smul.u32 2, %s32
      $region88: #{spatial_pyramid_pooling.9} parent=83 // pred_fallthru
        _
    $region84: #{spatial_pyramid_pooling.9} parent=5 // pred_fallthru
      _
    %p1421 = scmp.le.s32.totalorder 2, %s22
    // Predicated region
    $region89: #{spatial_pyramid_pooling.9} parent=5 // pred_check
      %p1422 = pneg %p1421
    $region90: #{spatial_pyramid_pooling.9} parent=5 // pred_check_branch
      %1424 = sbr.rel (%p1422) target = $region92
    $region91: #{spatial_pyramid_pooling.9} parent=5 // pred_region
      %s1425 = ssub.s32 %s22, 2
      // Predicated region
      $region93: #{spatial_pyramid_pooling.9} parent=91 // pred_check
        %p1426 = pneg %p429
      $region94: #{spatial_pyramid_pooling.9} parent=91 // pred_check_branch
        %1428 = sbr.rel (%p1426) target = $region96
      $region95: #{spatial_pyramid_pooling.9} parent=91 // pred_region
        %s1429 = smul.u32 2, %s34
        %p1430 = scmp.lt.s32.totalorder %s33, 1
        %s1431 = scalar_select %p1430, %s33, 1
        %p1432 = scmp.lt.s32.totalorder %s1429, 1
        %s1433 = scalar_select %p1432, %s1429, 1
        %s1434 = smul.addr %s1431, 8
        %s1435 = sadd.s32 %s1433, %s1434
        %s1436 = smul.addr %s1435, 8
        %s1437 = scalar_lea.vmem %s16, %s1436
      $region96: #{spatial_pyramid_pooling.9} parent=91 // pred_fallthru
        _
    $region92: #{spatial_pyramid_pooling.9} parent=5 // pred_fallthru
      _
  $region6: #{spatial_pyramid_pooling.9} parent=0 // loop_footer
    %s26 = sadd.s32 1, %s22
  $region7: #{spatial_pyramid_pooling.9} parent=0 // loop_footer_branch
    %21 = sbr.rel target = $region3
  $region8: #{spatial_pyramid_pooling.9} parent=0 // loop_exit
    _

</llo_original>
